<compile_context>
chip_gen: v5e
topology: v5e:2x2
jax: 0.10.0
libtpu: 0.0.40
codegen_flags: <defaults>
</compile_context>

<pallas_src>
import functools

import jax
import jax.numpy as jnp
from jax import lax
from jax.experimental import pallas as pl
from jax.experimental.pallas import tpu as pltpu

LN_EPS = 1e-5


def _round_up(n, m):
    return ((n + m - 1) // m) * m


def _sigmoid_eup(h):
    # logistic(h) = 0.5 * (tanh(h/2) + 1): one EUP op, no VPU divide / exp.
    return 0.5 * (jnp.tanh(0.5 * h) + 1.0)


def _silu(h):
    return h * _sigmoid_eup(h)


def _layernorm(h, gamma, beta, inv_n):
    # Single-pass LN: two independent cross-lane reductions (XLU) that overlap.
    # Variance clamped at 0 against f32 cancellation when |mean| >> std.
    s1 = jnp.sum(h, axis=-1, keepdims=True)
    s2 = jnp.sum(h * h, axis=-1, keepdims=True)
    mu = s1 * inv_n
    var = jnp.maximum(s2 * inv_n - mu * mu, 0.0)
    return (h - mu) * lax.rsqrt(var + LN_EPS) * gamma + beta


# ----------------------------------------------------------------------------
# Kernel
# ----------------------------------------------------------------------------
def dmn_kernel(x_ref,
               w1_ref, tt_w2_ref, em_w1b_ref,
               w2_sr_ref, w2_em_ref, w2_sc_ref,
               vec_ref,
               o_ref,
               *, hidden_dim):
    H = hidden_dim
    inv_h = 1.0 / H
    inv_2h = 0.5 / H

    # Lane-slice the packed (1, 17H) vector bundle:
    # [b1_cat(5H) | sr_g | sr_bt | tt_g(2H) | tt_bt(2H) | em_g | em_bt |
    #  sc_g | sc_bt | tt_b2 | b2_cat]
    def vec(a, b):
        return vec_ref[:, a:b]

    x32 = x_ref[...].astype(jnp.float32)
    x16 = x32.astype(jnp.bfloat16)

    # Fused first layer: x @ [sr_w1 | tt_w1 | sc_w1 | em_w1a] + b1_cat -> (tb, 5H)
    fused = jnp.dot(x16, w1_ref[...], preferred_element_type=jnp.float32)
    fused = fused + vec(0, 5 * H)

    sr_h = fused[:, 0:H]
    tt_h = fused[:, H:3 * H]
    sc_h = fused[:, 3 * H:4 * H]
    em_h = fused[:, 4 * H:5 * H]

    # mental_time_travel branch (also the temp_context feeding episodic_memory,
    # exactly as in the PyTorch forward with context=None).
    tt_a = _silu(_layernorm(tt_h, vec(7 * H, 9 * H), vec(9 * H, 11 * H), inv_2h))
    time_travel = jnp.dot(tt_a.astype(jnp.bfloat16), tt_w2_ref[...],
                          preferred_element_type=jnp.float32) + vec(15 * H, 16 * H)

    # episodic_memory first layer: cat([x, tt]) @ em_w1 == x@em_w1a + tt@em_w1b
    # (x @ em_w1a + em_b1 already lives inside `fused`), avoiding a lane concat.
    em_pre = em_h + jnp.dot(time_travel.astype(jnp.bfloat16), em_w1b_ref[...],
                            preferred_element_type=jnp.float32)

    sr_a = _silu(_layernorm(sr_h, vec(5 * H, 6 * H), vec(6 * H, 7 * H), inv_h))
    em_a = _silu(_layernorm(em_pre, vec(11 * H, 12 * H), vec(12 * H, 13 * H), inv_h))
    sc_a = _silu(_layernorm(sc_h, vec(13 * H, 14 * H), vec(14 * H, 15 * H), inv_h))

    # Second layer with residual scales folded into the weights; three
    # accumulating (H,H) dots (same total MXU work as one (3H,H) matmul but no
    # (tb,3H) bf16 concat buffer / extra store traffic).
    combo = jnp.dot(sr_a.astype(jnp.bfloat16), w2_sr_ref[...],
                    preferred_element_type=jnp.float32)
    combo = combo + jnp.dot(em_a.astype(jnp.bfloat16), w2_em_ref[...],
                            preferred_element_type=jnp.float32)
    combo = combo + jnp.dot(sc_a.astype(jnp.bfloat16), w2_sc_ref[...],
                            preferred_element_type=jnp.float32)
    combo = combo + vec(16 * H, 17 * H)

    o_ref[...] = (x32 + combo + 0.1 * time_travel).astype(o_ref.dtype)


# ----------------------------------------------------------------------------
# VMEM / tiling policy
# ----------------------------------------------------------------------------
def _vmem_capacity():
    """Physical VMEM per TensorCore; conservative 64 MiB (v7x) if unknown."""
    try:
        info = pltpu.get_tpu_info()
        for attr in ("vmem_capacity_bytes", "vmem_size_bytes", "vmem_bytes"):
            cap = getattr(info, attr, None)
            if cap:
                return int(cap)
    except Exception:
        pass
    return 64 * 2 ** 20


def _pick_tile(B, H, vmem_cap, weight_bytes, tile_b):
    # Larger default tile on the 128 MiB chips (v5e/v6e: HBM-streaming bound,
    # bigger tiles amortize the ~0.35us per-step overhead); moderate on v7x.
    if tile_b is None:
        tile_b = 512 if vmem_cap >= 96 * 2 ** 20 else 256
    budget = max(int(vmem_cap) - 12 * 2 ** 20, 8 * 2 ** 20)    # compiler headroom
    # Per-row VMEM: double-buffered x + out (f32) plus ~16 f32 temporaries.
    per_row = (2 * 2 * H * 4) + (16 * H * 4)
    avail = budget - 2 * weight_bytes          # worst case: params double-buffered
    max_rows = max(8, int(avail) // per_row) if avail > 0 else 8
    tb = min(int(tile_b), max_rows)
    tb = _round_up(min(tb, _round_up(B, 8)), 8)
    # Keep >= 2 grid steps for medium batches so both v7x TCs get balanced work.
    if B >= 16 and pl.cdiv(B, tb) < 2:
        tb = _round_up(pl.cdiv(B, 2), 8)
    return int(tb)


def _pick_vmem_limit(tb, H, weight_bytes, vec_lanes, vmem_cap):
    need = (2 * weight_bytes                    # params (covers double-buffer fallback)
            + 2 * 8 * vec_lanes * 4             # padded (8, 17H) vector bundle
            + 2 * 2 * tb * H * 4                # double-buffered x / out, f32
            + 16 * tb * H * 4                   # f32 temporaries margin
            + 4 * 2 ** 20)                      # internal scratch headroom
    return int(min(max(need, 16 * 2 ** 20), int(vmem_cap)))


# ----------------------------------------------------------------------------
# Forward
# ----------------------------------------------------------------------------
@functools.partial(jax.jit,
                   static_argnames=("tb", "vmem_limit", "single_buffer_params"))
def _dmn_forward_impl(x, packed, *, tb, vmem_limit, single_buffer_params):
    B, H = x.shape
    b_pad = _round_up(B, tb)
    if b_pad != B:
        x = jnp.pad(x, ((0, b_pad - B), (0, 0)))
    grid = (b_pad // tb,)

    x_spec = pl.BlockSpec((tb, H), lambda i: (i, 0))
    out_spec = pl.BlockSpec((tb, H), lambda i: (i, 0))

    def param_spec(p):
        # Default-arg binding of ndim avoids the late-binding lambda bug.
        idx = lambda i, nd=p.ndim: (0,) * nd
        if single_buffer_params:
            # Grid-invariant index_map -> a second buffer is never used; single
            # buffer halves the weight VMEM footprint.
            return pl.BlockSpec(p.shape, idx, pipeline_mode=pl.Buffered(1))
        return pl.BlockSpec(p.shape, idx)

    param_specs = [param_spec(p) for p in packed]

    param_bytes = sum(int(p.size) * p.dtype.itemsize for p in packed)
    cost = pl.CostEstimate(
        flops=2 * b_pad * H * (11 * H),          # 5H + 2H + H + 3H output columns
        transcendentals=5 * b_pad * H,           # one tanh per SiLU element
        bytes_accessed=int(param_bytes + 2 * b_pad * H * x.dtype.itemsize),
    )

    out = pl.pallas_call(
        functools.partial(dmn_kernel, hidden_dim=H),
        out_shape=jax.ShapeDtypeStruct((b_pad, H), x.dtype),
        grid_spec=pltpu.PrefetchScalarGridSpec(
            num_scalar_prefetch=0,
            grid=grid,
            in_specs=[x_spec] + param_specs,
            out_specs=out_spec,
        ),
        compiler_params=pltpu.CompilerParams(
            dimension_semantics=("parallel",),
            vmem_limit_bytes=vmem_limit,
        ),
        cost_estimate=cost,
    )(x, *packed)
    return out[:B]


def dmn_forward(x, packed, *, tile_b=None):
    B, H = x.shape
    # Lane slicing of the fused activations / vector bundle assumes H % 128 == 0.
    assert H % 128 == 0, f"hidden_dim must be a multiple of 128, got {H}"

    vmem_cap = _vmem_capacity()
    weight_bytes = sum(int(p.size) * p.dtype.itemsize for p in packed[:-1])
    vec_lanes = int(packed[-1].shape[-1])
    tb = _pick_tile(B, H, vmem_cap, weight_bytes, tile_b)
    vmem_limit = _pick_vmem_limit(tb, H, weight_bytes, vec_lanes, vmem_cap)

    # Prefer single-buffered (pl.Buffered(1)) grid-invariant weights; fall back
    # to default double-buffering if this jax version rejects pipeline_mode.
    try:
        return _dmn_forward_impl(x, packed, tb=tb, vmem_limit=vmem_limit,
                                 single_buffer_params=True)
    except Exception:
        return _dmn_forward_impl(x, packed, tb=tb, vmem_limit=vmem_limit,
                                 single_buffer_params=False)


# ----------------------------------------------------------------------------
# Parameter construction / packing
# ----------------------------------------------------------------------------
def init_params(key, hidden_dim):
    """PyTorch-style uniform(+-1/sqrt(fan_in)) params, f32, stored [in, out]."""
    H = hidden_dim

    def linear(k, din, dout):
        kw, kb = jax.random.split(k)
        bound = 1.0 / (din ** 0.5)
        w = jax.random.uniform(kw, (din, dout), jnp.float32, -bound, bound)
        b = jax.random.uniform(kb, (1, dout), jnp.float32, -bound, bound)
        return w, b

    keys = jax.random.split(key, 8)
    p = {}
    p["sr_w1"], p["sr_b1"] = linear(keys[0], H, H)
    p["sr_w2"], p["sr_b2"] = linear(keys[1], H, H)
    p["sr_g"], p["sr_bt"] = jnp.ones((1, H), jnp.float32), jnp.zeros((1, H), jnp.float32)

    p["tt_w1"], p["tt_b1"] = linear(keys[2], H, 2 * H)
    p["tt_w2"], p["tt_b2"] = linear(keys[3], 2 * H, H)
    p["tt_g"], p["tt_bt"] = jnp.ones((1, 2 * H), jnp.float32), jnp.zeros((1, 2 * H), jnp.float32)

    p["em_w1"], p["em_b1"] = linear(keys[4], 2 * H, H)
    p["em_w2"], p["em_b2"] = linear(keys[5], H, H)
    p["em_g"], p["em_bt"] = jnp.ones((1, H), jnp.float32), jnp.zeros((1, H), jnp.float32)

    p["sc_w1"], p["sc_b1"] = linear(keys[6], H, H)
    p["sc_w2"], p["sc_b2"] = linear(keys[7], H, H)
    p["sc_g"], p["sc_bt"] = jnp.ones((1, H), jnp.float32), jnp.zeros((1, H), jnp.float32)
    return p


def pack_params(p, hidden_dim):
    """Fuse + cast parameters into the layout the kernel consumes (host-side)."""
    H = hidden_dim
    # First-layer fusion: [sr_w1 | tt_w1 | sc_w1 | em_w1a] -> (H, 5H) bf16.
    w1_cat = jnp.concatenate(
        [p["sr_w1"], p["tt_w1"], p["sc_w1"], p["em_w1"][:H]], axis=1
    ).astype(jnp.bfloat16)
    em_w1b = p["em_w1"][H:].astype(jnp.bfloat16)                           # (H, H)
    tt_w2 = p["tt_w2"].astype(jnp.bfloat16)                                # (2H, H)
    # Second-layer weights with residual scales folded in (separate (H,H) mats).
    w2_sr = (0.2 * p["sr_w2"]).astype(jnp.bfloat16)
    w2_em = (0.2 * p["em_w2"]).astype(jnp.bfloat16)
    w2_sc = (0.1 * p["sc_w2"]).astype(jnp.bfloat16)
    # All tiny (1,*) vectors packed into a single (1, 17H) f32 bundle:
    # [b1_cat(5H) | sr_g | sr_bt | tt_g(2H) | tt_bt(2H) | em_g | em_bt |
    #  sc_g | sc_bt | tt_b2 | b2_cat]
    b1_cat = jnp.concatenate(
        [p["sr_b1"], p["tt_b1"], p["sc_b1"], p["em_b1"]], axis=1)          # (1, 5H)
    b2_cat = 0.2 * p["sr_b2"] + 0.2 * p["em_b2"] + 0.1 * p["sc_b2"]        # (1, H)
    vecs = jnp.concatenate(
        [b1_cat, p["sr_g"], p["sr_bt"], p["tt_g"], p["tt_bt"],
         p["em_g"], p["em_bt"], p["sc_g"], p["sc_bt"], p["tt_b2"], b2_cat],
        axis=1).astype(jnp.float32)                                        # (1, 17H)
    return (w1_cat, tt_w2, em_w1b, w2_sr, w2_em, w2_sc, vecs)


# ----------------------------------------------------------------------------
# References
# ----------------------------------------------------------------------------
def _ln_ref(h, g, b):
    mu = jnp.mean(h, -1, keepdims=True)
    var = jnp.mean((h - mu) ** 2, -1, keepdims=True)
    return (h - mu) / jnp.sqrt(var + LN_EPS) * g + b


def _silu_ref(h):
    return h * jax.nn.sigmoid(h)


def dmn_reference_packed(x, packed, hidden_dim):
    """Plain-JAX model of the kernel's exact math / precision policy."""
    (w1_cat, tt_w2, em_w1b, w2_sr, w2_em, w2_sc, vecs) = packed
    H = hidden_dim

    def v(a, b):
        return vecs[:, a:b]

    def bdot(a, w):
        return jnp.dot(a.astype(jnp.bfloat16), w,
                       preferred_element_type=jnp.float32)

    x32 = x.astype(jnp.float32)
    fused = bdot(x32, w1_cat) + v(0, 5 * H)
    sr_h, tt_h = fused[:, :H], fused[:, H:3 * H]
    sc_h, em_h = fused[:, 3 * H:4 * H], fused[:, 4 * H:]

    tt_a = _silu_ref(_ln_ref(tt_h, v(7 * H, 9 * H), v(9 * H, 11 * H)))
    time_travel = bdot(tt_a, tt_w2) + v(15 * H, 16 * H)
    em_pre = em_h + bdot(time_travel, em_w1b)
    sr_a = _silu_ref(_ln_ref(sr_h, v(5 * H, 6 * H), v(6 * H, 7 * H)))
    em_a = _silu_ref(_ln_ref(em_pre, v(11 * H, 12 * H), v(12 * H, 13 * H)))
    sc_a = _silu_ref(_ln_ref(sc_h, v(13 * H, 14 * H), v(14 * H, 15 * H)))
    combo = (bdot(sr_a, w2_sr) + bdot(em_a, w2_em) + bdot(sc_a, w2_sc)
             + v(16 * H, 17 * H))
    return x32 + combo + 0.1 * time_travel


def dmn_reference_f32(x, p):
    """Pure f32 plain-JAX equivalent of the PyTorch module (context=None)."""
    def mlp(h, w1, b1, g, bt, w2, b2):
        return _silu_ref(_ln_ref(h @ w1 + b1, g, bt)) @ w2 + b2

    self_ref = mlp(x, p["sr_w1"], p["sr_b1"], p["sr_g"], p["sr_bt"],
                   p["sr_w2"], p["sr_b2"])
    temp_ctx = mlp(x, p["tt_w1"], p["tt_b1"], p["tt_g"], p["tt_bt"],
                   p["tt_w2"], p["tt_b2"])
    episodic = mlp(jnp.concatenate([x, temp_ctx], axis=1),
                   p["em_w1"], p["em_b1"], p["em_g"], p["em_bt"],
                   p["em_w2"], p["em_b2"])
    time_travel = temp_ctx
    social = mlp(x, p["sc_w1"], p["sc_b1"], p["sc_g"], p["sc_bt"],
                 p["sc_w2"], p["sc_b2"])
    return x + 0.2 * self_ref + 0.2 * episodic + 0.1 * time_travel + 0.1 * social


if __name__ == "__main__":
    batch, hidden = 12, 128   # ragged batch exercises the pad / slice-back path
    key = jax.random.PRNGKey(0)
    kx, kp = jax.random.split(key)

    x = jax.random.normal(kx, (batch, hidden), jnp.float32)
    params = init_params(kp, hidden)
    packed = pack_params(params, hidden)

    out = dmn_forward(x, packed)
    out = jax.block_until_ready(out)
    assert out.shape == (batch, hidden)

    # Tight check: plain-JAX model of the kernel's bf16/f32 precision policy.
    ref_q = dmn_reference_packed(x, packed, hidden)
    err_q = float(jnp.max(jnp.abs(out - ref_q)))
    assert err_q < 5e-3, f"packed-reference mismatch: max abs err {err_q}"

    # Loose check: full-f32 PyTorch-equivalent reference (bf16 weight quant).
    ref_f = dmn_reference_f32(x, params)
    err_f = float(jnp.max(jnp.abs(out - ref_f)))
    assert err_f < 3e-2, f"f32-reference mismatch: max abs err {err_f}"

    print("KERNEL_OK")
</pallas_src>

<mosaic_0001>
module attributes {stable_mosaic.version = 11 : i64} {
  func.func @dmn_kernel(%arg0: i32, %arg1: memref<16x128xf32, #tpu.memory_space<vmem>>, %arg2: memref<128x640xbf16, #tpu.memory_space<vmem>>, %arg3: memref<256x128xbf16, #tpu.memory_space<vmem>>, %arg4: memref<128x128xbf16, #tpu.memory_space<vmem>>, %arg5: memref<128x128xbf16, #tpu.memory_space<vmem>>, %arg6: memref<128x128xbf16, #tpu.memory_space<vmem>>, %arg7: memref<128x128xbf16, #tpu.memory_space<vmem>>, %arg8: memref<1x2176xf32, #tpu.memory_space<vmem>>, %arg9: memref<16x128xf32, #tpu.memory_space<vmem>>) attributes {dimension_semantics = [#tpu.dimension_semantics<parallel>], iteration_bounds = array<i64: 1>, scalar_prefetch = 0 : i64, scratch_operands = 0 : i64, tpu.core_type = #tpu.core_type<tc>, window_params = [{transform_indices = @transform_0, window_bounds = array<i64: 16, 128>}, {pipeline_mode = #tpu.pipeline_mode<synchronous>, transform_indices = @transform_1, window_bounds = array<i64: 128, 640>}, {pipeline_mode = #tpu.pipeline_mode<synchronous>, transform_indices = @transform_2, window_bounds = array<i64: 256, 128>}, {pipeline_mode = #tpu.pipeline_mode<synchronous>, transform_indices = @transform_3, window_bounds = array<i64: 128, 128>}, {pipeline_mode = #tpu.pipeline_mode<synchronous>, transform_indices = @transform_4, window_bounds = array<i64: 128, 128>}, {pipeline_mode = #tpu.pipeline_mode<synchronous>, transform_indices = @transform_5, window_bounds = array<i64: 128, 128>}, {pipeline_mode = #tpu.pipeline_mode<synchronous>, transform_indices = @transform_6, window_bounds = array<i64: 128, 128>}, {pipeline_mode = #tpu.pipeline_mode<synchronous>, transform_indices = @transform_7, window_bounds = array<i64: 1, 2176>}, {transform_indices = @transform_8, window_bounds = array<i64: 16, 128>}]} {
    %c0 = arith.constant 0 : index
    %c0_0 = arith.constant 0 : index
    %0 = vector.load %arg1[%c0, %c0_0] : memref<16x128xf32, #tpu.memory_space<vmem>>, vector<16x128xf32>
    %1 = arith.truncf %0 : vector<16x128xf32> to vector<16x128xbf16>
    %c0_1 = arith.constant 0 : index
    %c0_2 = arith.constant 0 : index
    %2 = vector.load %arg2[%c0_1, %c0_2] : memref<128x640xbf16, #tpu.memory_space<vmem>>, vector<128x640xbf16>
    %cst = arith.constant dense<0.000000e+00> : vector<16x640xf32>
    %3 = tpu.matmul %1, %2, %cst {dimension_numbers = #tpu.dot_dimension_numbers<[1], [0], [0], [1], [0, 0, 1, 1], [], []>} : vector<16x128xbf16>, vector<128x640xbf16>, vector<16x640xf32> -> vector<16x640xf32>
    %c0_3 = arith.constant 0 : index
    %c0_4 = arith.constant 0 : index
    %4 = vector.load %arg8[%c0_3, %c0_4] : memref<1x2176xf32, #tpu.memory_space<vmem>>, vector<1x640xf32>
    %5 = vector.broadcast %4 : vector<1x640xf32> to vector<16x640xf32>
    %6 = arith.addf %3, %5 : vector<16x640xf32>
    %7 = vector.extract_strided_slice %6 {offsets = [0, 0], sizes = [16, 128], strides = [1, 1]} : vector<16x640xf32> to vector<16x128xf32>
    %8 = vector.extract_strided_slice %6 {offsets = [0, 128], sizes = [16, 256], strides = [1, 1]} : vector<16x640xf32> to vector<16x256xf32>
    %9 = vector.extract_strided_slice %6 {offsets = [0, 384], sizes = [16, 128], strides = [1, 1]} : vector<16x640xf32> to vector<16x128xf32>
    %10 = vector.extract_strided_slice %6 {offsets = [0, 512], sizes = [16, 128], strides = [1, 1]} : vector<16x640xf32> to vector<16x128xf32>
    %c0_5 = arith.constant 0 : index
    %c896 = arith.constant 896 : index
    %11 = vector.load %arg8[%c0_5, %c896] : memref<1x2176xf32, #tpu.memory_space<vmem>>, vector<1x256xf32>
    %c0_6 = arith.constant 0 : index
    %c1152 = arith.constant 1152 : index
    %12 = vector.load %arg8[%c0_6, %c1152] : memref<1x2176xf32, #tpu.memory_space<vmem>>, vector<1x256xf32>
    %cst_7 = arith.constant dense<0.000000e+00> : vector<16xf32>
    %13 = vector.multi_reduction <add>, %8, %cst_7 [1] : vector<16x256xf32> to vector<16xf32>
    %14 = vector.shape_cast %13 : vector<16xf32> to vector<16x1xf32>
    %15 = arith.mulf %8, %8 : vector<16x256xf32>
    %cst_8 = arith.constant dense<0.000000e+00> : vector<16xf32>
    %16 = vector.multi_reduction <add>, %15, %cst_8 [1] : vector<16x256xf32> to vector<16xf32>
    %17 = vector.shape_cast %16 : vector<16xf32> to vector<16x1xf32>
    %cst_9 = arith.constant 3.906250e-03 : f32
    %18 = vector.broadcast %cst_9 : f32 to vector<16x1xf32>
    %19 = arith.mulf %14, %18 : vector<16x1xf32>
    %cst_10 = arith.constant 3.906250e-03 : f32
    %20 = vector.broadcast %cst_10 : f32 to vector<16x1xf32>
    %21 = arith.mulf %17, %20 : vector<16x1xf32>
    %22 = arith.mulf %19, %19 : vector<16x1xf32>
    %23 = arith.subf %21, %22 : vector<16x1xf32>
    %cst_11 = arith.constant 0.000000e+00 : f32
    %24 = vector.broadcast %cst_11 : f32 to vector<16x1xf32>
    %25 = arith.maximumf %23, %24 : vector<16x1xf32>
    %26 = vector.broadcast %19 : vector<16x1xf32> to vector<16x256xf32>
    %27 = arith.subf %8, %26 : vector<16x256xf32>
    %cst_12 = arith.constant 9.99999974E-6 : f32
    %28 = vector.broadcast %cst_12 : f32 to vector<16x1xf32>
    %29 = arith.addf %25, %28 : vector<16x1xf32>
    %30 = math.rsqrt %29 : vector<16x1xf32>
    %31 = vector.broadcast %30 : vector<16x1xf32> to vector<16x256xf32>
    %32 = arith.mulf %27, %31 : vector<16x256xf32>
    %33 = vector.broadcast %11 : vector<1x256xf32> to vector<16x256xf32>
    %34 = arith.mulf %32, %33 : vector<16x256xf32>
    %35 = vector.broadcast %12 : vector<1x256xf32> to vector<16x256xf32>
    %36 = arith.addf %34, %35 : vector<16x256xf32>
    %cst_13 = arith.constant 5.000000e-01 : f32
    %37 = vector.broadcast %cst_13 : f32 to vector<16x256xf32>
    %38 = arith.mulf %37, %36 : vector<16x256xf32>
    %39 = math.tanh %38 : vector<16x256xf32>
    %cst_14 = arith.constant 1.000000e+00 : f32
    %40 = vector.broadcast %cst_14 : f32 to vector<16x256xf32>
    %41 = arith.addf %39, %40 : vector<16x256xf32>
    %cst_15 = arith.constant 5.000000e-01 : f32
    %42 = vector.broadcast %cst_15 : f32 to vector<16x256xf32>
    %43 = arith.mulf %42, %41 : vector<16x256xf32>
    %44 = arith.mulf %36, %43 : vector<16x256xf32>
    %45 = arith.truncf %44 : vector<16x256xf32> to vector<16x256xbf16>
    %c0_16 = arith.constant 0 : index
    %c0_17 = arith.constant 0 : index
    %46 = vector.load %arg3[%c0_16, %c0_17] : memref<256x128xbf16, #tpu.memory_space<vmem>>, vector<256x128xbf16>
    %cst_18 = arith.constant dense<0.000000e+00> : vector<16x128xf32>
    %47 = tpu.matmul %45, %46, %cst_18 {dimension_numbers = #tpu.dot_dimension_numbers<[1], [0], [0], [1], [0, 0, 1, 1], [], []>} : vector<16x256xbf16>, vector<256x128xbf16>, vector<16x128xf32> -> vector<16x128xf32>
    %c0_19 = arith.constant 0 : index
    %c1920 = arith.constant 1920 : index
    %48 = vector.load %arg8[%c0_19, %c1920] : memref<1x2176xf32, #tpu.memory_space<vmem>>, vector<1x128xf32>
    %49 = vector.broadcast %48 : vector<1x128xf32> to vector<16x128xf32>
    %50 = arith.addf %47, %49 : vector<16x128xf32>
    %51 = arith.truncf %50 : vector<16x128xf32> to vector<16x128xbf16>
    %c0_20 = arith.constant 0 : index
    %c0_21 = arith.constant 0 : index
    %52 = vector.load %arg4[%c0_20, %c0_21] : memref<128x128xbf16, #tpu.memory_space<vmem>>, vector<128x128xbf16>
    %cst_22 = arith.constant dense<0.000000e+00> : vector<16x128xf32>
    %53 = tpu.matmul %51, %52, %cst_22 {dimension_numbers = #tpu.dot_dimension_numbers<[1], [0], [0], [1], [0, 0, 1, 1], [], []>} : vector<16x128xbf16>, vector<128x128xbf16>, vector<16x128xf32> -> vector<16x128xf32>
    %54 = arith.addf %10, %53 : vector<16x128xf32>
    %c0_23 = arith.constant 0 : index
    %c640 = arith.constant 640 : index
    %55 = vector.load %arg8[%c0_23, %c640] : memref<1x2176xf32, #tpu.memory_space<vmem>>, vector<1x128xf32>
    %c0_24 = arith.constant 0 : index
    %c768 = arith.constant 768 : index
    %56 = vector.load %arg8[%c0_24, %c768] : memref<1x2176xf32, #tpu.memory_space<vmem>>, vector<1x128xf32>
    %cst_25 = arith.constant dense<0.000000e+00> : vector<16xf32>
    %57 = vector.multi_reduction <add>, %7, %cst_25 [1] : vector<16x128xf32> to vector<16xf32>
    %58 = vector.shape_cast %57 : vector<16xf32> to vector<16x1xf32>
    %59 = arith.mulf %7, %7 : vector<16x128xf32>
    %cst_26 = arith.constant dense<0.000000e+00> : vector<16xf32>
    %60 = vector.multi_reduction <add>, %59, %cst_26 [1] : vector<16x128xf32> to vector<16xf32>
    %61 = vector.shape_cast %60 : vector<16xf32> to vector<16x1xf32>
    %cst_27 = arith.constant 7.812500e-03 : f32
    %62 = vector.broadcast %cst_27 : f32 to vector<16x1xf32>
    %63 = arith.mulf %58, %62 : vector<16x1xf32>
    %cst_28 = arith.constant 7.812500e-03 : f32
    %64 = vector.broadcast %cst_28 : f32 to vector<16x1xf32>
    %65 = arith.mulf %61, %64 : vector<16x1xf32>
    %66 = arith.mulf %63, %63 : vector<16x1xf32>
    %67 = arith.subf %65, %66 : vector<16x1xf32>
    %cst_29 = arith.constant 0.000000e+00 : f32
    %68 = vector.broadcast %cst_29 : f32 to vector<16x1xf32>
    %69 = arith.maximumf %67, %68 : vector<16x1xf32>
    %70 = vector.broadcast %63 : vector<16x1xf32> to vector<16x128xf32>
    %71 = arith.subf %7, %70 : vector<16x128xf32>
    %cst_30 = arith.constant 9.99999974E-6 : f32
    %72 = vector.broadcast %cst_30 : f32 to vector<16x1xf32>
    %73 = arith.addf %69, %72 : vector<16x1xf32>
    %74 = math.rsqrt %73 : vector<16x1xf32>
    %75 = vector.broadcast %74 : vector<16x1xf32> to vector<16x128xf32>
    %76 = arith.mulf %71, %75 : vector<16x128xf32>
    %77 = vector.broadcast %55 : vector<1x128xf32> to vector<16x128xf32>
    %78 = arith.mulf %76, %77 : vector<16x128xf32>
    %79 = vector.broadcast %56 : vector<1x128xf32> to vector<16x128xf32>
    %80 = arith.addf %78, %79 : vector<16x128xf32>
    %cst_31 = arith.constant 5.000000e-01 : f32
    %81 = vector.broadcast %cst_31 : f32 to vector<16x128xf32>
    %82 = arith.mulf %81, %80 : vector<16x128xf32>
    %83 = math.tanh %82 : vector<16x128xf32>
    %cst_32 = arith.constant 1.000000e+00 : f32
    %84 = vector.broadcast %cst_32 : f32 to vector<16x128xf32>
    %85 = arith.addf %83, %84 : vector<16x128xf32>
    %cst_33 = arith.constant 5.000000e-01 : f32
    %86 = vector.broadcast %cst_33 : f32 to vector<16x128xf32>
    %87 = arith.mulf %86, %85 : vector<16x128xf32>
    %88 = arith.mulf %80, %87 : vector<16x128xf32>
    %c0_34 = arith.constant 0 : index
    %c1408 = arith.constant 1408 : index
    %89 = vector.load %arg8[%c0_34, %c1408] : memref<1x2176xf32, #tpu.memory_space<vmem>>, vector<1x128xf32>
    %c0_35 = arith.constant 0 : index
    %c1536 = arith.constant 1536 : index
    %90 = vector.load %arg8[%c0_35, %c1536] : memref<1x2176xf32, #tpu.memory_space<vmem>>, vector<1x128xf32>
    %cst_36 = arith.constant dense<0.000000e+00> : vector<16xf32>
    %91 = vector.multi_reduction <add>, %54, %cst_36 [1] : vector<16x128xf32> to vector<16xf32>
    %92 = vector.shape_cast %91 : vector<16xf32> to vector<16x1xf32>
    %93 = arith.mulf %54, %54 : vector<16x128xf32>
    %cst_37 = arith.constant dense<0.000000e+00> : vector<16xf32>
    %94 = vector.multi_reduction <add>, %93, %cst_37 [1] : vector<16x128xf32> to vector<16xf32>
    %95 = vector.shape_cast %94 : vector<16xf32> to vector<16x1xf32>
    %cst_38 = arith.constant 7.812500e-03 : f32
    %96 = vector.broadcast %cst_38 : f32 to vector<16x1xf32>
    %97 = arith.mulf %92, %96 : vector<16x1xf32>
    %cst_39 = arith.constant 7.812500e-03 : f32
    %98 = vector.broadcast %cst_39 : f32 to vector<16x1xf32>
    %99 = arith.mulf %95, %98 : vector<16x1xf32>
    %100 = arith.mulf %97, %97 : vector<16x1xf32>
    %101 = arith.subf %99, %100 : vector<16x1xf32>
    %cst_40 = arith.constant 0.000000e+00 : f32
    %102 = vector.broadcast %cst_40 : f32 to vector<16x1xf32>
    %103 = arith.maximumf %101, %102 : vector<16x1xf32>
    %104 = vector.broadcast %97 : vector<16x1xf32> to vector<16x128xf32>
    %105 = arith.subf %54, %104 : vector<16x128xf32>
    %cst_41 = arith.constant 9.99999974E-6 : f32
    %106 = vector.broadcast %cst_41 : f32 to vector<16x1xf32>
    %107 = arith.addf %103, %106 : vector<16x1xf32>
    %108 = math.rsqrt %107 : vector<16x1xf32>
    %109 = vector.broadcast %108 : vector<16x1xf32> to vector<16x128xf32>
    %110 = arith.mulf %105, %109 : vector<16x128xf32>
    %111 = vector.broadcast %89 : vector<1x128xf32> to vector<16x128xf32>
    %112 = arith.mulf %110, %111 : vector<16x128xf32>
    %113 = vector.broadcast %90 : vector<1x128xf32> to vector<16x128xf32>
    %114 = arith.addf %112, %113 : vector<16x128xf32>
    %cst_42 = arith.constant 5.000000e-01 : f32
    %115 = vector.broadcast %cst_42 : f32 to vector<16x128xf32>
    %116 = arith.mulf %115, %114 : vector<16x128xf32>
    %117 = math.tanh %116 : vector<16x128xf32>
    %cst_43 = arith.constant 1.000000e+00 : f32
    %118 = vector.broadcast %cst_43 : f32 to vector<16x128xf32>
    %119 = arith.addf %117, %118 : vector<16x128xf32>
    %cst_44 = arith.constant 5.000000e-01 : f32
    %120 = vector.broadcast %cst_44 : f32 to vector<16x128xf32>
    %121 = arith.mulf %120, %119 : vector<16x128xf32>
    %122 = arith.mulf %114, %121 : vector<16x128xf32>
    %c0_45 = arith.constant 0 : index
    %c1664 = arith.constant 1664 : index
    %123 = vector.load %arg8[%c0_45, %c1664] : memref<1x2176xf32, #tpu.memory_space<vmem>>, vector<1x128xf32>
    %c0_46 = arith.constant 0 : index
    %c1792 = arith.constant 1792 : index
    %124 = vector.load %arg8[%c0_46, %c1792] : memref<1x2176xf32, #tpu.memory_space<vmem>>, vector<1x128xf32>
    %cst_47 = arith.constant dense<0.000000e+00> : vector<16xf32>
    %125 = vector.multi_reduction <add>, %9, %cst_47 [1] : vector<16x128xf32> to vector<16xf32>
    %126 = vector.shape_cast %125 : vector<16xf32> to vector<16x1xf32>
    %127 = arith.mulf %9, %9 : vector<16x128xf32>
    %cst_48 = arith.constant dense<0.000000e+00> : vector<16xf32>
    %128 = vector.multi_reduction <add>, %127, %cst_48 [1] : vector<16x128xf32> to vector<16xf32>
    %129 = vector.shape_cast %128 : vector<16xf32> to vector<16x1xf32>
    %cst_49 = arith.constant 7.812500e-03 : f32
    %130 = vector.broadcast %cst_49 : f32 to vector<16x1xf32>
    %131 = arith.mulf %126, %130 : vector<16x1xf32>
    %cst_50 = arith.constant 7.812500e-03 : f32
    %132 = vector.broadcast %cst_50 : f32 to vector<16x1xf32>
    %133 = arith.mulf %129, %132 : vector<16x1xf32>
    %134 = arith.mulf %131, %131 : vector<16x1xf32>
    %135 = arith.subf %133, %134 : vector<16x1xf32>
    %cst_51 = arith.constant 0.000000e+00 : f32
    %136 = vector.broadcast %cst_51 : f32 to vector<16x1xf32>
    %137 = arith.maximumf %135, %136 : vector<16x1xf32>
    %138 = vector.broadcast %131 : vector<16x1xf32> to vector<16x128xf32>
    %139 = arith.subf %9, %138 : vector<16x128xf32>
    %cst_52 = arith.constant 9.99999974E-6 : f32
    %140 = vector.broadcast %cst_52 : f32 to vector<16x1xf32>
    %141 = arith.addf %137, %140 : vector<16x1xf32>
    %142 = math.rsqrt %141 : vector<16x1xf32>
    %143 = vector.broadcast %142 : vector<16x1xf32> to vector<16x128xf32>
    %144 = arith.mulf %139, %143 : vector<16x128xf32>
    %145 = vector.broadcast %123 : vector<1x128xf32> to vector<16x128xf32>
    %146 = arith.mulf %144, %145 : vector<16x128xf32>
    %147 = vector.broadcast %124 : vector<1x128xf32> to vector<16x128xf32>
    %148 = arith.addf %146, %147 : vector<16x128xf32>
    %cst_53 = arith.constant 5.000000e-01 : f32
    %149 = vector.broadcast %cst_53 : f32 to vector<16x128xf32>
    %150 = arith.mulf %149, %148 : vector<16x128xf32>
    %151 = math.tanh %150 : vector<16x128xf32>
    %cst_54 = arith.constant 1.000000e+00 : f32
    %152 = vector.broadcast %cst_54 : f32 to vector<16x128xf32>
    %153 = arith.addf %151, %152 : vector<16x128xf32>
    %cst_55 = arith.constant 5.000000e-01 : f32
    %154 = vector.broadcast %cst_55 : f32 to vector<16x128xf32>
    %155 = arith.mulf %154, %153 : vector<16x128xf32>
    %156 = arith.mulf %148, %155 : vector<16x128xf32>
    %157 = arith.truncf %88 : vector<16x128xf32> to vector<16x128xbf16>
    %c0_56 = arith.constant 0 : index
    %c0_57 = arith.constant 0 : index
    %158 = vector.load %arg5[%c0_56, %c0_57] : memref<128x128xbf16, #tpu.memory_space<vmem>>, vector<128x128xbf16>
    %cst_58 = arith.constant dense<0.000000e+00> : vector<16x128xf32>
    %159 = tpu.matmul %157, %158, %cst_58 {dimension_numbers = #tpu.dot_dimension_numbers<[1], [0], [0], [1], [0, 0, 1, 1], [], []>} : vector<16x128xbf16>, vector<128x128xbf16>, vector<16x128xf32> -> vector<16x128xf32>
    %160 = arith.truncf %122 : vector<16x128xf32> to vector<16x128xbf16>
    %c0_59 = arith.constant 0 : index
    %c0_60 = arith.constant 0 : index
    %161 = vector.load %arg6[%c0_59, %c0_60] : memref<128x128xbf16, #tpu.memory_space<vmem>>, vector<128x128xbf16>
    %cst_61 = arith.constant dense<0.000000e+00> : vector<16x128xf32>
    %162 = tpu.matmul %160, %161, %cst_61 {dimension_numbers = #tpu.dot_dimension_numbers<[1], [0], [0], [1], [0, 0, 1, 1], [], []>} : vector<16x128xbf16>, vector<128x128xbf16>, vector<16x128xf32> -> vector<16x128xf32>
    %163 = arith.addf %159, %162 : vector<16x128xf32>
    %164 = arith.truncf %156 : vector<16x128xf32> to vector<16x128xbf16>
    %c0_62 = arith.constant 0 : index
    %c0_63 = arith.constant 0 : index
    %165 = vector.load %arg7[%c0_62, %c0_63] : memref<128x128xbf16, #tpu.memory_space<vmem>>, vector<128x128xbf16>
    %cst_64 = arith.constant dense<0.000000e+00> : vector<16x128xf32>
    %166 = tpu.matmul %164, %165, %cst_64 {dimension_numbers = #tpu.dot_dimension_numbers<[1], [0], [0], [1], [0, 0, 1, 1], [], []>} : vector<16x128xbf16>, vector<128x128xbf16>, vector<16x128xf32> -> vector<16x128xf32>
    %167 = arith.addf %163, %166 : vector<16x128xf32>
    %c0_65 = arith.constant 0 : index
    %c2048 = arith.constant 2048 : index
    %168 = vector.load %arg8[%c0_65, %c2048] : memref<1x2176xf32, #tpu.memory_space<vmem>>, vector<1x128xf32>
    %169 = vector.broadcast %168 : vector<1x128xf32> to vector<16x128xf32>
    %170 = arith.addf %167, %169 : vector<16x128xf32>
    %171 = arith.addf %0, %170 : vector<16x128xf32>
    %cst_66 = arith.constant 1.000000e-01 : f32
    %172 = vector.broadcast %cst_66 : f32 to vector<16x128xf32>
    %173 = arith.mulf %172, %50 : vector<16x128xf32>
    %174 = arith.addf %171, %173 : vector<16x128xf32>
    %c0_67 = arith.constant 0 : index
    %c0_68 = arith.constant 0 : index
    %175 = vector.load %arg9[%c0_67, %c0_68] : memref<16x128xf32, #tpu.memory_space<vmem>>, vector<16x128xf32>
    tpu.vector_store %arg9[%c0_67, %c0_68], %174 {strides = array<i32>} : memref<16x128xf32, #tpu.memory_space<vmem>>, vector<16x128xf32>,
    return
  }
  func.func @transform_0(%arg0: i32) -> (i32, i32) {
    %c0_i32 = arith.constant 0 : i32
    %c0_i32_0 = arith.constant 0 : i32
    return %arg0, %c0_i32 : i32, i32
  }
  func.func @transform_1(%arg0: i32) -> (i32, i32) {
    %c0_i32 = arith.constant 0 : i32
    %c0_i32_0 = arith.constant 0 : i32
    %c0_i32_1 = arith.constant 0 : i32
    return %c0_i32, %c0_i32_0 : i32, i32
  }
  func.func @transform_2(%arg0: i32) -> (i32, i32) {
    %c0_i32 = arith.constant 0 : i32
    %c0_i32_0 = arith.constant 0 : i32
    %c0_i32_1 = arith.constant 0 : i32
    return %c0_i32, %c0_i32_0 : i32, i32
  }
  func.func @transform_3(%arg0: i32) -> (i32, i32) {
    %c0_i32 = arith.constant 0 : i32
    %c0_i32_0 = arith.constant 0 : i32
    %c0_i32_1 = arith.constant 0 : i32
    return %c0_i32, %c0_i32_0 : i32, i32
  }
  func.func @transform_4(%arg0: i32) -> (i32, i32) {
    %c0_i32 = arith.constant 0 : i32
    %c0_i32_0 = arith.constant 0 : i32
    %c0_i32_1 = arith.constant 0 : i32
    return %c0_i32, %c0_i32_0 : i32, i32
  }
  func.func @transform_5(%arg0: i32) -> (i32, i32) {
    %c0_i32 = arith.constant 0 : i32
    %c0_i32_0 = arith.constant 0 : i32
    %c0_i32_1 = arith.constant 0 : i32
    return %c0_i32, %c0_i32_0 : i32, i32
  }
  func.func @transform_6(%arg0: i32) -> (i32, i32) {
    %c0_i32 = arith.constant 0 : i32
    %c0_i32_0 = arith.constant 0 : i32
    %c0_i32_1 = arith.constant 0 : i32
    return %c0_i32, %c0_i32_0 : i32, i32
  }
  func.func @transform_7(%arg0: i32) -> (i32, i32) {
    %c0_i32 = arith.constant 0 : i32
    %c0_i32_0 = arith.constant 0 : i32
    %c0_i32_1 = arith.constant 0 : i32
    return %c0_i32, %c0_i32_0 : i32, i32
  }
  func.func @transform_8(%arg0: i32) -> (i32, i32) {
    %c0_i32 = arith.constant 0 : i32
    %c0_i32_0 = arith.constant 0 : i32
    return %arg0, %c0_i32 : i32, i32
  }
}

module attributes {stable_mosaic.version = 11 : i64} {
  func.func @dmn_kernel(%arg0: i32, %arg1: memref<16x128xf32, #tpu.memory_space<vmem>>, %arg2: memref<128x640xbf16, #tpu.memory_space<vmem>>, %arg3: memref<256x128xbf16, #tpu.memory_space<vmem>>, %arg4: memref<128x128xbf16, #tpu.memory_space<vmem>>, %arg5: memref<128x128xbf16, #tpu.memory_space<vmem>>, %arg6: memref<128x128xbf16, #tpu.memory_space<vmem>>, %arg7: memref<128x128xbf16, #tpu.memory_space<vmem>>, %arg8: memref<1x2176xf32, #tpu.memory_space<vmem>>, %arg9: memref<16x128xf32, #tpu.memory_space<vmem>>) attributes {dimension_semantics = [#tpu.dimension_semantics<parallel>], iteration_bounds = array<i64: 1>, scalar_prefetch = 0 : i64, scratch_operands = 0 : i64, tpu.core_type = #tpu.core_type<tc>, window_params = [{transform_indices = @transform_0, window_bounds = array<i64: 16, 128>}, {pipeline_mode = #tpu.pipeline_mode<synchronous>, transform_indices = @transform_1, window_bounds = array<i64: 128, 640>}, {pipeline_mode = #tpu.pipeline_mode<synchronous>, transform_indices = @transform_2, window_bounds = array<i64: 256, 128>}, {pipeline_mode = #tpu.pipeline_mode<synchronous>, transform_indices = @transform_3, window_bounds = array<i64: 128, 128>}, {pipeline_mode = #tpu.pipeline_mode<synchronous>, transform_indices = @transform_4, window_bounds = array<i64: 128, 128>}, {pipeline_mode = #tpu.pipeline_mode<synchronous>, transform_indices = @transform_5, window_bounds = array<i64: 128, 128>}, {pipeline_mode = #tpu.pipeline_mode<synchronous>, transform_indices = @transform_6, window_bounds = array<i64: 128, 128>}, {pipeline_mode = #tpu.pipeline_mode<synchronous>, transform_indices = @transform_7, window_bounds = array<i64: 1, 2176>}, {transform_indices = @transform_8, window_bounds = array<i64: 16, 128>}]} {
    %c0 = arith.constant 0 : index
    %c0_0 = arith.constant 0 : index
    %0 = vector.load %arg1[%c0, %c0_0] : memref<16x128xf32, #tpu.memory_space<vmem>>, vector<16x128xf32>
    %1 = arith.truncf %0 : vector<16x128xf32> to vector<16x128xbf16>
    %c0_1 = arith.constant 0 : index
    %c0_2 = arith.constant 0 : index
    %2 = vector.load %arg2[%c0_1, %c0_2] : memref<128x640xbf16, #tpu.memory_space<vmem>>, vector<128x640xbf16>
    %cst = arith.constant dense<0.000000e+00> : vector<16x640xf32>
    %3 = tpu.matmul %1, %2, %cst {dimension_numbers = #tpu.dot_dimension_numbers<[1], [0], [0], [1], [0, 0, 1, 1], [], []>} : vector<16x128xbf16>, vector<128x640xbf16>, vector<16x640xf32> -> vector<16x640xf32>
    %c0_3 = arith.constant 0 : index
    %c0_4 = arith.constant 0 : index
    %4 = vector.load %arg8[%c0_3, %c0_4] : memref<1x2176xf32, #tpu.memory_space<vmem>>, vector<1x640xf32>
    %5 = vector.broadcast %4 : vector<1x640xf32> to vector<16x640xf32>
    %6 = arith.addf %3, %5 : vector<16x640xf32>
    %7 = vector.extract_strided_slice %6 {offsets = [0, 0], sizes = [16, 128], strides = [1, 1]} : vector<16x640xf32> to vector<16x128xf32>
    %8 = vector.extract_strided_slice %6 {offsets = [0, 128], sizes = [16, 256], strides = [1, 1]} : vector<16x640xf32> to vector<16x256xf32>
    %9 = vector.extract_strided_slice %6 {offsets = [0, 384], sizes = [16, 128], strides = [1, 1]} : vector<16x640xf32> to vector<16x128xf32>
    %10 = vector.extract_strided_slice %6 {offsets = [0, 512], sizes = [16, 128], strides = [1, 1]} : vector<16x640xf32> to vector<16x128xf32>
    %c0_5 = arith.constant 0 : index
    %c896 = arith.constant 896 : index
    %11 = vector.load %arg8[%c0_5, %c896] : memref<1x2176xf32, #tpu.memory_space<vmem>>, vector<1x256xf32>
    %c0_6 = arith.constant 0 : index
    %c1152 = arith.constant 1152 : index
    %12 = vector.load %arg8[%c0_6, %c1152] : memref<1x2176xf32, #tpu.memory_space<vmem>>, vector<1x256xf32>
    %cst_7 = arith.constant dense<0.000000e+00> : vector<16xf32>
    %13 = vector.multi_reduction <add>, %8, %cst_7 [1] : vector<16x256xf32> to vector<16xf32>
    %14 = vector.shape_cast %13 : vector<16xf32> to vector<16x1xf32>
    %15 = arith.mulf %8, %8 : vector<16x256xf32>
    %cst_8 = arith.constant dense<0.000000e+00> : vector<16xf32>
    %16 = vector.multi_reduction <add>, %15, %cst_8 [1] : vector<16x256xf32> to vector<16xf32>
    %17 = vector.shape_cast %16 : vector<16xf32> to vector<16x1xf32>
    %cst_9 = arith.constant 3.906250e-03 : f32
    %18 = vector.broadcast %cst_9 : f32 to vector<16x1xf32>
    %19 = arith.mulf %14, %18 : vector<16x1xf32>
    %cst_10 = arith.constant 3.906250e-03 : f32
    %20 = vector.broadcast %cst_10 : f32 to vector<16x1xf32>
    %21 = arith.mulf %17, %20 : vector<16x1xf32>
    %22 = arith.mulf %19, %19 : vector<16x1xf32>
    %23 = arith.subf %21, %22 : vector<16x1xf32>
    %cst_11 = arith.constant 0.000000e+00 : f32
    %24 = vector.broadcast %cst_11 : f32 to vector<16x1xf32>
    %25 = arith.maximumf %23, %24 : vector<16x1xf32>
    %26 = vector.broadcast %19 : vector<16x1xf32> to vector<16x256xf32>
    %27 = arith.subf %8, %26 : vector<16x256xf32>
    %cst_12 = arith.constant 9.99999974E-6 : f32
    %28 = vector.broadcast %cst_12 : f32 to vector<16x1xf32>
    %29 = arith.addf %25, %28 : vector<16x1xf32>
    %30 = math.rsqrt %29 : vector<16x1xf32>
    %31 = vector.broadcast %30 : vector<16x1xf32> to vector<16x256xf32>
    %32 = arith.mulf %27, %31 : vector<16x256xf32>
    %33 = vector.broadcast %11 : vector<1x256xf32> to vector<16x256xf32>
    %34 = arith.mulf %32, %33 : vector<16x256xf32>
    %35 = vector.broadcast %12 : vector<1x256xf32> to vector<16x256xf32>
    %36 = arith.addf %34, %35 : vector<16x256xf32>
    %cst_13 = arith.constant 5.000000e-01 : f32
    %37 = vector.broadcast %cst_13 : f32 to vector<16x256xf32>
    %38 = arith.mulf %37, %36 : vector<16x256xf32>
    %39 = math.tanh %38 : vector<16x256xf32>
    %cst_14 = arith.constant 1.000000e+00 : f32
    %40 = vector.broadcast %cst_14 : f32 to vector<16x256xf32>
    %41 = arith.addf %39, %40 : vector<16x256xf32>
    %cst_15 = arith.constant 5.000000e-01 : f32
    %42 = vector.broadcast %cst_15 : f32 to vector<16x256xf32>
    %43 = arith.mulf %42, %41 : vector<16x256xf32>
    %44 = arith.mulf %36, %43 : vector<16x256xf32>
    %45 = arith.truncf %44 : vector<16x256xf32> to vector<16x256xbf16>
    %c0_16 = arith.constant 0 : index
    %c0_17 = arith.constant 0 : index
    %46 = vector.load %arg3[%c0_16, %c0_17] : memref<256x128xbf16, #tpu.memory_space<vmem>>, vector<256x128xbf16>
    %cst_18 = arith.constant dense<0.000000e+00> : vector<16x128xf32>
    %47 = tpu.matmul %45, %46, %cst_18 {dimension_numbers = #tpu.dot_dimension_numbers<[1], [0], [0], [1], [0, 0, 1, 1], [], []>} : vector<16x256xbf16>, vector<256x128xbf16>, vector<16x128xf32> -> vector<16x128xf32>
    %c0_19 = arith.constant 0 : index
    %c1920 = arith.constant 1920 : index
    %48 = vector.load %arg8[%c0_19, %c1920] : memref<1x2176xf32, #tpu.memory_space<vmem>>, vector<1x128xf32>
    %49 = vector.broadcast %48 : vector<1x128xf32> to vector<16x128xf32>
    %50 = arith.addf %47, %49 : vector<16x128xf32>
    %51 = arith.truncf %50 : vector<16x128xf32> to vector<16x128xbf16>
    %c0_20 = arith.constant 0 : index
    %c0_21 = arith.constant 0 : index
    %52 = vector.load %arg4[%c0_20, %c0_21] : memref<128x128xbf16, #tpu.memory_space<vmem>>, vector<128x128xbf16>
    %cst_22 = arith.constant dense<0.000000e+00> : vector<16x128xf32>
    %53 = tpu.matmul %51, %52, %cst_22 {dimension_numbers = #tpu.dot_dimension_numbers<[1], [0], [0], [1], [0, 0, 1, 1], [], []>} : vector<16x128xbf16>, vector<128x128xbf16>, vector<16x128xf32> -> vector<16x128xf32>
    %54 = arith.addf %10, %53 : vector<16x128xf32>
    %c0_23 = arith.constant 0 : index
    %c640 = arith.constant 640 : index
    %55 = vector.load %arg8[%c0_23, %c640] : memref<1x2176xf32, #tpu.memory_space<vmem>>, vector<1x128xf32>
    %c0_24 = arith.constant 0 : index
    %c768 = arith.constant 768 : index
    %56 = vector.load %arg8[%c0_24, %c768] : memref<1x2176xf32, #tpu.memory_space<vmem>>, vector<1x128xf32>
    %cst_25 = arith.constant dense<0.000000e+00> : vector<16xf32>
    %57 = vector.multi_reduction <add>, %7, %cst_25 [1] : vector<16x128xf32> to vector<16xf32>
    %58 = vector.shape_cast %57 : vector<16xf32> to vector<16x1xf32>
    %59 = arith.mulf %7, %7 : vector<16x128xf32>
    %cst_26 = arith.constant dense<0.000000e+00> : vector<16xf32>
    %60 = vector.multi_reduction <add>, %59, %cst_26 [1] : vector<16x128xf32> to vector<16xf32>
    %61 = vector.shape_cast %60 : vector<16xf32> to vector<16x1xf32>
    %cst_27 = arith.constant 7.812500e-03 : f32
    %62 = vector.broadcast %cst_27 : f32 to vector<16x1xf32>
    %63 = arith.mulf %58, %62 : vector<16x1xf32>
    %cst_28 = arith.constant 7.812500e-03 : f32
    %64 = vector.broadcast %cst_28 : f32 to vector<16x1xf32>
    %65 = arith.mulf %61, %64 : vector<16x1xf32>
    %66 = arith.mulf %63, %63 : vector<16x1xf32>
    %67 = arith.subf %65, %66 : vector<16x1xf32>
    %cst_29 = arith.constant 0.000000e+00 : f32
    %68 = vector.broadcast %cst_29 : f32 to vector<16x1xf32>
    %69 = arith.maximumf %67, %68 : vector<16x1xf32>
    %70 = vector.broadcast %63 : vector<16x1xf32> to vector<16x128xf32>
    %71 = arith.subf %7, %70 : vector<16x128xf32>
    %cst_30 = arith.constant 9.99999974E-6 : f32
    %72 = vector.broadcast %cst_30 : f32 to vector<16x1xf32>
    %73 = arith.addf %69, %72 : vector<16x1xf32>
    %74 = math.rsqrt %73 : vector<16x1xf32>
    %75 = vector.broadcast %74 : vector<16x1xf32> to vector<16x128xf32>
    %76 = arith.mulf %71, %75 : vector<16x128xf32>
    %77 = vector.broadcast %55 : vector<1x128xf32> to vector<16x128xf32>
    %78 = arith.mulf %76, %77 : vector<16x128xf32>
    %79 = vector.broadcast %56 : vector<1x128xf32> to vector<16x128xf32>
    %80 = arith.addf %78, %79 : vector<16x128xf32>
    %cst_31 = arith.constant 5.000000e-01 : f32
    %81 = vector.broadcast %cst_31 : f32 to vector<16x128xf32>
    %82 = arith.mulf %81, %80 : vector<16x128xf32>
    %83 = math.tanh %82 : vector<16x128xf32>
    %cst_32 = arith.constant 1.000000e+00 : f32
    %84 = vector.broadcast %cst_32 : f32 to vector<16x128xf32>
    %85 = arith.addf %83, %84 : vector<16x128xf32>
    %cst_33 = arith.constant 5.000000e-01 : f32
    %86 = vector.broadcast %cst_33 : f32 to vector<16x128xf32>
    %87 = arith.mulf %86, %85 : vector<16x128xf32>
    %88 = arith.mulf %80, %87 : vector<16x128xf32>
    %c0_34 = arith.constant 0 : index
    %c1408 = arith.constant 1408 : index
    %89 = vector.load %arg8[%c0_34, %c1408] : memref<1x2176xf32, #tpu.memory_space<vmem>>, vector<1x128xf32>
    %c0_35 = arith.constant 0 : index
    %c1536 = arith.constant 1536 : index
    %90 = vector.load %arg8[%c0_35, %c1536] : memref<1x2176xf32, #tpu.memory_space<vmem>>, vector<1x128xf32>
    %cst_36 = arith.constant dense<0.000000e+00> : vector<16xf32>
    %91 = vector.multi_reduction <add>, %54, %cst_36 [1] : vector<16x128xf32> to vector<16xf32>
    %92 = vector.shape_cast %91 : vector<16xf32> to vector<16x1xf32>
    %93 = arith.mulf %54, %54 : vector<16x128xf32>
    %cst_37 = arith.constant dense<0.000000e+00> : vector<16xf32>
    %94 = vector.multi_reduction <add>, %93, %cst_37 [1] : vector<16x128xf32> to vector<16xf32>
    %95 = vector.shape_cast %94 : vector<16xf32> to vector<16x1xf32>
    %cst_38 = arith.constant 7.812500e-03 : f32
    %96 = vector.broadcast %cst_38 : f32 to vector<16x1xf32>
    %97 = arith.mulf %92, %96 : vector<16x1xf32>
    %cst_39 = arith.constant 7.812500e-03 : f32
    %98 = vector.broadcast %cst_39 : f32 to vector<16x1xf32>
    %99 = arith.mulf %95, %98 : vector<16x1xf32>
    %100 = arith.mulf %97, %97 : vector<16x1xf32>
    %101 = arith.subf %99, %100 : vector<16x1xf32>
    %cst_40 = arith.constant 0.000000e+00 : f32
    %102 = vector.broadcast %cst_40 : f32 to vector<16x1xf32>
    %103 = arith.maximumf %101, %102 : vector<16x1xf32>
    %104 = vector.broadcast %97 : vector<16x1xf32> to vector<16x128xf32>
    %105 = arith.subf %54, %104 : vector<16x128xf32>
    %cst_41 = arith.constant 9.99999974E-6 : f32
    %106 = vector.broadcast %cst_41 : f32 to vector<16x1xf32>
    %107 = arith.addf %103, %106 : vector<16x1xf32>
    %108 = math.rsqrt %107 : vector<16x1xf32>
    %109 = vector.broadcast %108 : vector<16x1xf32> to vector<16x128xf32>
    %110 = arith.mulf %105, %109 : vector<16x128xf32>
    %111 = vector.broadcast %89 : vector<1x128xf32> to vector<16x128xf32>
    %112 = arith.mulf %110, %111 : vector<16x128xf32>
    %113 = vector.broadcast %90 : vector<1x128xf32> to vector<16x128xf32>
    %114 = arith.addf %112, %113 : vector<16x128xf32>
    %cst_42 = arith.constant 5.000000e-01 : f32
    %115 = vector.broadcast %cst_42 : f32 to vector<16x128xf32>
    %116 = arith.mulf %115, %114 : vector<16x128xf32>
    %117 = math.tanh %116 : vector<16x128xf32>
    %cst_43 = arith.constant 1.000000e+00 : f32
    %118 = vector.broadcast %cst_43 : f32 to vector<16x128xf32>
    %119 = arith.addf %117, %118 : vector<16x128xf32>
    %cst_44 = arith.constant 5.000000e-01 : f32
    %120 = vector.broadcast %cst_44 : f32 to vector<16x128xf32>
    %121 = arith.mulf %120, %119 : vector<16x128xf32>
    %122 = arith.mulf %114, %121 : vector<16x128xf32>
    %c0_45 = arith.constant 0 : index
    %c1664 = arith.constant 1664 : index
    %123 = vector.load %arg8[%c0_45, %c1664] : memref<1x2176xf32, #tpu.memory_space<vmem>>, vector<1x128xf32>
    %c0_46 = arith.constant 0 : index
    %c1792 = arith.constant 1792 : index
    %124 = vector.load %arg8[%c0_46, %c1792] : memref<1x2176xf32, #tpu.memory_space<vmem>>, vector<1x128xf32>
    %cst_47 = arith.constant dense<0.000000e+00> : vector<16xf32>
    %125 = vector.multi_reduction <add>, %9, %cst_47 [1] : vector<16x128xf32> to vector<16xf32>
    %126 = vector.shape_cast %125 : vector<16xf32> to vector<16x1xf32>
    %127 = arith.mulf %9, %9 : vector<16x128xf32>
    %cst_48 = arith.constant dense<0.000000e+00> : vector<16xf32>
    %128 = vector.multi_reduction <add>, %127, %cst_48 [1] : vector<16x128xf32> to vector<16xf32>
    %129 = vector.shape_cast %128 : vector<16xf32> to vector<16x1xf32>
    %cst_49 = arith.constant 7.812500e-03 : f32
    %130 = vector.broadcast %cst_49 : f32 to vector<16x1xf32>
    %131 = arith.mulf %126, %130 : vector<16x1xf32>
    %cst_50 = arith.constant 7.812500e-03 : f32
    %132 = vector.broadcast %cst_50 : f32 to vector<16x1xf32>
    %133 = arith.mulf %129, %132 : vector<16x1xf32>
    %134 = arith.mulf %131, %131 : vector<16x1xf32>
    %135 = arith.subf %133, %134 : vector<16x1xf32>
    %cst_51 = arith.constant 0.000000e+00 : f32
    %136 = vector.broadcast %cst_51 : f32 to vector<16x1xf32>
    %137 = arith.maximumf %135, %136 : vector<16x1xf32>
    %138 = vector.broadcast %131 : vector<16x1xf32> to vector<16x128xf32>
    %139 = arith.subf %9, %138 : vector<16x128xf32>
    %cst_52 = arith.constant 9.99999974E-6 : f32
    %140 = vector.broadcast %cst_52 : f32 to vector<16x1xf32>
    %141 = arith.addf %137, %140 : vector<16x1xf32>
    %142 = math.rsqrt %141 : vector<16x1xf32>
    %143 = vector.broadcast %142 : vector<16x1xf32> to vector<16x128xf32>
    %144 = arith.mulf %139, %143 : vector<16x128xf32>
    %145 = vector.broadcast %123 : vector<1x128xf32> to vector<16x128xf32>
    %146 = arith.mulf %144, %145 : vector<16x128xf32>
    %147 = vector.broadcast %124 : vector<1x128xf32> to vector<16x128xf32>
    %148 = arith.addf %146, %147 : vector<16x128xf32>
    %cst_53 = arith.constant 5.000000e-01 : f32
    %149 = vector.broadcast %cst_53 : f32 to vector<16x128xf32>
    %150 = arith.mulf %149, %148 : vector<16x128xf32>
    %151 = math.tanh %150 : vector<16x128xf32>
    %cst_54 = arith.constant 1.000000e+00 : f32
    %152 = vector.broadcast %cst_54 : f32 to vector<16x128xf32>
    %153 = arith.addf %151, %152 : vector<16x128xf32>
    %cst_55 = arith.constant 5.000000e-01 : f32
    %154 = vector.broadcast %cst_55 : f32 to vector<16x128xf32>
    %155 = arith.mulf %154, %153 : vector<16x128xf32>
    %156 = arith.mulf %148, %155 : vector<16x128xf32>
    %157 = arith.truncf %88 : vector<16x128xf32> to vector<16x128xbf16>
    %c0_56 = arith.constant 0 : index
    %c0_57 = arith.constant 0 : index
    %158 = vector.load %arg5[%c0_56, %c0_57] : memref<128x128xbf16, #tpu.memory_space<vmem>>, vector<128x128xbf16>
    %cst_58 = arith.constant dense<0.000000e+00> : vector<16x128xf32>
    %159 = tpu.matmul %157, %158, %cst_58 {dimension_numbers = #tpu.dot_dimension_numbers<[1], [0], [0], [1], [0, 0, 1, 1], [], []>} : vector<16x128xbf16>, vector<128x128xbf16>, vector<16x128xf32> -> vector<16x128xf32>
    %160 = arith.truncf %122 : vector<16x128xf32> to vector<16x128xbf16>
    %c0_59 = arith.constant 0 : index
    %c0_60 = arith.constant 0 : index
    %161 = vector.load %arg6[%c0_59, %c0_60] : memref<128x128xbf16, #tpu.memory_space<vmem>>, vector<128x128xbf16>
    %cst_61 = arith.constant dense<0.000000e+00> : vector<16x128xf32>
    %162 = tpu.matmul %160, %161, %cst_61 {dimension_numbers = #tpu.dot_dimension_numbers<[1], [0], [0], [1], [0, 0, 1, 1], [], []>} : vector<16x128xbf16>, vector<128x128xbf16>, vector<16x128xf32> -> vector<16x128xf32>
    %163 = arith.addf %159, %162 : vector<16x128xf32>
    %164 = arith.truncf %156 : vector<16x128xf32> to vector<16x128xbf16>
    %c0_62 = arith.constant 0 : index
    %c0_63 = arith.constant 0 : index
    %165 = vector.load %arg7[%c0_62, %c0_63] : memref<128x128xbf16, #tpu.memory_space<vmem>>, vector<128x128xbf16>
    %cst_64 = arith.constant dense<0.000000e+00> : vector<16x128xf32>
    %166 = tpu.matmul %164, %165, %cst_64 {dimension_numbers = #tpu.dot_dimension_numbers<[1], [0], [0], [1], [0, 0, 1, 1], [], []>} : vector<16x128xbf16>, vector<128x128xbf16>, vector<16x128xf32> -> vector<16x128xf32>
    %167 = arith.addf %163, %166 : vector<16x128xf32>
    %c0_65 = arith.constant 0 : index
    %c2048 = arith.constant 2048 : index
    %168 = vector.load %arg8[%c0_65, %c2048] : memref<1x2176xf32, #tpu.memory_space<vmem>>, vector<1x128xf32>
    %169 = vector.broadcast %168 : vector<1x128xf32> to vector<16x128xf32>
    %170 = arith.addf %167, %169 : vector<16x128xf32>
    %171 = arith.addf %0, %170 : vector<16x128xf32>
    %cst_66 = arith.constant 1.000000e-01 : f32
    %172 = vector.broadcast %cst_66 : f32 to vector<16x128xf32>
    %173 = arith.mulf %172, %50 : vector<16x128xf32>
    %174 = arith.addf %171, %173 : vector<16x128xf32>
    %c0_67 = arith.constant 0 : index
    %c0_68 = arith.constant 0 : index
    %175 = vector.load %arg9[%c0_67, %c0_68] : memref<16x128xf32, #tpu.memory_space<vmem>>, vector<16x128xf32>
    tpu.vector_store %arg9[%c0_67, %c0_68], %174 {strides = array<i32>} : memref<16x128xf32, #tpu.memory_space<vmem>>, vector<16x128xf32>,
    return
  }
  func.func @transform_0(%arg0: i32) -> (i32, i32) {
    %c0_i32 = arith.constant 0 : i32
    %c0_i32_0 = arith.constant 0 : i32
    return %arg0, %c0_i32 : i32, i32
  }
  func.func @transform_1(%arg0: i32) -> (i32, i32) {
    %c0_i32 = arith.constant 0 : i32
    %c0_i32_0 = arith.constant 0 : i32
    %c0_i32_1 = arith.constant 0 : i32
    return %c0_i32, %c0_i32_0 : i32, i32
  }
  func.func @transform_2(%arg0: i32) -> (i32, i32) {
    %c0_i32 = arith.constant 0 : i32
    %c0_i32_0 = arith.constant 0 : i32
    %c0_i32_1 = arith.constant 0 : i32
    return %c0_i32, %c0_i32_0 : i32, i32
  }
  func.func @transform_3(%arg0: i32) -> (i32, i32) {
    %c0_i32 = arith.constant 0 : i32
    %c0_i32_0 = arith.constant 0 : i32
    %c0_i32_1 = arith.constant 0 : i32
    return %c0_i32, %c0_i32_0 : i32, i32
  }
  func.func @transform_4(%arg0: i32) -> (i32, i32) {
    %c0_i32 = arith.constant 0 : i32
    %c0_i32_0 = arith.constant 0 : i32
    %c0_i32_1 = arith.constant 0 : i32
    return %c0_i32, %c0_i32_0 : i32, i32
  }
  func.func @transform_5(%arg0: i32) -> (i32, i32) {
    %c0_i32 = arith.constant 0 : i32
    %c0_i32_0 = arith.constant 0 : i32
    %c0_i32_1 = arith.constant 0 : i32
    return %c0_i32, %c0_i32_0 : i32, i32
  }
  func.func @transform_6(%arg0: i32) -> (i32, i32) {
    %c0_i32 = arith.constant 0 : i32
    %c0_i32_0 = arith.constant 0 : i32
    %c0_i32_1 = arith.constant 0 : i32
    return %c0_i32, %c0_i32_0 : i32, i32
  }
  func.func @transform_7(%arg0: i32) -> (i32, i32) {
    %c0_i32 = arith.constant 0 : i32
    %c0_i32_0 = arith.constant 0 : i32
    %c0_i32_1 = arith.constant 0 : i32
    return %c0_i32, %c0_i32_0 : i32, i32
  }
  func.func @transform_8(%arg0: i32) -> (i32, i32) {
    %c0_i32 = arith.constant 0 : i32
    %c0_i32_0 = arith.constant 0 : i32
    return %arg0, %c0_i32 : i32, i32
  }
}

</mosaic_0001>

<llo_original>
// kernel: _dmn_forward_impl.1
$region0: #{_dmn_forward_impl.1}
  #allocation0 [shape = 'u32[]', space=smem, size = 0x4, offset = 0x4, fixed_abs, tag = 'smem constant byte address 0x4 - core index']
  #allocation1 [shape = 'u32[72,128]{1,0:T(1,128)}', space=vmem, size = 0x9000, scoped, tag = 'internal scratch']
  %s0 = inlined_call_operand.vmem [shape: f32[16,128], index: 0, kind: input, shape index: {}]
  %s1 = inlined_call_operand.hbm [shape: bf16[128,640], index: 1, kind: input, shape index: {}]
  %s2 = inlined_call_operand.hbm [shape: bf16[256,128], index: 2, kind: input, shape index: {}]
  %s3 = inlined_call_operand.hbm [shape: bf16[128,128], index: 3, kind: input, shape index: {}]
  %s4 = inlined_call_operand.hbm [shape: bf16[128,128], index: 4, kind: input, shape index: {}]
  %s5 = inlined_call_operand.hbm [shape: bf16[128,128], index: 5, kind: input, shape index: {}]
  %s6 = inlined_call_operand.hbm [shape: bf16[128,128], index: 6, kind: input, shape index: {}]
  %s7 = inlined_call_operand.vmem [shape: f32[1,2176], index: 7, kind: input, shape index: {}]
  %s8 = inlined_call_operand.hbm [shape: f32[16,128], index: 8, kind: output, shape index: {}]
  %s9 = sld [smem:[#allocation0]]
  $region66: #{_dmn_forward_impl.1} parent=0
    _
  %s11 = ssub.s32 1, %s9
  %s12 = scalar_select 0, %s11, %s9
  $region1: #{_dmn_forward_impl.1} parent=0
    #allocation2 [shape = 'u8[163840]{0}', space=vmem, size = 0x28000, scoped, tag = 'input window, operand 1, single buffered']
    #allocation3 [shape = 's32[1]{0}', space=sflag, size = 0x4, scoped, tag = 'scoped memory for _dmn_forward_impl.1']
    #allocation4 [shape = 's32[1]{0}', space=sflag, size = 0x4, scoped, tag = 'scoped memory for _dmn_forward_impl.1']
    #allocation5 [shape = 'u8[65536]{0}', space=vmem, size = 0x10000, scoped, tag = 'input window, operand 2, single buffered']
    #allocation6 [shape = 's32[1]{0}', space=sflag, size = 0x4, scoped, tag = 'scoped memory for _dmn_forward_impl.1']
    #allocation7 [shape = 'u8[32768]{0}', space=vmem, size = 0x8000, scoped, tag = 'input window, operand 3, single buffered']
    #allocation8 [shape = 'u8[32768]{0}', space=vmem, size = 0x8000, scoped, tag = 'input window, operand 4, single buffered']
    #allocation9 [shape = 's32[1]{0}', space=sflag, size = 0x4, scoped, tag = 'scoped memory for _dmn_forward_impl.1']
    #allocation10 [shape = 'u8[32768]{0}', space=vmem, size = 0x8000, scoped, tag = 'input window, operand 5, single buffered']
    #allocation11 [shape = 'u8[32768]{0}', space=vmem, size = 0x8000, scoped, tag = 'input window, operand 6, single buffered']
    #allocation12 [shape = 's32[1]{0}', space=sflag, size = 0x4, scoped, tag = 'scoped memory for _dmn_forward_impl.1']
    #allocation13 [shape = 'u8[8192]{0}', space=vmem, size = 0x2000, scoped, tag = 'output window, operand 0, single buffered']
    %13 = vsyncpa [#allocation3], 0
    %14 = vsyncpa [#allocation6], 0
    %15 = vsyncpa [#allocation9], 0
    %16 = vsyncpa [#allocation12], 0
    %17 = vsyncpa [#allocation4], 0
    // Predicated region
    $region2: #{_dmn_forward_impl.1} parent=1 // pred_check
      _
    $region3: #{_dmn_forward_impl.1} parent=1 // pred_check_branch
      %19 = sbr.rel (0) target = $region5
    $region4: #{_dmn_forward_impl.1} parent=1 // pred_region
      _
    $region5: #{_dmn_forward_impl.1} parent=1 // pred_fallthru
      _
    // Predicated region
    $region6: #{_dmn_forward_impl.1} parent=1 // pred_check
      _
    $region7: #{_dmn_forward_impl.1} parent=1 // pred_check_branch
      %21 = sbr.rel (0) target = $region9
    $region8: #{_dmn_forward_impl.1} parent=1 // pred_region
      %23 = vsyncadd [#allocation3], 0
      %s24 = sshll.u32 %s1, 4
      %s25 = int_to_ptr.hbm [resolvable:$true] %s24
      %s26 = sshll.u32 [#allocation2], 4
      %s27 = int_to_ptr.vmem [resolvable:$true] %s26
      %32 = dma.hbm_to_vmem [thread:$0]  %s25, 5120, %s27, [#allocation3], 320, 320, 20
    $region9: #{_dmn_forward_impl.1} parent=1 // pred_fallthru
      _
    // Predicated region
    $region10: #{_dmn_forward_impl.1} parent=1 // pred_check
      _
    $region11: #{_dmn_forward_impl.1} parent=1 // pred_check_branch
      %34 = sbr.rel (0) target = $region13
    $region12: #{_dmn_forward_impl.1} parent=1 // pred_region
      %36 = vsyncadd [#allocation6], 0
      %s37 = sshll.u32 %s2, 4
      %s38 = int_to_ptr.hbm [resolvable:$true] %s37
      %s39 = sshll.u32 [#allocation5], 4
      %s40 = int_to_ptr.vmem [resolvable:$true] %s39
      %45 = dma.hbm_to_vmem [thread:$0]  %s38, 2048, %s40, [#allocation6], 64, 64, 4
    $region13: #{_dmn_forward_impl.1} parent=1 // pred_fallthru
      _
    // Predicated region
    $region14: #{_dmn_forward_impl.1} parent=1 // pred_check
      _
    $region15: #{_dmn_forward_impl.1} parent=1 // pred_check_branch
      %47 = sbr.rel (0) target = $region17
    $region16: #{_dmn_forward_impl.1} parent=1 // pred_region
      %49 = vsyncadd [#allocation6], 0
      %s50 = sshll.u32 %s3, 4
      %s51 = int_to_ptr.hbm [resolvable:$true] %s50
      %s52 = sshll.u32 [#allocation7], 4
      %s53 = int_to_ptr.vmem [resolvable:$true] %s52
      %58 = dma.hbm_to_vmem [thread:$0]  %s51, 1024, %s53, [#allocation6], 64, 64, 4
    $region17: #{_dmn_forward_impl.1} parent=1 // pred_fallthru
      _
    // Predicated region
    $region18: #{_dmn_forward_impl.1} parent=1 // pred_check
      _
    $region19: #{_dmn_forward_impl.1} parent=1 // pred_check_branch
      %60 = sbr.rel (0) target = $region21
    $region20: #{_dmn_forward_impl.1} parent=1 // pred_region
      %62 = vsyncadd [#allocation9], 0
      %s63 = sshll.u32 %s4, 4
      %s64 = int_to_ptr.hbm [resolvable:$true] %s63
      %s65 = sshll.u32 [#allocation8], 4
      %s66 = int_to_ptr.vmem [resolvable:$true] %s65
      %71 = dma.hbm_to_vmem [thread:$0]  %s64, 1024, %s66, [#allocation9], 64, 64, 4
    $region21: #{_dmn_forward_impl.1} parent=1 // pred_fallthru
      _
    // Predicated region
    $region22: #{_dmn_forward_impl.1} parent=1 // pred_check
      _
    $region23: #{_dmn_forward_impl.1} parent=1 // pred_check_branch
      %73 = sbr.rel (0) target = $region25
    $region24: #{_dmn_forward_impl.1} parent=1 // pred_region
      %75 = vsyncadd [#allocation9], 0
      %s76 = sshll.u32 %s5, 4
      %s77 = int_to_ptr.hbm [resolvable:$true] %s76
      %s78 = sshll.u32 [#allocation10], 4
      %s79 = int_to_ptr.vmem [resolvable:$true] %s78
      %84 = dma.hbm_to_vmem [thread:$0]  %s77, 1024, %s79, [#allocation9], 64, 64, 4
    $region25: #{_dmn_forward_impl.1} parent=1 // pred_fallthru
      _
    // Predicated region
    $region26: #{_dmn_forward_impl.1} parent=1 // pred_check
      _
    $region27: #{_dmn_forward_impl.1} parent=1 // pred_check_branch
      %86 = sbr.rel (0) target = $region29
    $region28: #{_dmn_forward_impl.1} parent=1 // pred_region
      %88 = vsyncadd [#allocation12], 0
      %s89 = sshll.u32 %s6, 4
      %s90 = int_to_ptr.hbm [resolvable:$true] %s89
      %s91 = sshll.u32 [#allocation11], 4
      %s92 = int_to_ptr.vmem [resolvable:$true] %s91
      %97 = dma.hbm_to_vmem [thread:$0]  %s90, 1024, %s92, [#allocation12], 64, 64, 4
    $region29: #{_dmn_forward_impl.1} parent=1 // pred_fallthru
      _
    // Predicated region
    $region30: #{_dmn_forward_impl.1} parent=1 // pred_check
      _
    $region31: #{_dmn_forward_impl.1} parent=1 // pred_check_branch
      %99 = sbr.rel (0) target = $region33
    $region32: #{_dmn_forward_impl.1} parent=1 // pred_region
      _
    $region33: #{_dmn_forward_impl.1} parent=1 // pred_fallthru
      _
    // Predicated region
    $region34: #{_dmn_forward_impl.1} parent=1 // pred_check
      _
    $region35: #{_dmn_forward_impl.1} parent=1 // pred_check_branch
      %101 = sbr.rel (0) target = $region37
    $region36: #{_dmn_forward_impl.1} parent=1 // pred_region
      %103 = dma.done [#allocation3], 5120
    $region37: #{_dmn_forward_impl.1} parent=1 // pred_fallthru
      _
    // Predicated region
    $region38: #{_dmn_forward_impl.1} parent=1 // pred_check
      _
    $region39: #{_dmn_forward_impl.1} parent=1 // pred_check_branch
      %105 = sbr.rel (0) target = $region41
    $region40: #{_dmn_forward_impl.1} parent=1 // pred_region
      %107 = dma.done [#allocation6], 2048
    $region41: #{_dmn_forward_impl.1} parent=1 // pred_fallthru
      _
    // Predicated region
    $region42: #{_dmn_forward_impl.1} parent=1 // pred_check
      _
    $region43: #{_dmn_forward_impl.1} parent=1 // pred_check_branch
      %109 = sbr.rel (0) target = $region45
    $region44: #{_dmn_forward_impl.1} parent=1 // pred_region
      %111 = dma.done [#allocation6], 1024
    $region45: #{_dmn_forward_impl.1} parent=1 // pred_fallthru
      _
    // Predicated region
    $region46: #{_dmn_forward_impl.1} parent=1 // pred_check
      _
    $region47: #{_dmn_forward_impl.1} parent=1 // pred_check_branch
      %113 = sbr.rel (0) target = $region49
    $region48: #{_dmn_forward_impl.1} parent=1 // pred_region
      %115 = dma.done [#allocation9], 1024
    $region49: #{_dmn_forward_impl.1} parent=1 // pred_fallthru
      _
    // Predicated region
    $region50: #{_dmn_forward_impl.1} parent=1 // pred_check
      _
    $region51: #{_dmn_forward_impl.1} parent=1 // pred_check_branch
      %117 = sbr.rel (0) target = $region53
    $region52: #{_dmn_forward_impl.1} parent=1 // pred_region
      %119 = dma.done [#allocation9], 1024
    $region53: #{_dmn_forward_impl.1} parent=1 // pred_fallthru
      _
    // Predicated region
    $region54: #{_dmn_forward_impl.1} parent=1 // pred_check
      _
    $region55: #{_dmn_forward_impl.1} parent=1 // pred_check_branch
      %121 = sbr.rel (0) target = $region57
    $region56: #{_dmn_forward_impl.1} parent=1 // pred_region
      %123 = dma.done [#allocation12], 1024
    $region57: #{_dmn_forward_impl.1} parent=1 // pred_fallthru
      _
    %v124 = vld [vmem:[%s0] sm:$0xff]
    %v125 = vld [vmem:[%s0 + $0x8] sm:$0xff]
    %v126 = vpack.c.bf16 %v125, %v124
    %v127 = vld [vmem:[#allocation2] sm:$0xff]
    %v128 = vld [vmem:[#allocation2 + $0x8] sm:$0xff]
    %v129 = vld [vmem:[#allocation2 + $0x10] sm:$0xf]
    %v130 = vld [vmem:[#allocation2 + $0x14] sm:$0xff]
    %v131 = vld [vmem:[#allocation2 + $0x1c] sm:$0xff]
    %v132 = vld [vmem:[#allocation2 + $0x24] sm:$0xf]
    %v133 = vld [vmem:[#allocation2 + $0x28] sm:$0xff]
    %v134 = vld [vmem:[#allocation2 + $0x30] sm:$0xff]
    %v135 = vld [vmem:[#allocation2 + $0x38] sm:$0xf]
    %v136 = vld [vmem:[#allocation2 + $0x3c] sm:$0xff]
    %v137 = vld [vmem:[#allocation2 + $0x44] sm:$0xff]
    %v138 = vld [vmem:[#allocation2 + $0x4c] sm:$0xf]
    %v139 = vld [vmem:[#allocation2 + $0x50] sm:$0xff]
    %v140 = vld [vmem:[#allocation2 + $0x58] sm:$0xff]
    %v141 = vld [vmem:[#allocation2 + $0x60] sm:$0xf]
    %v142 = vld [vmem:[#allocation2 + $0x64] sm:$0xff]
    %v143 = vld [vmem:[#allocation2 + $0x6c] sm:$0xff]
    %v144 = vld [vmem:[#allocation2 + $0x74] sm:$0xf]
    %v145 = vld [vmem:[#allocation2 + $0x78] sm:$0xff]
    %v146 = vld [vmem:[#allocation2 + $0x80] sm:$0xff]
    %v147 = vld [vmem:[#allocation2 + $0x88] sm:$0xf]
    %v148 = vld [vmem:[#allocation2 + $0x8c] sm:$0xff]
    %v149 = vld [vmem:[#allocation2 + $0x94] sm:$0xff]
    %v150 = vld [vmem:[#allocation2 + $0x9c] sm:$0xf]
    %v151 = vld [vmem:[#allocation2 + $0xa0] sm:$0xff]
    %v152 = vld [vmem:[#allocation2 + $0xa8] sm:$0xff]
    %v153 = vld [vmem:[#allocation2 + $0xb0] sm:$0xf]
    %v154 = vld [vmem:[#allocation2 + $0xb4] sm:$0xff]
    %v155 = vld [vmem:[#allocation2 + $0xbc] sm:$0xff]
    %v156 = vld [vmem:[#allocation2 + $0xc4] sm:$0xf]
    %v157 = vld [vmem:[#allocation2 + $0xc8] sm:$0xff]
    %v158 = vld [vmem:[#allocation2 + $0xd0] sm:$0xff]
    %v159 = vld [vmem:[#allocation2 + $0xd8] sm:$0xf]
    %v160 = vld [vmem:[#allocation2 + $0xdc] sm:$0xff]
    %v161 = vld [vmem:[#allocation2 + $0xe4] sm:$0xff]
    %v162 = vld [vmem:[#allocation2 + $0xec] sm:$0xf]
    %v163 = vld [vmem:[#allocation2 + $0xf0] sm:$0xff]
    %v164 = vld [vmem:[#allocation2 + $0xf8] sm:$0xff]
    %v165 = vld [vmem:[#allocation2 + $0x100] sm:$0xf]
    %v166 = vld [vmem:[#allocation2 + $0x104] sm:$0xff]
    %v167 = vld [vmem:[#allocation2 + $0x10c] sm:$0xff]
    %v168 = vld [vmem:[#allocation2 + $0x114] sm:$0xf]
    %v169 = vld [vmem:[#allocation2 + $0x118] sm:$0xff]
    %v170 = vld [vmem:[#allocation2 + $0x120] sm:$0xff]
    %v171 = vld [vmem:[#allocation2 + $0x128] sm:$0xf]
    %v172 = vld [vmem:[#allocation2 + $0x12c] sm:$0xff]
    %v173 = vld [vmem:[#allocation2 + $0x134] sm:$0xff]
    %v174 = vld [vmem:[#allocation2 + $0x13c] sm:$0xf]
    %v175 = vld [vmem:[%s7] sm:$0x1f]
    %v177 = vperm.slane %v175, 0
    %v178 = vperm.slane %v175, 1
    %v179 = vperm.slane %v175, 2
    %v180 = vperm.slane %v175, 3
    %v181 = vperm.slane %v175, 4
    %v235 = vunpack.c.l.b16 %v127
    %v236 = vunpack.c.h.b16 %v127
    %v237 = vunpack.c.l.b16 %v128
    %v238 = vunpack.c.h.b16 %v128
    %v239 = vunpack.c.l.b16 %v129
    %v240 = vunpack.c.l.b16 %v130
    %v241 = vunpack.c.h.b16 %v130
    %v242 = vunpack.c.l.b16 %v131
    %v243 = vunpack.c.h.b16 %v131
    %v244 = vunpack.c.l.b16 %v132
    %v245 = vunpack.c.l.b16 %v133
    %v246 = vunpack.c.h.b16 %v133
    %v247 = vunpack.c.l.b16 %v134
    %v248 = vunpack.c.h.b16 %v134
    %v249 = vunpack.c.l.b16 %v135
    %v250 = vunpack.c.l.b16 %v136
    %v251 = vunpack.c.h.b16 %v136
    %v252 = vunpack.c.l.b16 %v137
    %v253 = vunpack.c.h.b16 %v137
    %v254 = vunpack.c.l.b16 %v138
    %v255 = vunpack.c.l.b16 %v139
    %v256 = vunpack.c.h.b16 %v139
    %v257 = vunpack.c.l.b16 %v140
    %v258 = vunpack.c.h.b16 %v140
    %v259 = vunpack.c.l.b16 %v141
    %v260 = vunpack.c.l.b16 %v142
    %v261 = vunpack.c.h.b16 %v142
    %v262 = vunpack.c.l.b16 %v143
    %v263 = vunpack.c.h.b16 %v143
    %v264 = vunpack.c.l.b16 %v144
    %v265 = vunpack.c.l.b16 %v145
    %v266 = vunpack.c.h.b16 %v145
    %v267 = vunpack.c.l.b16 %v146
    %v268 = vunpack.c.h.b16 %v146
    %v269 = vunpack.c.l.b16 %v147
    %v270 = vunpack.c.l.b16 %v148
    %v271 = vunpack.c.h.b16 %v148
    %v272 = vunpack.c.l.b16 %v149
    %v273 = vunpack.c.h.b16 %v149
    %v274 = vunpack.c.l.b16 %v150
    %v275 = vunpack.c.l.b16 %v151
    %v276 = vunpack.c.h.b16 %v151
    %v277 = vunpack.c.l.b16 %v152
    %v278 = vunpack.c.h.b16 %v152
    %v279 = vunpack.c.l.b16 %v153
    %v280 = vunpack.c.l.b16 %v154
    %v281 = vunpack.c.h.b16 %v154
    %v282 = vunpack.c.l.b16 %v155
    %v283 = vunpack.c.h.b16 %v155
    %v284 = vunpack.c.l.b16 %v156
    %v285 = vunpack.c.l.b16 %v157
    %v286 = vunpack.c.h.b16 %v157
    %v287 = vunpack.c.l.b16 %v158
    %v288 = vunpack.c.h.b16 %v158
    %v289 = vunpack.c.l.b16 %v159
    %v290 = vunpack.c.l.b16 %v160
    %v291 = vunpack.c.h.b16 %v160
    %v292 = vunpack.c.l.b16 %v161
    %v293 = vunpack.c.h.b16 %v161
    %v294 = vunpack.c.l.b16 %v162
    %v295 = vunpack.c.l.b16 %v163
    %v296 = vunpack.c.h.b16 %v163
    %v297 = vunpack.c.l.b16 %v164
    %v298 = vunpack.c.h.b16 %v164
    %v299 = vunpack.c.l.b16 %v165
    %v300 = vunpack.c.l.b16 %v166
    %v301 = vunpack.c.h.b16 %v166
    %v302 = vunpack.c.l.b16 %v167
    %v303 = vunpack.c.h.b16 %v167
    %v304 = vunpack.c.l.b16 %v168
    %v305 = vunpack.c.l.b16 %v169
    %v306 = vunpack.c.h.b16 %v169
    %v307 = vunpack.c.l.b16 %v170
    %v308 = vunpack.c.h.b16 %v170
    %v309 = vunpack.c.l.b16 %v171
    %v310 = vunpack.c.l.b16 %v172
    %v311 = vunpack.c.h.b16 %v172
    %v312 = vunpack.c.l.b16 %v173
    %v313 = vunpack.c.h.b16 %v173
    %v314 = vunpack.c.l.b16 %v174
    %v315 = vpack.c.b16 %v240, %v235
    %v316 = vpack.c.b16 %v241, %v236
    %v317 = vpack.c.b16 %v242, %v237
    %v318 = vpack.c.b16 %v243, %v238
    %v319 = vpack.c.b16 %v244, %v239
    %v320 = vpack.c.b16 %v250, %v245
    %v321 = vpack.c.b16 %v251, %v246
    %v322 = vpack.c.b16 %v252, %v247
    %v323 = vpack.c.b16 %v253, %v248
    %v324 = vpack.c.b16 %v254, %v249
    %v325 = vpack.c.b16 %v260, %v255
    %v326 = vpack.c.b16 %v261, %v256
    %v327 = vpack.c.b16 %v262, %v257
    %v328 = vpack.c.b16 %v263, %v258
    %v329 = vpack.c.b16 %v264, %v259
    %v330 = vpack.c.b16 %v270, %v265
    %v331 = vpack.c.b16 %v271, %v266
    %v332 = vpack.c.b16 %v272, %v267
    %v333 = vpack.c.b16 %v273, %v268
    %v334 = vpack.c.b16 %v274, %v269
    %v335 = vpack.c.b16 %v280, %v275
    %v336 = vpack.c.b16 %v281, %v276
    %v337 = vpack.c.b16 %v282, %v277
    %v338 = vpack.c.b16 %v283, %v278
    %v339 = vpack.c.b16 %v284, %v279
    %v340 = vpack.c.b16 %v290, %v285
    %v341 = vpack.c.b16 %v291, %v286
    %v342 = vpack.c.b16 %v292, %v287
    %v343 = vpack.c.b16 %v293, %v288
    %v344 = vpack.c.b16 %v294, %v289
    %v345 = vpack.c.b16 %v300, %v295
    %v346 = vpack.c.b16 %v301, %v296
    %v347 = vpack.c.b16 %v302, %v297
    %v348 = vpack.c.b16 %v303, %v298
    %v349 = vpack.c.b16 %v304, %v299
    %v350 = vpack.c.b16 %v310, %v305
    %v351 = vpack.c.b16 %v311, %v306
    %v352 = vpack.c.b16 %v312, %v307
    %v353 = vpack.c.b16 %v313, %v308
    %v354 = vpack.c.b16 %v314, %v309
    %395 = vmatpush.bf16.msra.mxu0 %v350
    %396 = vmatpush.bf16.msra.mxu0 %v345
    %397 = vmatpush.bf16.msra.mxu0 %v340
    %398 = vmatpush.bf16.msra.mxu0 %v335
    %399 = vmatpush.bf16.msra.mxu0 %v330
    %400 = vmatpush.bf16.msra.mxu0 %v325
    %401 = vmatpush.bf16.msra.mxu0 %v320
    %402 = vmatpush.bf16.msra.mxu0 %v315
    %403 = vmatmul.bf16.gmra.mxu0 %v126
    %v404 = vpop.f32.mrf.mxu0
    %v405 = vadd.f32 %v177, %v404
    %v406 = vpop.f32.mrf.mxu0
    %v407 = vadd.f32 %v177, %v406
    %408 = vdwg.mxu0
    %409 = vmatpush.bf16.msra.mxu0 %v351
    %410 = vmatpush.bf16.msra.mxu0 %v346
    %411 = vmatpush.bf16.msra.mxu0 %v341
    %412 = vmatpush.bf16.msra.mxu0 %v336
    %413 = vmatpush.bf16.msra.mxu0 %v331
    %414 = vmatpush.bf16.msra.mxu0 %v326
    %415 = vmatpush.bf16.msra.mxu0 %v321
    %416 = vmatpush.bf16.msra.mxu0 %v316
    %417 = vmatmul.bf16.gmra.mxu0 %v126
    %v418 = vpop.f32.mrf.mxu0
    %v419 = vadd.f32 %v178, %v418
    %v420 = vpop.f32.mrf.mxu0
    %v421 = vadd.f32 %v178, %v420
    %422 = vdwg.mxu0
    %423 = vmatpush.bf16.msra.mxu0 %v352
    %424 = vmatpush.bf16.msra.mxu0 %v347
    %425 = vmatpush.bf16.msra.mxu0 %v342
    %426 = vmatpush.bf16.msra.mxu0 %v337
    %427 = vmatpush.bf16.msra.mxu0 %v332
    %428 = vmatpush.bf16.msra.mxu0 %v327
    %429 = vmatpush.bf16.msra.mxu0 %v322
    %430 = vmatpush.bf16.msra.mxu0 %v317
    %431 = vmatmul.bf16.gmra.mxu0 %v126
    %v432 = vpop.f32.mrf.mxu0
    %v433 = vadd.f32 %v179, %v432
    %v434 = vpop.f32.mrf.mxu0
    %v435 = vadd.f32 %v179, %v434
    %436 = vdwg.mxu0
    %437 = vmatpush.bf16.msra.mxu0 %v353
    %438 = vmatpush.bf16.msra.mxu0 %v348
    %439 = vmatpush.bf16.msra.mxu0 %v343
    %440 = vmatpush.bf16.msra.mxu0 %v338
    %441 = vmatpush.bf16.msra.mxu0 %v333
    %442 = vmatpush.bf16.msra.mxu0 %v328
    %443 = vmatpush.bf16.msra.mxu0 %v323
    %444 = vmatpush.bf16.msra.mxu0 %v318
    %445 = vmatmul.bf16.gmra.mxu0 %v126
    %v446 = vpop.f32.mrf.mxu0
    %v447 = vadd.f32 %v180, %v446
    %v448 = vpop.f32.mrf.mxu0
    %v449 = vadd.f32 %v180, %v448
    %450 = vdwg.mxu0
    %451 = vmatpush.bf16.msra.mxu0 %v354
    %452 = vmatpush.bf16.msra.mxu0 %v349
    %453 = vmatpush.bf16.msra.mxu0 %v344
    %454 = vmatpush.bf16.msra.mxu0 %v339
    %455 = vmatpush.bf16.msra.mxu0 %v334
    %456 = vmatpush.bf16.msra.mxu0 %v329
    %457 = vmatpush.bf16.msra.mxu0 %v324
    %458 = vmatpush.bf16.msra.mxu0 %v319
    %459 = vmatmul.bf16.gmra.mxu0 %v126
    %v460 = vpop.f32.mrf.mxu0
    %v461 = vadd.f32 %v181, %v460
    %v462 = vpop.f32.mrf.mxu0
    %v463 = vadd.f32 %v181, %v462
    %464 = vdwg.mxu0
    %v465 = vld [vmem:[%s7 + $0x7] sm:$0x3]
    %v466 = vld [vmem:[%s7 + $0x9] sm:$0x3]
    %v467 = vadd.f32 %v419, %v433
    %468 = vadd.xlane.f32.xlu0 %v467
    %v469 = vpop.xlane.xlu0 %468
    %v470 = vadd.f32 %v421, %v435
    %471 = vadd.xlane.f32.xlu0 %v470
    %v472 = vpop.xlane.xlu0 %471
    %v473 = vmul.f32 %v419, %v419
    %v474 = vmul.f32 %v433, %v433
    %v475 = vmul.f32 %v421, %v421
    %v476 = vmul.f32 %v435, %v435
    %v477 = vadd.f32 %v473, %v474
    %478 = vadd.xlane.f32.xlu0 %v477
    %v479 = vpop.xlane.xlu0 %478
    %v480 = vadd.f32 %v475, %v476
    %481 = vadd.xlane.f32.xlu0 %v480
    %v482 = vpop.xlane.xlu0 %481
    %v483 = vmul.f32 %v469, 0.00390625
    %v484 = vmul.f32 %v472, 0.00390625
    %v485 = vmul.f32 %v479, 0.00390625
    %v486 = vmul.f32 %v482, 0.00390625
    %v487 = vmul.f32 %v483, %v483
    %v488 = vmul.f32 %v484, %v484
    %v489 = vsub.f32 %v485, %v487
    %v490 = vsub.f32 %v486, %v488
    %v491 = vmax.f32 %v489, 0.0
    %v492 = vmax.f32 %v490, 0.0
    %v493 = vsub.f32 %v419, %v483
    %v494 = vsub.f32 %v433, %v483
    %v495 = vsub.f32 %v421, %v484
    %v496 = vsub.f32 %v435, %v484
    %v497 = vadd.f32 %v491, 1e-05
    %v498 = vadd.f32 %v492, 1e-05
    %v499 = vrsqrt.pop %v497
    %v500 = vmul.f32 %v499, %v497
    %v501 = vmul.f32 %v500, %v499
    %v502 = vmul.f32 0.5, %v501
    %v503 = vsub.f32 1.5, %v502
    %v504 = vmul.f32 %v499, %v503
    %vm505 = vweird.f32 %v497
    %vm506 = vweird.f32 %v499
    %vm507 = vmor %vm505, %vm506
    %v508 = vsel %vm507, %v499, %v504
    %v509 = vrsqrt.pop %v498
    %v510 = vmul.f32 %v509, %v498
    %v511 = vmul.f32 %v510, %v509
    %v512 = vmul.f32 0.5, %v511
    %v513 = vsub.f32 1.5, %v512
    %v514 = vmul.f32 %v509, %v513
    %vm515 = vweird.f32 %v498
    %vm516 = vweird.f32 %v509
    %vm517 = vmor %vm515, %vm516
    %v518 = vsel %vm517, %v509, %v514
    %v519 = vmul.f32 %v493, %v508
    %v520 = vmul.f32 %v494, %v508
    %v521 = vmul.f32 %v495, %v518
    %v522 = vmul.f32 %v496, %v518
    %v524 = vperm.slane %v465, 0
    %v525 = vperm.slane %v465, 1
    %v528 = vmul.f32 %v519, %v524
    %v529 = vmul.f32 %v520, %v525
    %v530 = vmul.f32 %v521, %v524
    %v531 = vmul.f32 %v522, %v525
    %v533 = vperm.slane %v466, 0
    %v534 = vperm.slane %v466, 1
    %v537 = vadd.f32 %v528, %v533
    %v538 = vadd.f32 %v529, %v534
    %v539 = vadd.f32 %v530, %v533
    %v540 = vadd.f32 %v531, %v534
    %v541 = vmul.f32 %v537, 0.5
    %v542 = vmul.f32 %v538, 0.5
    %v543 = vmul.f32 %v539, 0.5
    %v544 = vmul.f32 %v540, 0.5
    %v545 = vtanh.pop %v541
    %v546 = vtanh.pop %v542
    %v547 = vtanh.pop %v543
    %v548 = vtanh.pop %v544
    %v549 = vadd.f32 %v545, 1.0
    %v550 = vadd.f32 %v546, 1.0
    %v551 = vadd.f32 %v547, 1.0
    %v552 = vadd.f32 %v548, 1.0
    %v553 = vmul.f32 %v549, 0.5
    %v554 = vmul.f32 %v550, 0.5
    %v555 = vmul.f32 %v551, 0.5
    %v556 = vmul.f32 %v552, 0.5
    %v557 = vmul.f32 %v537, %v553
    %v558 = vmul.f32 %v538, %v554
    %v559 = vmul.f32 %v539, %v555
    %v560 = vmul.f32 %v540, %v556
    %v561 = vpack.c.bf16 %v559, %v557
    %v562 = vpack.c.bf16 %v560, %v558
    %v563 = vld [vmem:[#allocation5] sm:$0xf]
    %v564 = vld [vmem:[#allocation5 + $0x4] sm:$0xf]
    %v565 = vld [vmem:[#allocation5 + $0x8] sm:$0xf]
    %v566 = vld [vmem:[#allocation5 + $0xc] sm:$0xf]
    %v567 = vld [vmem:[#allocation5 + $0x10] sm:$0xf]
    %v568 = vld [vmem:[#allocation5 + $0x14] sm:$0xf]
    %v569 = vld [vmem:[#allocation5 + $0x18] sm:$0xf]
    %v570 = vld [vmem:[#allocation5 + $0x1c] sm:$0xf]
    %v571 = vld [vmem:[#allocation5 + $0x20] sm:$0xf]
    %v572 = vld [vmem:[#allocation5 + $0x24] sm:$0xf]
    %v573 = vld [vmem:[#allocation5 + $0x28] sm:$0xf]
    %v574 = vld [vmem:[#allocation5 + $0x2c] sm:$0xf]
    %v575 = vld [vmem:[#allocation5 + $0x30] sm:$0xf]
    %v576 = vld [vmem:[#allocation5 + $0x34] sm:$0xf]
    %v577 = vld [vmem:[#allocation5 + $0x38] sm:$0xf]
    %v578 = vld [vmem:[#allocation5 + $0x3c] sm:$0xf]
    %v579 = vld [vmem:[#allocation5 + $0x40] sm:$0xf]
    %v580 = vld [vmem:[#allocation5 + $0x44] sm:$0xf]
    %v581 = vld [vmem:[#allocation5 + $0x48] sm:$0xf]
    %v582 = vld [vmem:[#allocation5 + $0x4c] sm:$0xf]
    %v583 = vld [vmem:[#allocation5 + $0x50] sm:$0xf]
    %v584 = vld [vmem:[#allocation5 + $0x54] sm:$0xf]
    %v585 = vld [vmem:[#allocation5 + $0x58] sm:$0xf]
    %v586 = vld [vmem:[#allocation5 + $0x5c] sm:$0xf]
    %v587 = vld [vmem:[#allocation5 + $0x60] sm:$0xf]
    %v588 = vld [vmem:[#allocation5 + $0x64] sm:$0xf]
    %v589 = vld [vmem:[#allocation5 + $0x68] sm:$0xf]
    %v590 = vld [vmem:[#allocation5 + $0x6c] sm:$0xf]
    %v591 = vld [vmem:[#allocation5 + $0x70] sm:$0xf]
    %v592 = vld [vmem:[#allocation5 + $0x74] sm:$0xf]
    %v593 = vld [vmem:[#allocation5 + $0x78] sm:$0xf]
    %v594 = vld [vmem:[#allocation5 + $0x7c] sm:$0xf]
    %v595 = vld [vmem:[%s7 + $0xf] sm:$0x1]
    %v597 = vperm.slane %v595, 0
    %v631 = vunpack.c.l.b16 %v563
    %v632 = vunpack.c.l.b16 %v564
    %v633 = vunpack.c.l.b16 %v565
    %v634 = vunpack.c.l.b16 %v566
    %v635 = vunpack.c.l.b16 %v567
    %v636 = vunpack.c.l.b16 %v568
    %v637 = vunpack.c.l.b16 %v569
    %v638 = vunpack.c.l.b16 %v570
    %v639 = vunpack.c.l.b16 %v571
    %v640 = vunpack.c.l.b16 %v572
    %v641 = vunpack.c.l.b16 %v573
    %v642 = vunpack.c.l.b16 %v574
    %v643 = vunpack.c.l.b16 %v575
    %v644 = vunpack.c.l.b16 %v576
    %v645 = vunpack.c.l.b16 %v577
    %v646 = vunpack.c.l.b16 %v578
    %v647 = vunpack.c.l.b16 %v579
    %v648 = vunpack.c.l.b16 %v580
    %v649 = vunpack.c.l.b16 %v581
    %v650 = vunpack.c.l.b16 %v582
    %v651 = vunpack.c.l.b16 %v583
    %v652 = vunpack.c.l.b16 %v584
    %v653 = vunpack.c.l.b16 %v585
    %v654 = vunpack.c.l.b16 %v586
    %v655 = vunpack.c.l.b16 %v587
    %v656 = vunpack.c.l.b16 %v588
    %v657 = vunpack.c.l.b16 %v589
    %v658 = vunpack.c.l.b16 %v590
    %v659 = vunpack.c.l.b16 %v591
    %v660 = vunpack.c.l.b16 %v592
    %v661 = vunpack.c.l.b16 %v593
    %v662 = vunpack.c.l.b16 %v594
    %v663 = vpack.c.b16 %v632, %v631
    %v664 = vpack.c.b16 %v634, %v633
    %v665 = vpack.c.b16 %v636, %v635
    %v666 = vpack.c.b16 %v638, %v637
    %v667 = vpack.c.b16 %v640, %v639
    %v668 = vpack.c.b16 %v642, %v641
    %v669 = vpack.c.b16 %v644, %v643
    %v670 = vpack.c.b16 %v646, %v645
    %v671 = vpack.c.b16 %v648, %v647
    %v672 = vpack.c.b16 %v650, %v649
    %v673 = vpack.c.b16 %v652, %v651
    %v674 = vpack.c.b16 %v654, %v653
    %v675 = vpack.c.b16 %v656, %v655
    %v676 = vpack.c.b16 %v658, %v657
    %v677 = vpack.c.b16 %v660, %v659
    %v678 = vpack.c.b16 %v662, %v661
    %695 = vmatpush.bf16.msra.mxu0 %v670
    %696 = vmatpush.bf16.msra.mxu0 %v669
    %697 = vmatpush.bf16.msra.mxu0 %v668
    %698 = vmatpush.bf16.msra.mxu0 %v667
    %699 = vmatpush.bf16.msra.mxu0 %v666
    %700 = vmatpush.bf16.msra.mxu0 %v665
    %701 = vmatpush.bf16.msra.mxu0 %v664
    %702 = vmatpush.bf16.msra.mxu0 %v663
    %703 = vmatmul.bf16.gmra.mxu0 %v561
    %v704 = vpop.f32.mrf.mxu0
    %v705 = vadd.f32 %v597, %v704
    %v706 = vpop.f32.mrf.mxu0
    %v707 = vadd.f32 %v597, %v706
    %708 = vdwg.mxu0
    %709 = vmatpush.bf16.msra.mxu0 %v678
    %710 = vmatpush.bf16.msra.mxu0 %v677
    %711 = vmatpush.bf16.msra.mxu0 %v676
    %712 = vmatpush.bf16.msra.mxu0 %v675
    %713 = vmatpush.bf16.msra.mxu0 %v674
    %714 = vmatpush.bf16.msra.mxu0 %v673
    %715 = vmatpush.bf16.msra.mxu0 %v672
    %716 = vmatpush.bf16.msra.mxu0 %v671
    %717 = vmatmul.bf16.gmra.mxu0 %v562
    %v718 = vpop.f32.mrf.mxu0
    %v719 = vadd.f32 %v705, %v718
    %v720 = vpop.f32.mrf.mxu0
    %v721 = vadd.f32 %v707, %v720
    %722 = vdwg.mxu0
    %v723 = vpack.c.bf16 %v721, %v719
    %v724 = vld [vmem:[#allocation7] sm:$0xf]
    %v725 = vld [vmem:[#allocation7 + $0x4] sm:$0xf]
    %v726 = vld [vmem:[#allocation7 + $0x8] sm:$0xf]
    %v727 = vld [vmem:[#allocation7 + $0xc] sm:$0xf]
    %v728 = vld [vmem:[#allocation7 + $0x10] sm:$0xf]
    %v729 = vld [vmem:[#allocation7 + $0x14] sm:$0xf]
    %v730 = vld [vmem:[#allocation7 + $0x18] sm:$0xf]
    %v731 = vld [vmem:[#allocation7 + $0x1c] sm:$0xf]
    %v732 = vld [vmem:[#allocation7 + $0x20] sm:$0xf]
    %v733 = vld [vmem:[#allocation7 + $0x24] sm:$0xf]
    %v734 = vld [vmem:[#allocation7 + $0x28] sm:$0xf]
    %v735 = vld [vmem:[#allocation7 + $0x2c] sm:$0xf]
    %v736 = vld [vmem:[#allocation7 + $0x30] sm:$0xf]
    %v737 = vld [vmem:[#allocation7 + $0x34] sm:$0xf]
    %v738 = vld [vmem:[#allocation7 + $0x38] sm:$0xf]
    %v739 = vld [vmem:[#allocation7 + $0x3c] sm:$0xf]
    %v756 = vunpack.c.l.b16 %v724
    %v757 = vunpack.c.l.b16 %v725
    %v758 = vunpack.c.l.b16 %v726
    %v759 = vunpack.c.l.b16 %v727
    %v760 = vunpack.c.l.b16 %v728
    %v761 = vunpack.c.l.b16 %v729
    %v762 = vunpack.c.l.b16 %v730
    %v763 = vunpack.c.l.b16 %v731
    %v764 = vunpack.c.l.b16 %v732
    %v765 = vunpack.c.l.b16 %v733
    %v766 = vunpack.c.l.b16 %v734
    %v767 = vunpack.c.l.b16 %v735
    %v768 = vunpack.c.l.b16 %v736
    %v769 = vunpack.c.l.b16 %v737
    %v770 = vunpack.c.l.b16 %v738
    %v771 = vunpack.c.l.b16 %v739
    %v772 = vpack.c.b16 %v757, %v756
    %v773 = vpack.c.b16 %v759, %v758
    %v774 = vpack.c.b16 %v761, %v760
    %v775 = vpack.c.b16 %v763, %v762
    %v776 = vpack.c.b16 %v765, %v764
    %v777 = vpack.c.b16 %v767, %v766
    %v778 = vpack.c.b16 %v769, %v768
    %v779 = vpack.c.b16 %v771, %v770
    %788 = vmatpush.bf16.msra.mxu0 %v779
    %789 = vmatpush.bf16.msra.mxu0 %v778
    %790 = vmatpush.bf16.msra.mxu0 %v777
    %791 = vmatpush.bf16.msra.mxu0 %v776
    %792 = vmatpush.bf16.msra.mxu0 %v775
    %793 = vmatpush.bf16.msra.mxu0 %v774
    %794 = vmatpush.bf16.msra.mxu0 %v773
    %795 = vmatpush.bf16.msra.mxu0 %v772
    %796 = vmatmul.bf16.gmra.mxu0 %v723
    %v797 = vpop.f32.mrf.mxu0
    %v798 = vadd.f32 0.0, %v797
    %v799 = vpop.f32.mrf.mxu0
    %v800 = vadd.f32 0.0, %v799
    %801 = vdwg.mxu0
    %v802 = vadd.f32 %v461, %v798
    %v803 = vadd.f32 %v463, %v800
    %v804 = vld [vmem:[%s7 + $0x5] sm:$0x1]
    %v805 = vld [vmem:[%s7 + $0x6] sm:$0x1]
    %806 = vadd.xlane.f32.xlu0 %v405
    %v807 = vpop.xlane.xlu0 %806
    %808 = vadd.xlane.f32.xlu0 %v407
    %v809 = vpop.xlane.xlu0 %808
    %v810 = vmul.f32 %v405, %v405
    %v811 = vmul.f32 %v407, %v407
    %812 = vadd.xlane.f32.xlu0 %v810
    %v813 = vpop.xlane.xlu0 %812
    %814 = vadd.xlane.f32.xlu0 %v811
    %v815 = vpop.xlane.xlu0 %814
    %v816 = vmul.f32 %v807, 0.0078125
    %v817 = vmul.f32 %v809, 0.0078125
    %v818 = vmul.f32 %v813, 0.0078125
    %v819 = vmul.f32 %v815, 0.0078125
    %v820 = vmul.f32 %v816, %v816
    %v821 = vmul.f32 %v817, %v817
    %v822 = vsub.f32 %v818, %v820
    %v823 = vsub.f32 %v819, %v821
    %v824 = vmax.f32 %v822, 0.0
    %v825 = vmax.f32 %v823, 0.0
    %v826 = vsub.f32 %v405, %v816
    %v827 = vsub.f32 %v407, %v817
    %v828 = vadd.f32 %v824, 1e-05
    %v829 = vadd.f32 %v825, 1e-05
    %v830 = vrsqrt.pop %v828
    %v831 = vmul.f32 %v830, %v828
    %v832 = vmul.f32 %v831, %v830
    %v833 = vmul.f32 0.5, %v832
    %v834 = vsub.f32 1.5, %v833
    %v835 = vmul.f32 %v830, %v834
    %vm836 = vweird.f32 %v828
    %vm837 = vweird.f32 %v830
    %vm838 = vmor %vm836, %vm837
    %v839 = vsel %vm838, %v830, %v835
    %v840 = vrsqrt.pop %v829
    %v841 = vmul.f32 %v840, %v829
    %v842 = vmul.f32 %v841, %v840
    %v843 = vmul.f32 0.5, %v842
    %v844 = vsub.f32 1.5, %v843
    %v845 = vmul.f32 %v840, %v844
    %vm846 = vweird.f32 %v829
    %vm847 = vweird.f32 %v840
    %vm848 = vmor %vm846, %vm847
    %v849 = vsel %vm848, %v840, %v845
    %v850 = vmul.f32 %v826, %v839
    %v851 = vmul.f32 %v827, %v849
    %v853 = vperm.slane %v804, 0
    %v855 = vmul.f32 %v850, %v853
    %v856 = vmul.f32 %v851, %v853
    %v858 = vperm.slane %v805, 0
    %v860 = vadd.f32 %v855, %v858
    %v861 = vadd.f32 %v856, %v858
    %v862 = vmul.f32 %v860, 0.5
    %v863 = vmul.f32 %v861, 0.5
    %v864 = vtanh.pop %v862
    %v865 = vtanh.pop %v863
    %v866 = vadd.f32 %v864, 1.0
    %v867 = vadd.f32 %v865, 1.0
    %v868 = vmul.f32 %v866, 0.5
    %v869 = vmul.f32 %v867, 0.5
    %v870 = vmul.f32 %v860, %v868
    %v871 = vmul.f32 %v861, %v869
    %v872 = vld [vmem:[%s7 + $0xb] sm:$0x1]
    %v873 = vld [vmem:[%s7 + $0xc] sm:$0x1]
    %874 = vadd.xlane.f32.xlu0 %v802
    %v875 = vpop.xlane.xlu0 %874
    %876 = vadd.xlane.f32.xlu0 %v803
    %v877 = vpop.xlane.xlu0 %876
    %v878 = vmul.f32 %v802, %v802
    %v879 = vmul.f32 %v803, %v803
    %880 = vadd.xlane.f32.xlu0 %v878
    %v881 = vpop.xlane.xlu0 %880
    %882 = vadd.xlane.f32.xlu0 %v879
    %v883 = vpop.xlane.xlu0 %882
    %v884 = vmul.f32 %v875, 0.0078125
    %v885 = vmul.f32 %v877, 0.0078125
    %v886 = vmul.f32 %v881, 0.0078125
    %v887 = vmul.f32 %v883, 0.0078125
    %v888 = vmul.f32 %v884, %v884
    %v889 = vmul.f32 %v885, %v885
    %v890 = vsub.f32 %v886, %v888
    %v891 = vsub.f32 %v887, %v889
    %v892 = vmax.f32 %v890, 0.0
    %v893 = vmax.f32 %v891, 0.0
    %v894 = vsub.f32 %v802, %v884
    %v895 = vsub.f32 %v803, %v885
    %v896 = vadd.f32 %v892, 1e-05
    %v897 = vadd.f32 %v893, 1e-05
    %v898 = vrsqrt.pop %v896
    %v899 = vmul.f32 %v898, %v896
    %v900 = vmul.f32 %v899, %v898
    %v901 = vmul.f32 0.5, %v900
    %v902 = vsub.f32 1.5, %v901
    %v903 = vmul.f32 %v898, %v902
    %vm904 = vweird.f32 %v896
    %vm905 = vweird.f32 %v898
    %vm906 = vmor %vm904, %vm905
    %v907 = vsel %vm906, %v898, %v903
    %v908 = vrsqrt.pop %v897
    %v909 = vmul.f32 %v908, %v897
    %v910 = vmul.f32 %v909, %v908
    %v911 = vmul.f32 0.5, %v910
    %v912 = vsub.f32 1.5, %v911
    %v913 = vmul.f32 %v908, %v912
    %vm914 = vweird.f32 %v897
    %vm915 = vweird.f32 %v908
    %vm916 = vmor %vm914, %vm915
    %v917 = vsel %vm916, %v908, %v913
    %v918 = vmul.f32 %v894, %v907
    %v919 = vmul.f32 %v895, %v917
    %v921 = vperm.slane %v872, 0
    %v923 = vmul.f32 %v918, %v921
    %v924 = vmul.f32 %v919, %v921
    %v926 = vperm.slane %v873, 0
    %v928 = vadd.f32 %v923, %v926
    %v929 = vadd.f32 %v924, %v926
    %v930 = vmul.f32 %v928, 0.5
    %v931 = vmul.f32 %v929, 0.5
    %v932 = vtanh.pop %v930
    %v933 = vtanh.pop %v931
    %v934 = vadd.f32 %v932, 1.0
    %v935 = vadd.f32 %v933, 1.0
    %v936 = vmul.f32 %v934, 0.5
    %v937 = vmul.f32 %v935, 0.5
    %v938 = vmul.f32 %v928, %v936
    %v939 = vmul.f32 %v929, %v937
    %v940 = vld [vmem:[%s7 + $0xd] sm:$0x1]
    %v941 = vld [vmem:[%s7 + $0xe] sm:$0x1]
    %942 = vadd.xlane.f32.xlu0 %v447
    %v943 = vpop.xlane.xlu0 %942
    %944 = vadd.xlane.f32.xlu0 %v449
    %v945 = vpop.xlane.xlu0 %944
    %v946 = vmul.f32 %v447, %v447
    %v947 = vmul.f32 %v449, %v449
    %948 = vadd.xlane.f32.xlu0 %v946
    %v949 = vpop.xlane.xlu0 %948
    %950 = vadd.xlane.f32.xlu0 %v947
    %v951 = vpop.xlane.xlu0 %950
    %v952 = vmul.f32 %v943, 0.0078125
    %v953 = vmul.f32 %v945, 0.0078125
    %v954 = vmul.f32 %v949, 0.0078125
    %v955 = vmul.f32 %v951, 0.0078125
    %v956 = vmul.f32 %v952, %v952
    %v957 = vmul.f32 %v953, %v953
    %v958 = vsub.f32 %v954, %v956
    %v959 = vsub.f32 %v955, %v957
    %v960 = vmax.f32 %v958, 0.0
    %v961 = vmax.f32 %v959, 0.0
    %v962 = vsub.f32 %v447, %v952
    %v963 = vsub.f32 %v449, %v953
    %v964 = vadd.f32 %v960, 1e-05
    %v965 = vadd.f32 %v961, 1e-05
    %v966 = vrsqrt.pop %v964
    %v967 = vmul.f32 %v966, %v964
    %v968 = vmul.f32 %v967, %v966
    %v969 = vmul.f32 0.5, %v968
    %v970 = vsub.f32 1.5, %v969
    %v971 = vmul.f32 %v966, %v970
    %vm972 = vweird.f32 %v964
    %vm973 = vweird.f32 %v966
    %vm974 = vmor %vm972, %vm973
    %v975 = vsel %vm974, %v966, %v971
    %v976 = vrsqrt.pop %v965
    %v977 = vmul.f32 %v976, %v965
    %v978 = vmul.f32 %v977, %v976
    %v979 = vmul.f32 0.5, %v978
    %v980 = vsub.f32 1.5, %v979
    %v981 = vmul.f32 %v976, %v980
    %vm982 = vweird.f32 %v965
    %vm983 = vweird.f32 %v976
    %vm984 = vmor %vm982, %vm983
    %v985 = vsel %vm984, %v976, %v981
    %v986 = vmul.f32 %v962, %v975
    %v987 = vmul.f32 %v963, %v985
    %v989 = vperm.slane %v940, 0
    %v991 = vmul.f32 %v986, %v989
    %v992 = vmul.f32 %v987, %v989
    %v994 = vperm.slane %v941, 0
    %v996 = vadd.f32 %v991, %v994
    %v997 = vadd.f32 %v992, %v994
    %v998 = vmul.f32 %v996, 0.5
    %v999 = vmul.f32 %v997, 0.5
    %v1000 = vtanh.pop %v998
    %v1001 = vtanh.pop %v999
    %v1002 = vadd.f32 %v1000, 1.0
    %v1003 = vadd.f32 %v1001, 1.0
    %v1004 = vmul.f32 %v1002, 0.5
    %v1005 = vmul.f32 %v1003, 0.5
    %v1006 = vmul.f32 %v996, %v1004
    %v1007 = vmul.f32 %v997, %v1005
    %v1008 = vpack.c.bf16 %v871, %v870
    %v1009 = vld [vmem:[#allocation8] sm:$0xf]
    %v1010 = vld [vmem:[#allocation8 + $0x4] sm:$0xf]
    %v1011 = vld [vmem:[#allocation8 + $0x8] sm:$0xf]
    %v1012 = vld [vmem:[#allocation8 + $0xc] sm:$0xf]
    %v1013 = vld [vmem:[#allocation8 + $0x10] sm:$0xf]
    %v1014 = vld [vmem:[#allocation8 + $0x14] sm:$0xf]
    %v1015 = vld [vmem:[#allocation8 + $0x18] sm:$0xf]
    %v1016 = vld [vmem:[#allocation8 + $0x1c] sm:$0xf]
    %v1017 = vld [vmem:[#allocation8 + $0x20] sm:$0xf]
    %v1018 = vld [vmem:[#allocation8 + $0x24] sm:$0xf]
    %v1019 = vld [vmem:[#allocation8 + $0x28] sm:$0xf]
    %v1020 = vld [vmem:[#allocation8 + $0x2c] sm:$0xf]
    %v1021 = vld [vmem:[#allocation8 + $0x30] sm:$0xf]
    %v1022 = vld [vmem:[#allocation8 + $0x34] sm:$0xf]
    %v1023 = vld [vmem:[#allocation8 + $0x38] sm:$0xf]
    %v1024 = vld [vmem:[#allocation8 + $0x3c] sm:$0xf]
    %v1025 = vpack.c.bf16 %v939, %v938
    %v1026 = vld [vmem:[#allocation10] sm:$0xf]
    %v1027 = vld [vmem:[#allocation10 + $0x4] sm:$0xf]
    %v1028 = vld [vmem:[#allocation10 + $0x8] sm:$0xf]
    %v1029 = vld [vmem:[#allocation10 + $0xc] sm:$0xf]
    %v1030 = vld [vmem:[#allocation10 + $0x10] sm:$0xf]
    %v1031 = vld [vmem:[#allocation10 + $0x14] sm:$0xf]
    %v1032 = vld [vmem:[#allocation10 + $0x18] sm:$0xf]
    %v1033 = vld [vmem:[#allocation10 + $0x1c] sm:$0xf]
    %v1034 = vld [vmem:[#allocation10 + $0x20] sm:$0xf]
    %v1035 = vld [vmem:[#allocation10 + $0x24] sm:$0xf]
    %v1036 = vld [vmem:[#allocation10 + $0x28] sm:$0xf]
    %v1037 = vld [vmem:[#allocation10 + $0x2c] sm:$0xf]
    %v1038 = vld [vmem:[#allocation10 + $0x30] sm:$0xf]
    %v1039 = vld [vmem:[#allocation10 + $0x34] sm:$0xf]
    %v1040 = vld [vmem:[#allocation10 + $0x38] sm:$0xf]
    %v1041 = vld [vmem:[#allocation10 + $0x3c] sm:$0xf]
    %v1058 = vunpack.c.l.b16 %v1026
    %v1059 = vunpack.c.l.b16 %v1027
    %v1060 = vunpack.c.l.b16 %v1028
    %v1061 = vunpack.c.l.b16 %v1029
    %v1062 = vunpack.c.l.b16 %v1030
    %v1063 = vunpack.c.l.b16 %v1031
    %v1064 = vunpack.c.l.b16 %v1032
    %v1065 = vunpack.c.l.b16 %v1033
    %v1066 = vunpack.c.l.b16 %v1034
    %v1067 = vunpack.c.l.b16 %v1035
    %v1068 = vunpack.c.l.b16 %v1036
    %v1069 = vunpack.c.l.b16 %v1037
    %v1070 = vunpack.c.l.b16 %v1038
    %v1071 = vunpack.c.l.b16 %v1039
    %v1072 = vunpack.c.l.b16 %v1040
    %v1073 = vunpack.c.l.b16 %v1041
    %v1074 = vpack.c.b16 %v1059, %v1058
    %v1075 = vpack.c.b16 %v1061, %v1060
    %v1076 = vpack.c.b16 %v1063, %v1062
    %v1077 = vpack.c.b16 %v1065, %v1064
    %v1078 = vpack.c.b16 %v1067, %v1066
    %v1079 = vpack.c.b16 %v1069, %v1068
    %v1080 = vpack.c.b16 %v1071, %v1070
    %v1081 = vpack.c.b16 %v1073, %v1072
    %1090 = vmatpush.bf16.msra.mxu0 %v1081
    %1091 = vmatpush.bf16.msra.mxu0 %v1080
    %1092 = vmatpush.bf16.msra.mxu0 %v1079
    %1093 = vmatpush.bf16.msra.mxu0 %v1078
    %1094 = vmatpush.bf16.msra.mxu0 %v1077
    %1095 = vmatpush.bf16.msra.mxu0 %v1076
    %1096 = vmatpush.bf16.msra.mxu0 %v1075
    %1097 = vmatpush.bf16.msra.mxu0 %v1074
    %1098 = vmatmul.bf16.gmra.mxu0 %v1025
    %v1099 = vpop.f32.mrf.mxu0
    %v1100 = vadd.f32 0.0, %v1099
    %v1101 = vpop.f32.mrf.mxu0
    %v1102 = vadd.f32 0.0, %v1101
    %1103 = vdwg.mxu0
    %v1120 = vunpack.c.l.b16 %v1009
    %v1121 = vunpack.c.l.b16 %v1010
    %v1122 = vunpack.c.l.b16 %v1011
    %v1123 = vunpack.c.l.b16 %v1012
    %v1124 = vunpack.c.l.b16 %v1013
    %v1125 = vunpack.c.l.b16 %v1014
    %v1126 = vunpack.c.l.b16 %v1015
    %v1127 = vunpack.c.l.b16 %v1016
    %v1128 = vunpack.c.l.b16 %v1017
    %v1129 = vunpack.c.l.b16 %v1018
    %v1130 = vunpack.c.l.b16 %v1019
    %v1131 = vunpack.c.l.b16 %v1020
    %v1132 = vunpack.c.l.b16 %v1021
    %v1133 = vunpack.c.l.b16 %v1022
    %v1134 = vunpack.c.l.b16 %v1023
    %v1135 = vunpack.c.l.b16 %v1024
    %v1136 = vpack.c.b16 %v1121, %v1120
    %v1137 = vpack.c.b16 %v1123, %v1122
    %v1138 = vpack.c.b16 %v1125, %v1124
    %v1139 = vpack.c.b16 %v1127, %v1126
    %v1140 = vpack.c.b16 %v1129, %v1128
    %v1141 = vpack.c.b16 %v1131, %v1130
    %v1142 = vpack.c.b16 %v1133, %v1132
    %v1143 = vpack.c.b16 %v1135, %v1134
    %1152 = vmatpush.bf16.msra.mxu0 %v1143
    %1153 = vmatpush.bf16.msra.mxu0 %v1142
    %1154 = vmatpush.bf16.msra.mxu0 %v1141
    %1155 = vmatpush.bf16.msra.mxu0 %v1140
    %1156 = vmatpush.bf16.msra.mxu0 %v1139
    %1157 = vmatpush.bf16.msra.mxu0 %v1138
    %1158 = vmatpush.bf16.msra.mxu0 %v1137
    %1159 = vmatpush.bf16.msra.mxu0 %v1136
    %1160 = vmatmul.bf16.gmra.mxu0 %v1008
    %v1161 = vpop.f32.mrf.mxu0
    %v1162 = vadd.f32 %v1100, %v1161
    %v1163 = vpop.f32.mrf.mxu0
    %v1164 = vadd.f32 %v1102, %v1163
    %1165 = vdwg.mxu0
    %v1166 = vpack.c.bf16 %v1007, %v1006
    %v1167 = vld [vmem:[#allocation11] sm:$0xf]
    %v1168 = vld [vmem:[#allocation11 + $0x4] sm:$0xf]
    %v1169 = vld [vmem:[#allocation11 + $0x8] sm:$0xf]
    %v1170 = vld [vmem:[#allocation11 + $0xc] sm:$0xf]
    %v1171 = vld [vmem:[#allocation11 + $0x10] sm:$0xf]
    %v1172 = vld [vmem:[#allocation11 + $0x14] sm:$0xf]
    %v1173 = vld [vmem:[#allocation11 + $0x18] sm:$0xf]
    %v1174 = vld [vmem:[#allocation11 + $0x1c] sm:$0xf]
    %v1175 = vld [vmem:[#allocation11 + $0x20] sm:$0xf]
    %v1176 = vld [vmem:[#allocation11 + $0x24] sm:$0xf]
    %v1177 = vld [vmem:[#allocation11 + $0x28] sm:$0xf]
    %v1178 = vld [vmem:[#allocation11 + $0x2c] sm:$0xf]
    %v1179 = vld [vmem:[#allocation11 + $0x30] sm:$0xf]
    %v1180 = vld [vmem:[#allocation11 + $0x34] sm:$0xf]
    %v1181 = vld [vmem:[#allocation11 + $0x38] sm:$0xf]
    %v1182 = vld [vmem:[#allocation11 + $0x3c] sm:$0xf]
    %v1199 = vunpack.c.l.b16 %v1167
    %v1200 = vunpack.c.l.b16 %v1168
    %v1201 = vunpack.c.l.b16 %v1169
    %v1202 = vunpack.c.l.b16 %v1170
    %v1203 = vunpack.c.l.b16 %v1171
    %v1204 = vunpack.c.l.b16 %v1172
    %v1205 = vunpack.c.l.b16 %v1173
    %v1206 = vunpack.c.l.b16 %v1174
    %v1207 = vunpack.c.l.b16 %v1175
    %v1208 = vunpack.c.l.b16 %v1176
    %v1209 = vunpack.c.l.b16 %v1177
    %v1210 = vunpack.c.l.b16 %v1178
    %v1211 = vunpack.c.l.b16 %v1179
    %v1212 = vunpack.c.l.b16 %v1180
    %v1213 = vunpack.c.l.b16 %v1181
    %v1214 = vunpack.c.l.b16 %v1182
    %v1215 = vpack.c.b16 %v1200, %v1199
    %v1216 = vpack.c.b16 %v1202, %v1201
    %v1217 = vpack.c.b16 %v1204, %v1203
    %v1218 = vpack.c.b16 %v1206, %v1205
    %v1219 = vpack.c.b16 %v1208, %v1207
    %v1220 = vpack.c.b16 %v1210, %v1209
    %v1221 = vpack.c.b16 %v1212, %v1211
    %v1222 = vpack.c.b16 %v1214, %v1213
    %1231 = vmatpush.bf16.msra.mxu0 %v1222
    %1232 = vmatpush.bf16.msra.mxu0 %v1221
    %1233 = vmatpush.bf16.msra.mxu0 %v1220
    %1234 = vmatpush.bf16.msra.mxu0 %v1219
    %1235 = vmatpush.bf16.msra.mxu0 %v1218
    %1236 = vmatpush.bf16.msra.mxu0 %v1217
    %1237 = vmatpush.bf16.msra.mxu0 %v1216
    %1238 = vmatpush.bf16.msra.mxu0 %v1215
    %1239 = vmatmul.bf16.gmra.mxu0 %v1166
    %v1240 = vpop.f32.mrf.mxu0
    %v1241 = vadd.f32 0.0, %v1240
    %v1242 = vpop.f32.mrf.mxu0
    %v1243 = vadd.f32 0.0, %v1242
    %1244 = vdwg.mxu0
    %v1245 = vadd.f32 %v1162, %v1241
    %v1246 = vadd.f32 %v1164, %v1243
    %v1247 = vld [vmem:[%s7 + $0x10] sm:$0x1]
    %v1249 = vperm.slane %v1247, 0
    %v1251 = vadd.f32 %v1245, %v1249
    %v1252 = vadd.f32 %v1246, %v1249
    %v1253 = vadd.f32 %v124, %v1251
    %v1254 = vadd.f32 %v125, %v1252
    %v1255 = vmul.f32 %v719, 0.1
    %v1256 = vmul.f32 %v721, 0.1
    %v1257 = vadd.f32 %v1253, %v1255
    %v1258 = vadd.f32 %v1254, %v1256
    %1259 = vst [vmem:[#allocation13] sm:$0xff] %v1257
    %1260 = vst [vmem:[#allocation13 + $0x8] sm:$0xff] %v1258
    // Predicated region
    $region58: #{_dmn_forward_impl.1} parent=1 // pred_check
      _
    $region59: #{_dmn_forward_impl.1} parent=1 // pred_check_branch
      %1262 = sbr.rel (0) target = $region61
    $region60: #{_dmn_forward_impl.1} parent=1 // pred_region
      %1264 = vsyncadd [#allocation4], 0
      %s1265 = sshll.u32 [#allocation13], 4
      %s1266 = int_to_ptr.vmem [resolvable:$true] %s1265
      %s1267 = sshll.u32 %s8, 4
      %s1268 = int_to_ptr.hbm [resolvable:$true] %s1267
      %1273 = dma.vmem_to_hbm [thread:$0]  %s1266, 256, %s1268, [#allocation4], 128, 128, 8
    $region61: #{_dmn_forward_impl.1} parent=1 // pred_fallthru
      _
    // Predicated region
    $region62: #{_dmn_forward_impl.1} parent=1 // pred_check
      _
    $region63: #{_dmn_forward_impl.1} parent=1 // pred_check_branch
      %1275 = sbr.rel (0) target = $region65
    $region64: #{_dmn_forward_impl.1} parent=1 // pred_region
      %1277 = dma.done [#allocation4], 256
    $region65: #{_dmn_forward_impl.1} parent=1 // pred_fallthru
      _
    %1278 = vsyncpa [#allocation3], 1
    %1279 = vsyncpa [#allocation6], 1
    %1280 = vsyncpa [#allocation9], 1
    %1281 = vsyncpa [#allocation12], 1
    %1282 = vsyncpa [#allocation4], 1

// kernel: _dmn_forward_impl.1
$region0: #{_dmn_forward_impl.1}
  #allocation0 [shape = 'u32[]', space=smem, size = 0x4, offset = 0x4, fixed_abs, tag = 'smem constant byte address 0x4 - core index']
  #allocation1 [shape = 'u32[72,128]{1,0:T(1,128)}', space=vmem, size = 0x9000, scoped, tag = 'internal scratch']
  %s0 = inlined_call_operand.vmem [shape: f32[16,128], index: 0, kind: input, shape index: {}]
  %s1 = inlined_call_operand.hbm [shape: bf16[128,640], index: 1, kind: input, shape index: {}]
  %s2 = inlined_call_operand.hbm [shape: bf16[256,128], index: 2, kind: input, shape index: {}]
  %s3 = inlined_call_operand.hbm [shape: bf16[128,128], index: 3, kind: input, shape index: {}]
  %s4 = inlined_call_operand.hbm [shape: bf16[128,128], index: 4, kind: input, shape index: {}]
  %s5 = inlined_call_operand.hbm [shape: bf16[128,128], index: 5, kind: input, shape index: {}]
  %s6 = inlined_call_operand.hbm [shape: bf16[128,128], index: 6, kind: input, shape index: {}]
  %s7 = inlined_call_operand.vmem [shape: f32[1,2176], index: 7, kind: input, shape index: {}]
  %s8 = inlined_call_operand.hbm [shape: f32[16,128], index: 8, kind: output, shape index: {}]
  %s9 = sld [smem:[#allocation0]]
  $region66: #{_dmn_forward_impl.1} parent=0
    _
  %s11 = ssub.s32 1, %s9
  %s12 = scalar_select 0, %s11, %s9
  $region1: #{_dmn_forward_impl.1} parent=0
    #allocation2 [shape = 'u8[163840]{0}', space=vmem, size = 0x28000, scoped, tag = 'input window, operand 1, single buffered']
    #allocation3 [shape = 's32[1]{0}', space=sflag, size = 0x4, scoped, tag = 'scoped memory for _dmn_forward_impl.1']
    #allocation4 [shape = 's32[1]{0}', space=sflag, size = 0x4, scoped, tag = 'scoped memory for _dmn_forward_impl.1']
    #allocation5 [shape = 'u8[65536]{0}', space=vmem, size = 0x10000, scoped, tag = 'input window, operand 2, single buffered']
    #allocation6 [shape = 's32[1]{0}', space=sflag, size = 0x4, scoped, tag = 'scoped memory for _dmn_forward_impl.1']
    #allocation7 [shape = 'u8[32768]{0}', space=vmem, size = 0x8000, scoped, tag = 'input window, operand 3, single buffered']
    #allocation8 [shape = 'u8[32768]{0}', space=vmem, size = 0x8000, scoped, tag = 'input window, operand 4, single buffered']
    #allocation9 [shape = 's32[1]{0}', space=sflag, size = 0x4, scoped, tag = 'scoped memory for _dmn_forward_impl.1']
    #allocation10 [shape = 'u8[32768]{0}', space=vmem, size = 0x8000, scoped, tag = 'input window, operand 5, single buffered']
    #allocation11 [shape = 'u8[32768]{0}', space=vmem, size = 0x8000, scoped, tag = 'input window, operand 6, single buffered']
    #allocation12 [shape = 's32[1]{0}', space=sflag, size = 0x4, scoped, tag = 'scoped memory for _dmn_forward_impl.1']
    #allocation13 [shape = 'u8[8192]{0}', space=vmem, size = 0x2000, scoped, tag = 'output window, operand 0, single buffered']
    %13 = vsyncpa [#allocation3], 0
    %14 = vsyncpa [#allocation6], 0
    %15 = vsyncpa [#allocation9], 0
    %16 = vsyncpa [#allocation12], 0
    %17 = vsyncpa [#allocation4], 0
    // Predicated region
    $region2: #{_dmn_forward_impl.1} parent=1 // pred_check
      _
    $region3: #{_dmn_forward_impl.1} parent=1 // pred_check_branch
      %19 = sbr.rel (0) target = $region5
    $region4: #{_dmn_forward_impl.1} parent=1 // pred_region
      _
    $region5: #{_dmn_forward_impl.1} parent=1 // pred_fallthru
      _
    // Predicated region
    $region6: #{_dmn_forward_impl.1} parent=1 // pred_check
      _
    $region7: #{_dmn_forward_impl.1} parent=1 // pred_check_branch
      %21 = sbr.rel (0) target = $region9
    $region8: #{_dmn_forward_impl.1} parent=1 // pred_region
      %23 = vsyncadd [#allocation3], 0
      %s24 = sshll.u32 %s1, 4
      %s25 = int_to_ptr.hbm [resolvable:$true] %s24
      %s26 = sshll.u32 [#allocation2], 4
      %s27 = int_to_ptr.vmem [resolvable:$true] %s26
      %32 = dma.hbm_to_vmem [thread:$0]  %s25, 5120, %s27, [#allocation3], 320, 320, 20
    $region9: #{_dmn_forward_impl.1} parent=1 // pred_fallthru
      _
    // Predicated region
    $region10: #{_dmn_forward_impl.1} parent=1 // pred_check
      _
    $region11: #{_dmn_forward_impl.1} parent=1 // pred_check_branch
      %34 = sbr.rel (0) target = $region13
    $region12: #{_dmn_forward_impl.1} parent=1 // pred_region
      %36 = vsyncadd [#allocation6], 0
      %s37 = sshll.u32 %s2, 4
      %s38 = int_to_ptr.hbm [resolvable:$true] %s37
      %s39 = sshll.u32 [#allocation5], 4
      %s40 = int_to_ptr.vmem [resolvable:$true] %s39
      %45 = dma.hbm_to_vmem [thread:$0]  %s38, 2048, %s40, [#allocation6], 64, 64, 4
    $region13: #{_dmn_forward_impl.1} parent=1 // pred_fallthru
      _
    // Predicated region
    $region14: #{_dmn_forward_impl.1} parent=1 // pred_check
      _
    $region15: #{_dmn_forward_impl.1} parent=1 // pred_check_branch
      %47 = sbr.rel (0) target = $region17
    $region16: #{_dmn_forward_impl.1} parent=1 // pred_region
      %49 = vsyncadd [#allocation6], 0
      %s50 = sshll.u32 %s3, 4
      %s51 = int_to_ptr.hbm [resolvable:$true] %s50
      %s52 = sshll.u32 [#allocation7], 4
      %s53 = int_to_ptr.vmem [resolvable:$true] %s52
      %58 = dma.hbm_to_vmem [thread:$0]  %s51, 1024, %s53, [#allocation6], 64, 64, 4
    $region17: #{_dmn_forward_impl.1} parent=1 // pred_fallthru
      _
    // Predicated region
    $region18: #{_dmn_forward_impl.1} parent=1 // pred_check
      _
    $region19: #{_dmn_forward_impl.1} parent=1 // pred_check_branch
      %60 = sbr.rel (0) target = $region21
    $region20: #{_dmn_forward_impl.1} parent=1 // pred_region
      %62 = vsyncadd [#allocation9], 0
      %s63 = sshll.u32 %s4, 4
      %s64 = int_to_ptr.hbm [resolvable:$true] %s63
      %s65 = sshll.u32 [#allocation8], 4
      %s66 = int_to_ptr.vmem [resolvable:$true] %s65
      %71 = dma.hbm_to_vmem [thread:$0]  %s64, 1024, %s66, [#allocation9], 64, 64, 4
    $region21: #{_dmn_forward_impl.1} parent=1 // pred_fallthru
      _
    // Predicated region
    $region22: #{_dmn_forward_impl.1} parent=1 // pred_check
      _
    $region23: #{_dmn_forward_impl.1} parent=1 // pred_check_branch
      %73 = sbr.rel (0) target = $region25
    $region24: #{_dmn_forward_impl.1} parent=1 // pred_region
      %75 = vsyncadd [#allocation9], 0
      %s76 = sshll.u32 %s5, 4
      %s77 = int_to_ptr.hbm [resolvable:$true] %s76
      %s78 = sshll.u32 [#allocation10], 4
      %s79 = int_to_ptr.vmem [resolvable:$true] %s78
      %84 = dma.hbm_to_vmem [thread:$0]  %s77, 1024, %s79, [#allocation9], 64, 64, 4
    $region25: #{_dmn_forward_impl.1} parent=1 // pred_fallthru
      _
    // Predicated region
    $region26: #{_dmn_forward_impl.1} parent=1 // pred_check
      _
    $region27: #{_dmn_forward_impl.1} parent=1 // pred_check_branch
      %86 = sbr.rel (0) target = $region29
    $region28: #{_dmn_forward_impl.1} parent=1 // pred_region
      %88 = vsyncadd [#allocation12], 0
      %s89 = sshll.u32 %s6, 4
      %s90 = int_to_ptr.hbm [resolvable:$true] %s89
      %s91 = sshll.u32 [#allocation11], 4
      %s92 = int_to_ptr.vmem [resolvable:$true] %s91
      %97 = dma.hbm_to_vmem [thread:$0]  %s90, 1024, %s92, [#allocation12], 64, 64, 4
    $region29: #{_dmn_forward_impl.1} parent=1 // pred_fallthru
      _
    // Predicated region
    $region30: #{_dmn_forward_impl.1} parent=1 // pred_check
      _
    $region31: #{_dmn_forward_impl.1} parent=1 // pred_check_branch
      %99 = sbr.rel (0) target = $region33
    $region32: #{_dmn_forward_impl.1} parent=1 // pred_region
      _
    $region33: #{_dmn_forward_impl.1} parent=1 // pred_fallthru
      _
    // Predicated region
    $region34: #{_dmn_forward_impl.1} parent=1 // pred_check
      _
    $region35: #{_dmn_forward_impl.1} parent=1 // pred_check_branch
      %101 = sbr.rel (0) target = $region37
    $region36: #{_dmn_forward_impl.1} parent=1 // pred_region
      %103 = dma.done [#allocation3], 5120
    $region37: #{_dmn_forward_impl.1} parent=1 // pred_fallthru
      _
    // Predicated region
    $region38: #{_dmn_forward_impl.1} parent=1 // pred_check
      _
    $region39: #{_dmn_forward_impl.1} parent=1 // pred_check_branch
      %105 = sbr.rel (0) target = $region41
    $region40: #{_dmn_forward_impl.1} parent=1 // pred_region
      %107 = dma.done [#allocation6], 2048
    $region41: #{_dmn_forward_impl.1} parent=1 // pred_fallthru
      _
    // Predicated region
    $region42: #{_dmn_forward_impl.1} parent=1 // pred_check
      _
    $region43: #{_dmn_forward_impl.1} parent=1 // pred_check_branch
      %109 = sbr.rel (0) target = $region45
    $region44: #{_dmn_forward_impl.1} parent=1 // pred_region
      %111 = dma.done [#allocation6], 1024
    $region45: #{_dmn_forward_impl.1} parent=1 // pred_fallthru
      _
    // Predicated region
    $region46: #{_dmn_forward_impl.1} parent=1 // pred_check
      _
    $region47: #{_dmn_forward_impl.1} parent=1 // pred_check_branch
      %113 = sbr.rel (0) target = $region49
    $region48: #{_dmn_forward_impl.1} parent=1 // pred_region
      %115 = dma.done [#allocation9], 1024
    $region49: #{_dmn_forward_impl.1} parent=1 // pred_fallthru
      _
    // Predicated region
    $region50: #{_dmn_forward_impl.1} parent=1 // pred_check
      _
    $region51: #{_dmn_forward_impl.1} parent=1 // pred_check_branch
      %117 = sbr.rel (0) target = $region53
    $region52: #{_dmn_forward_impl.1} parent=1 // pred_region
      %119 = dma.done [#allocation9], 1024
    $region53: #{_dmn_forward_impl.1} parent=1 // pred_fallthru
      _
    // Predicated region
    $region54: #{_dmn_forward_impl.1} parent=1 // pred_check
      _
    $region55: #{_dmn_forward_impl.1} parent=1 // pred_check_branch
      %121 = sbr.rel (0) target = $region57
    $region56: #{_dmn_forward_impl.1} parent=1 // pred_region
      %123 = dma.done [#allocation12], 1024
    $region57: #{_dmn_forward_impl.1} parent=1 // pred_fallthru
      _
    %v124 = vld [vmem:[%s0] sm:$0xff]
    %v125 = vld [vmem:[%s0 + $0x8] sm:$0xff]
    %v126 = vpack.c.bf16 %v125, %v124
    %v127 = vld [vmem:[#allocation2] sm:$0xff]
    %v128 = vld [vmem:[#allocation2 + $0x8] sm:$0xff]
    %v129 = vld [vmem:[#allocation2 + $0x10] sm:$0xf]
    %v130 = vld [vmem:[#allocation2 + $0x14] sm:$0xff]
    %v131 = vld [vmem:[#allocation2 + $0x1c] sm:$0xff]
    %v132 = vld [vmem:[#allocation2 + $0x24] sm:$0xf]
    %v133 = vld [vmem:[#allocation2 + $0x28] sm:$0xff]
    %v134 = vld [vmem:[#allocation2 + $0x30] sm:$0xff]
    %v135 = vld [vmem:[#allocation2 + $0x38] sm:$0xf]
    %v136 = vld [vmem:[#allocation2 + $0x3c] sm:$0xff]
    %v137 = vld [vmem:[#allocation2 + $0x44] sm:$0xff]
    %v138 = vld [vmem:[#allocation2 + $0x4c] sm:$0xf]
    %v139 = vld [vmem:[#allocation2 + $0x50] sm:$0xff]
    %v140 = vld [vmem:[#allocation2 + $0x58] sm:$0xff]
    %v141 = vld [vmem:[#allocation2 + $0x60] sm:$0xf]
    %v142 = vld [vmem:[#allocation2 + $0x64] sm:$0xff]
    %v143 = vld [vmem:[#allocation2 + $0x6c] sm:$0xff]
    %v144 = vld [vmem:[#allocation2 + $0x74] sm:$0xf]
    %v145 = vld [vmem:[#allocation2 + $0x78] sm:$0xff]
    %v146 = vld [vmem:[#allocation2 + $0x80] sm:$0xff]
    %v147 = vld [vmem:[#allocation2 + $0x88] sm:$0xf]
    %v148 = vld [vmem:[#allocation2 + $0x8c] sm:$0xff]
    %v149 = vld [vmem:[#allocation2 + $0x94] sm:$0xff]
    %v150 = vld [vmem:[#allocation2 + $0x9c] sm:$0xf]
    %v151 = vld [vmem:[#allocation2 + $0xa0] sm:$0xff]
    %v152 = vld [vmem:[#allocation2 + $0xa8] sm:$0xff]
    %v153 = vld [vmem:[#allocation2 + $0xb0] sm:$0xf]
    %v154 = vld [vmem:[#allocation2 + $0xb4] sm:$0xff]
    %v155 = vld [vmem:[#allocation2 + $0xbc] sm:$0xff]
    %v156 = vld [vmem:[#allocation2 + $0xc4] sm:$0xf]
    %v157 = vld [vmem:[#allocation2 + $0xc8] sm:$0xff]
    %v158 = vld [vmem:[#allocation2 + $0xd0] sm:$0xff]
    %v159 = vld [vmem:[#allocation2 + $0xd8] sm:$0xf]
    %v160 = vld [vmem:[#allocation2 + $0xdc] sm:$0xff]
    %v161 = vld [vmem:[#allocation2 + $0xe4] sm:$0xff]
    %v162 = vld [vmem:[#allocation2 + $0xec] sm:$0xf]
    %v163 = vld [vmem:[#allocation2 + $0xf0] sm:$0xff]
    %v164 = vld [vmem:[#allocation2 + $0xf8] sm:$0xff]
    %v165 = vld [vmem:[#allocation2 + $0x100] sm:$0xf]
    %v166 = vld [vmem:[#allocation2 + $0x104] sm:$0xff]
    %v167 = vld [vmem:[#allocation2 + $0x10c] sm:$0xff]
    %v168 = vld [vmem:[#allocation2 + $0x114] sm:$0xf]
    %v169 = vld [vmem:[#allocation2 + $0x118] sm:$0xff]
    %v170 = vld [vmem:[#allocation2 + $0x120] sm:$0xff]
    %v171 = vld [vmem:[#allocation2 + $0x128] sm:$0xf]
    %v172 = vld [vmem:[#allocation2 + $0x12c] sm:$0xff]
    %v173 = vld [vmem:[#allocation2 + $0x134] sm:$0xff]
    %v174 = vld [vmem:[#allocation2 + $0x13c] sm:$0xf]
    %v175 = vld [vmem:[%s7] sm:$0x1f]
    %v177 = vperm.slane %v175, 0
    %v178 = vperm.slane %v175, 1
    %v179 = vperm.slane %v175, 2
    %v180 = vperm.slane %v175, 3
    %v181 = vperm.slane %v175, 4
    %v235 = vunpack.c.l.b16 %v127
    %v236 = vunpack.c.h.b16 %v127
    %v237 = vunpack.c.l.b16 %v128
    %v238 = vunpack.c.h.b16 %v128
    %v239 = vunpack.c.l.b16 %v129
    %v240 = vunpack.c.l.b16 %v130
    %v241 = vunpack.c.h.b16 %v130
    %v242 = vunpack.c.l.b16 %v131
    %v243 = vunpack.c.h.b16 %v131
    %v244 = vunpack.c.l.b16 %v132
    %v245 = vunpack.c.l.b16 %v133
    %v246 = vunpack.c.h.b16 %v133
    %v247 = vunpack.c.l.b16 %v134
    %v248 = vunpack.c.h.b16 %v134
    %v249 = vunpack.c.l.b16 %v135
    %v250 = vunpack.c.l.b16 %v136
    %v251 = vunpack.c.h.b16 %v136
    %v252 = vunpack.c.l.b16 %v137
    %v253 = vunpack.c.h.b16 %v137
    %v254 = vunpack.c.l.b16 %v138
    %v255 = vunpack.c.l.b16 %v139
    %v256 = vunpack.c.h.b16 %v139
    %v257 = vunpack.c.l.b16 %v140
    %v258 = vunpack.c.h.b16 %v140
    %v259 = vunpack.c.l.b16 %v141
    %v260 = vunpack.c.l.b16 %v142
    %v261 = vunpack.c.h.b16 %v142
    %v262 = vunpack.c.l.b16 %v143
    %v263 = vunpack.c.h.b16 %v143
    %v264 = vunpack.c.l.b16 %v144
    %v265 = vunpack.c.l.b16 %v145
    %v266 = vunpack.c.h.b16 %v145
    %v267 = vunpack.c.l.b16 %v146
    %v268 = vunpack.c.h.b16 %v146
    %v269 = vunpack.c.l.b16 %v147
    %v270 = vunpack.c.l.b16 %v148
    %v271 = vunpack.c.h.b16 %v148
    %v272 = vunpack.c.l.b16 %v149
    %v273 = vunpack.c.h.b16 %v149
    %v274 = vunpack.c.l.b16 %v150
    %v275 = vunpack.c.l.b16 %v151
    %v276 = vunpack.c.h.b16 %v151
    %v277 = vunpack.c.l.b16 %v152
    %v278 = vunpack.c.h.b16 %v152
    %v279 = vunpack.c.l.b16 %v153
    %v280 = vunpack.c.l.b16 %v154
    %v281 = vunpack.c.h.b16 %v154
    %v282 = vunpack.c.l.b16 %v155
    %v283 = vunpack.c.h.b16 %v155
    %v284 = vunpack.c.l.b16 %v156
    %v285 = vunpack.c.l.b16 %v157
    %v286 = vunpack.c.h.b16 %v157
    %v287 = vunpack.c.l.b16 %v158
    %v288 = vunpack.c.h.b16 %v158
    %v289 = vunpack.c.l.b16 %v159
    %v290 = vunpack.c.l.b16 %v160
    %v291 = vunpack.c.h.b16 %v160
    %v292 = vunpack.c.l.b16 %v161
    %v293 = vunpack.c.h.b16 %v161
    %v294 = vunpack.c.l.b16 %v162
    %v295 = vunpack.c.l.b16 %v163
    %v296 = vunpack.c.h.b16 %v163
    %v297 = vunpack.c.l.b16 %v164
    %v298 = vunpack.c.h.b16 %v164
    %v299 = vunpack.c.l.b16 %v165
    %v300 = vunpack.c.l.b16 %v166
    %v301 = vunpack.c.h.b16 %v166
    %v302 = vunpack.c.l.b16 %v167
    %v303 = vunpack.c.h.b16 %v167
    %v304 = vunpack.c.l.b16 %v168
    %v305 = vunpack.c.l.b16 %v169
    %v306 = vunpack.c.h.b16 %v169
    %v307 = vunpack.c.l.b16 %v170
    %v308 = vunpack.c.h.b16 %v170
    %v309 = vunpack.c.l.b16 %v171
    %v310 = vunpack.c.l.b16 %v172
    %v311 = vunpack.c.h.b16 %v172
    %v312 = vunpack.c.l.b16 %v173
    %v313 = vunpack.c.h.b16 %v173
    %v314 = vunpack.c.l.b16 %v174
    %v315 = vpack.c.b16 %v240, %v235
    %v316 = vpack.c.b16 %v241, %v236
    %v317 = vpack.c.b16 %v242, %v237
    %v318 = vpack.c.b16 %v243, %v238
    %v319 = vpack.c.b16 %v244, %v239
    %v320 = vpack.c.b16 %v250, %v245
    %v321 = vpack.c.b16 %v251, %v246
    %v322 = vpack.c.b16 %v252, %v247
    %v323 = vpack.c.b16 %v253, %v248
    %v324 = vpack.c.b16 %v254, %v249
    %v325 = vpack.c.b16 %v260, %v255
    %v326 = vpack.c.b16 %v261, %v256
    %v327 = vpack.c.b16 %v262, %v257
    %v328 = vpack.c.b16 %v263, %v258
    %v329 = vpack.c.b16 %v264, %v259
    %v330 = vpack.c.b16 %v270, %v265
    %v331 = vpack.c.b16 %v271, %v266
    %v332 = vpack.c.b16 %v272, %v267
    %v333 = vpack.c.b16 %v273, %v268
    %v334 = vpack.c.b16 %v274, %v269
    %v335 = vpack.c.b16 %v280, %v275
    %v336 = vpack.c.b16 %v281, %v276
    %v337 = vpack.c.b16 %v282, %v277
    %v338 = vpack.c.b16 %v283, %v278
    %v339 = vpack.c.b16 %v284, %v279
    %v340 = vpack.c.b16 %v290, %v285
    %v341 = vpack.c.b16 %v291, %v286
    %v342 = vpack.c.b16 %v292, %v287
    %v343 = vpack.c.b16 %v293, %v288
    %v344 = vpack.c.b16 %v294, %v289
    %v345 = vpack.c.b16 %v300, %v295
    %v346 = vpack.c.b16 %v301, %v296
    %v347 = vpack.c.b16 %v302, %v297
    %v348 = vpack.c.b16 %v303, %v298
    %v349 = vpack.c.b16 %v304, %v299
    %v350 = vpack.c.b16 %v310, %v305
    %v351 = vpack.c.b16 %v311, %v306
    %v352 = vpack.c.b16 %v312, %v307
    %v353 = vpack.c.b16 %v313, %v308
    %v354 = vpack.c.b16 %v314, %v309
    %395 = vmatpush.bf16.msra.mxu0 %v350
    %396 = vmatpush.bf16.msra.mxu0 %v345
    %397 = vmatpush.bf16.msra.mxu0 %v340
    %398 = vmatpush.bf16.msra.mxu0 %v335
    %399 = vmatpush.bf16.msra.mxu0 %v330
    %400 = vmatpush.bf16.msra.mxu0 %v325
    %401 = vmatpush.bf16.msra.mxu0 %v320
    %402 = vmatpush.bf16.msra.mxu0 %v315
    %403 = vmatmul.bf16.gmra.mxu0 %v126
    %v404 = vpop.f32.mrf.mxu0
    %v405 = vadd.f32 %v177, %v404
    %v406 = vpop.f32.mrf.mxu0
    %v407 = vadd.f32 %v177, %v406
    %408 = vdwg.mxu0
    %409 = vmatpush.bf16.msra.mxu0 %v351
    %410 = vmatpush.bf16.msra.mxu0 %v346
    %411 = vmatpush.bf16.msra.mxu0 %v341
    %412 = vmatpush.bf16.msra.mxu0 %v336
    %413 = vmatpush.bf16.msra.mxu0 %v331
    %414 = vmatpush.bf16.msra.mxu0 %v326
    %415 = vmatpush.bf16.msra.mxu0 %v321
    %416 = vmatpush.bf16.msra.mxu0 %v316
    %417 = vmatmul.bf16.gmra.mxu0 %v126
    %v418 = vpop.f32.mrf.mxu0
    %v419 = vadd.f32 %v178, %v418
    %v420 = vpop.f32.mrf.mxu0
    %v421 = vadd.f32 %v178, %v420
    %422 = vdwg.mxu0
    %423 = vmatpush.bf16.msra.mxu0 %v352
    %424 = vmatpush.bf16.msra.mxu0 %v347
    %425 = vmatpush.bf16.msra.mxu0 %v342
    %426 = vmatpush.bf16.msra.mxu0 %v337
    %427 = vmatpush.bf16.msra.mxu0 %v332
    %428 = vmatpush.bf16.msra.mxu0 %v327
    %429 = vmatpush.bf16.msra.mxu0 %v322
    %430 = vmatpush.bf16.msra.mxu0 %v317
    %431 = vmatmul.bf16.gmra.mxu0 %v126
    %v432 = vpop.f32.mrf.mxu0
    %v433 = vadd.f32 %v179, %v432
    %v434 = vpop.f32.mrf.mxu0
    %v435 = vadd.f32 %v179, %v434
    %436 = vdwg.mxu0
    %437 = vmatpush.bf16.msra.mxu0 %v353
    %438 = vmatpush.bf16.msra.mxu0 %v348
    %439 = vmatpush.bf16.msra.mxu0 %v343
    %440 = vmatpush.bf16.msra.mxu0 %v338
    %441 = vmatpush.bf16.msra.mxu0 %v333
    %442 = vmatpush.bf16.msra.mxu0 %v328
    %443 = vmatpush.bf16.msra.mxu0 %v323
    %444 = vmatpush.bf16.msra.mxu0 %v318
    %445 = vmatmul.bf16.gmra.mxu0 %v126
    %v446 = vpop.f32.mrf.mxu0
    %v447 = vadd.f32 %v180, %v446
    %v448 = vpop.f32.mrf.mxu0
    %v449 = vadd.f32 %v180, %v448
    %450 = vdwg.mxu0
    %451 = vmatpush.bf16.msra.mxu0 %v354
    %452 = vmatpush.bf16.msra.mxu0 %v349
    %453 = vmatpush.bf16.msra.mxu0 %v344
    %454 = vmatpush.bf16.msra.mxu0 %v339
    %455 = vmatpush.bf16.msra.mxu0 %v334
    %456 = vmatpush.bf16.msra.mxu0 %v329
    %457 = vmatpush.bf16.msra.mxu0 %v324
    %458 = vmatpush.bf16.msra.mxu0 %v319
    %459 = vmatmul.bf16.gmra.mxu0 %v126
    %v460 = vpop.f32.mrf.mxu0
    %v461 = vadd.f32 %v181, %v460
    %v462 = vpop.f32.mrf.mxu0
    %v463 = vadd.f32 %v181, %v462
    %464 = vdwg.mxu0
    %v465 = vld [vmem:[%s7 + $0x7] sm:$0x3]
    %v466 = vld [vmem:[%s7 + $0x9] sm:$0x3]
    %v467 = vadd.f32 %v419, %v433
    %468 = vadd.xlane.f32.xlu0 %v467
    %v469 = vpop.xlane.xlu0 %468
    %v470 = vadd.f32 %v421, %v435
    %471 = vadd.xlane.f32.xlu0 %v470
    %v472 = vpop.xlane.xlu0 %471
    %v473 = vmul.f32 %v419, %v419
    %v474 = vmul.f32 %v433, %v433
    %v475 = vmul.f32 %v421, %v421
    %v476 = vmul.f32 %v435, %v435
    %v477 = vadd.f32 %v473, %v474
    %478 = vadd.xlane.f32.xlu0 %v477
    %v479 = vpop.xlane.xlu0 %478
    %v480 = vadd.f32 %v475, %v476
    %481 = vadd.xlane.f32.xlu0 %v480
    %v482 = vpop.xlane.xlu0 %481
    %v483 = vmul.f32 %v469, 0.00390625
    %v484 = vmul.f32 %v472, 0.00390625
    %v485 = vmul.f32 %v479, 0.00390625
    %v486 = vmul.f32 %v482, 0.00390625
    %v487 = vmul.f32 %v483, %v483
    %v488 = vmul.f32 %v484, %v484
    %v489 = vsub.f32 %v485, %v487
    %v490 = vsub.f32 %v486, %v488
    %v491 = vmax.f32 %v489, 0.0
    %v492 = vmax.f32 %v490, 0.0
    %v493 = vsub.f32 %v419, %v483
    %v494 = vsub.f32 %v433, %v483
    %v495 = vsub.f32 %v421, %v484
    %v496 = vsub.f32 %v435, %v484
    %v497 = vadd.f32 %v491, 1e-05
    %v498 = vadd.f32 %v492, 1e-05
    %v499 = vrsqrt.pop %v497
    %v500 = vmul.f32 %v499, %v497
    %v501 = vmul.f32 %v500, %v499
    %v502 = vmul.f32 0.5, %v501
    %v503 = vsub.f32 1.5, %v502
    %v504 = vmul.f32 %v499, %v503
    %vm505 = vweird.f32 %v497
    %vm506 = vweird.f32 %v499
    %vm507 = vmor %vm505, %vm506
    %v508 = vsel %vm507, %v499, %v504
    %v509 = vrsqrt.pop %v498
    %v510 = vmul.f32 %v509, %v498
    %v511 = vmul.f32 %v510, %v509
    %v512 = vmul.f32 0.5, %v511
    %v513 = vsub.f32 1.5, %v512
    %v514 = vmul.f32 %v509, %v513
    %vm515 = vweird.f32 %v498
    %vm516 = vweird.f32 %v509
    %vm517 = vmor %vm515, %vm516
    %v518 = vsel %vm517, %v509, %v514
    %v519 = vmul.f32 %v493, %v508
    %v520 = vmul.f32 %v494, %v508
    %v521 = vmul.f32 %v495, %v518
    %v522 = vmul.f32 %v496, %v518
    %v524 = vperm.slane %v465, 0
    %v525 = vperm.slane %v465, 1
    %v528 = vmul.f32 %v519, %v524
    %v529 = vmul.f32 %v520, %v525
    %v530 = vmul.f32 %v521, %v524
    %v531 = vmul.f32 %v522, %v525
    %v533 = vperm.slane %v466, 0
    %v534 = vperm.slane %v466, 1
    %v537 = vadd.f32 %v528, %v533
    %v538 = vadd.f32 %v529, %v534
    %v539 = vadd.f32 %v530, %v533
    %v540 = vadd.f32 %v531, %v534
    %v541 = vmul.f32 %v537, 0.5
    %v542 = vmul.f32 %v538, 0.5
    %v543 = vmul.f32 %v539, 0.5
    %v544 = vmul.f32 %v540, 0.5
    %v545 = vtanh.pop %v541
    %v546 = vtanh.pop %v542
    %v547 = vtanh.pop %v543
    %v548 = vtanh.pop %v544
    %v549 = vadd.f32 %v545, 1.0
    %v550 = vadd.f32 %v546, 1.0
    %v551 = vadd.f32 %v547, 1.0
    %v552 = vadd.f32 %v548, 1.0
    %v553 = vmul.f32 %v549, 0.5
    %v554 = vmul.f32 %v550, 0.5
    %v555 = vmul.f32 %v551, 0.5
    %v556 = vmul.f32 %v552, 0.5
    %v557 = vmul.f32 %v537, %v553
    %v558 = vmul.f32 %v538, %v554
    %v559 = vmul.f32 %v539, %v555
    %v560 = vmul.f32 %v540, %v556
    %v561 = vpack.c.bf16 %v559, %v557
    %v562 = vpack.c.bf16 %v560, %v558
    %v563 = vld [vmem:[#allocation5] sm:$0xf]
    %v564 = vld [vmem:[#allocation5 + $0x4] sm:$0xf]
    %v565 = vld [vmem:[#allocation5 + $0x8] sm:$0xf]
    %v566 = vld [vmem:[#allocation5 + $0xc] sm:$0xf]
    %v567 = vld [vmem:[#allocation5 + $0x10] sm:$0xf]
    %v568 = vld [vmem:[#allocation5 + $0x14] sm:$0xf]
    %v569 = vld [vmem:[#allocation5 + $0x18] sm:$0xf]
    %v570 = vld [vmem:[#allocation5 + $0x1c] sm:$0xf]
    %v571 = vld [vmem:[#allocation5 + $0x20] sm:$0xf]
    %v572 = vld [vmem:[#allocation5 + $0x24] sm:$0xf]
    %v573 = vld [vmem:[#allocation5 + $0x28] sm:$0xf]
    %v574 = vld [vmem:[#allocation5 + $0x2c] sm:$0xf]
    %v575 = vld [vmem:[#allocation5 + $0x30] sm:$0xf]
    %v576 = vld [vmem:[#allocation5 + $0x34] sm:$0xf]
    %v577 = vld [vmem:[#allocation5 + $0x38] sm:$0xf]
    %v578 = vld [vmem:[#allocation5 + $0x3c] sm:$0xf]
    %v579 = vld [vmem:[#allocation5 + $0x40] sm:$0xf]
    %v580 = vld [vmem:[#allocation5 + $0x44] sm:$0xf]
    %v581 = vld [vmem:[#allocation5 + $0x48] sm:$0xf]
    %v582 = vld [vmem:[#allocation5 + $0x4c] sm:$0xf]
    %v583 = vld [vmem:[#allocation5 + $0x50] sm:$0xf]
    %v584 = vld [vmem:[#allocation5 + $0x54] sm:$0xf]
    %v585 = vld [vmem:[#allocation5 + $0x58] sm:$0xf]
    %v586 = vld [vmem:[#allocation5 + $0x5c] sm:$0xf]
    %v587 = vld [vmem:[#allocation5 + $0x60] sm:$0xf]
    %v588 = vld [vmem:[#allocation5 + $0x64] sm:$0xf]
    %v589 = vld [vmem:[#allocation5 + $0x68] sm:$0xf]
    %v590 = vld [vmem:[#allocation5 + $0x6c] sm:$0xf]
    %v591 = vld [vmem:[#allocation5 + $0x70] sm:$0xf]
    %v592 = vld [vmem:[#allocation5 + $0x74] sm:$0xf]
    %v593 = vld [vmem:[#allocation5 + $0x78] sm:$0xf]
    %v594 = vld [vmem:[#allocation5 + $0x7c] sm:$0xf]
    %v595 = vld [vmem:[%s7 + $0xf] sm:$0x1]
    %v597 = vperm.slane %v595, 0
    %v631 = vunpack.c.l.b16 %v563
    %v632 = vunpack.c.l.b16 %v564
    %v633 = vunpack.c.l.b16 %v565
    %v634 = vunpack.c.l.b16 %v566
    %v635 = vunpack.c.l.b16 %v567
    %v636 = vunpack.c.l.b16 %v568
    %v637 = vunpack.c.l.b16 %v569
    %v638 = vunpack.c.l.b16 %v570
    %v639 = vunpack.c.l.b16 %v571
    %v640 = vunpack.c.l.b16 %v572
    %v641 = vunpack.c.l.b16 %v573
    %v642 = vunpack.c.l.b16 %v574
    %v643 = vunpack.c.l.b16 %v575
    %v644 = vunpack.c.l.b16 %v576
    %v645 = vunpack.c.l.b16 %v577
    %v646 = vunpack.c.l.b16 %v578
    %v647 = vunpack.c.l.b16 %v579
    %v648 = vunpack.c.l.b16 %v580
    %v649 = vunpack.c.l.b16 %v581
    %v650 = vunpack.c.l.b16 %v582
    %v651 = vunpack.c.l.b16 %v583
    %v652 = vunpack.c.l.b16 %v584
    %v653 = vunpack.c.l.b16 %v585
    %v654 = vunpack.c.l.b16 %v586
    %v655 = vunpack.c.l.b16 %v587
    %v656 = vunpack.c.l.b16 %v588
    %v657 = vunpack.c.l.b16 %v589
    %v658 = vunpack.c.l.b16 %v590
    %v659 = vunpack.c.l.b16 %v591
    %v660 = vunpack.c.l.b16 %v592
    %v661 = vunpack.c.l.b16 %v593
    %v662 = vunpack.c.l.b16 %v594
    %v663 = vpack.c.b16 %v632, %v631
    %v664 = vpack.c.b16 %v634, %v633
    %v665 = vpack.c.b16 %v636, %v635
    %v666 = vpack.c.b16 %v638, %v637
    %v667 = vpack.c.b16 %v640, %v639
    %v668 = vpack.c.b16 %v642, %v641
    %v669 = vpack.c.b16 %v644, %v643
    %v670 = vpack.c.b16 %v646, %v645
    %v671 = vpack.c.b16 %v648, %v647
    %v672 = vpack.c.b16 %v650, %v649
    %v673 = vpack.c.b16 %v652, %v651
    %v674 = vpack.c.b16 %v654, %v653
    %v675 = vpack.c.b16 %v656, %v655
    %v676 = vpack.c.b16 %v658, %v657
    %v677 = vpack.c.b16 %v660, %v659
    %v678 = vpack.c.b16 %v662, %v661
    %695 = vmatpush.bf16.msra.mxu0 %v670
    %696 = vmatpush.bf16.msra.mxu0 %v669
    %697 = vmatpush.bf16.msra.mxu0 %v668
    %698 = vmatpush.bf16.msra.mxu0 %v667
    %699 = vmatpush.bf16.msra.mxu0 %v666
    %700 = vmatpush.bf16.msra.mxu0 %v665
    %701 = vmatpush.bf16.msra.mxu0 %v664
    %702 = vmatpush.bf16.msra.mxu0 %v663
    %703 = vmatmul.bf16.gmra.mxu0 %v561
    %v704 = vpop.f32.mrf.mxu0
    %v705 = vadd.f32 %v597, %v704
    %v706 = vpop.f32.mrf.mxu0
    %v707 = vadd.f32 %v597, %v706
    %708 = vdwg.mxu0
    %709 = vmatpush.bf16.msra.mxu0 %v678
    %710 = vmatpush.bf16.msra.mxu0 %v677
    %711 = vmatpush.bf16.msra.mxu0 %v676
    %712 = vmatpush.bf16.msra.mxu0 %v675
    %713 = vmatpush.bf16.msra.mxu0 %v674
    %714 = vmatpush.bf16.msra.mxu0 %v673
    %715 = vmatpush.bf16.msra.mxu0 %v672
    %716 = vmatpush.bf16.msra.mxu0 %v671
    %717 = vmatmul.bf16.gmra.mxu0 %v562
    %v718 = vpop.f32.mrf.mxu0
    %v719 = vadd.f32 %v705, %v718
    %v720 = vpop.f32.mrf.mxu0
    %v721 = vadd.f32 %v707, %v720
    %722 = vdwg.mxu0
    %v723 = vpack.c.bf16 %v721, %v719
    %v724 = vld [vmem:[#allocation7] sm:$0xf]
    %v725 = vld [vmem:[#allocation7 + $0x4] sm:$0xf]
    %v726 = vld [vmem:[#allocation7 + $0x8] sm:$0xf]
    %v727 = vld [vmem:[#allocation7 + $0xc] sm:$0xf]
    %v728 = vld [vmem:[#allocation7 + $0x10] sm:$0xf]
    %v729 = vld [vmem:[#allocation7 + $0x14] sm:$0xf]
    %v730 = vld [vmem:[#allocation7 + $0x18] sm:$0xf]
    %v731 = vld [vmem:[#allocation7 + $0x1c] sm:$0xf]
    %v732 = vld [vmem:[#allocation7 + $0x20] sm:$0xf]
    %v733 = vld [vmem:[#allocation7 + $0x24] sm:$0xf]
    %v734 = vld [vmem:[#allocation7 + $0x28] sm:$0xf]
    %v735 = vld [vmem:[#allocation7 + $0x2c] sm:$0xf]
    %v736 = vld [vmem:[#allocation7 + $0x30] sm:$0xf]
    %v737 = vld [vmem:[#allocation7 + $0x34] sm:$0xf]
    %v738 = vld [vmem:[#allocation7 + $0x38] sm:$0xf]
    %v739 = vld [vmem:[#allocation7 + $0x3c] sm:$0xf]
    %v756 = vunpack.c.l.b16 %v724
    %v757 = vunpack.c.l.b16 %v725
    %v758 = vunpack.c.l.b16 %v726
    %v759 = vunpack.c.l.b16 %v727
    %v760 = vunpack.c.l.b16 %v728
    %v761 = vunpack.c.l.b16 %v729
    %v762 = vunpack.c.l.b16 %v730
    %v763 = vunpack.c.l.b16 %v731
    %v764 = vunpack.c.l.b16 %v732
    %v765 = vunpack.c.l.b16 %v733
    %v766 = vunpack.c.l.b16 %v734
    %v767 = vunpack.c.l.b16 %v735
    %v768 = vunpack.c.l.b16 %v736
    %v769 = vunpack.c.l.b16 %v737
    %v770 = vunpack.c.l.b16 %v738
    %v771 = vunpack.c.l.b16 %v739
    %v772 = vpack.c.b16 %v757, %v756
    %v773 = vpack.c.b16 %v759, %v758
    %v774 = vpack.c.b16 %v761, %v760
    %v775 = vpack.c.b16 %v763, %v762
    %v776 = vpack.c.b16 %v765, %v764
    %v777 = vpack.c.b16 %v767, %v766
    %v778 = vpack.c.b16 %v769, %v768
    %v779 = vpack.c.b16 %v771, %v770
    %788 = vmatpush.bf16.msra.mxu0 %v779
    %789 = vmatpush.bf16.msra.mxu0 %v778
    %790 = vmatpush.bf16.msra.mxu0 %v777
    %791 = vmatpush.bf16.msra.mxu0 %v776
    %792 = vmatpush.bf16.msra.mxu0 %v775
    %793 = vmatpush.bf16.msra.mxu0 %v774
    %794 = vmatpush.bf16.msra.mxu0 %v773
    %795 = vmatpush.bf16.msra.mxu0 %v772
    %796 = vmatmul.bf16.gmra.mxu0 %v723
    %v797 = vpop.f32.mrf.mxu0
    %v798 = vadd.f32 0.0, %v797
    %v799 = vpop.f32.mrf.mxu0
    %v800 = vadd.f32 0.0, %v799
    %801 = vdwg.mxu0
    %v802 = vadd.f32 %v461, %v798
    %v803 = vadd.f32 %v463, %v800
    %v804 = vld [vmem:[%s7 + $0x5] sm:$0x1]
    %v805 = vld [vmem:[%s7 + $0x6] sm:$0x1]
    %806 = vadd.xlane.f32.xlu0 %v405
    %v807 = vpop.xlane.xlu0 %806
    %808 = vadd.xlane.f32.xlu0 %v407
    %v809 = vpop.xlane.xlu0 %808
    %v810 = vmul.f32 %v405, %v405
    %v811 = vmul.f32 %v407, %v407
    %812 = vadd.xlane.f32.xlu0 %v810
    %v813 = vpop.xlane.xlu0 %812
    %814 = vadd.xlane.f32.xlu0 %v811
    %v815 = vpop.xlane.xlu0 %814
    %v816 = vmul.f32 %v807, 0.0078125
    %v817 = vmul.f32 %v809, 0.0078125
    %v818 = vmul.f32 %v813, 0.0078125
    %v819 = vmul.f32 %v815, 0.0078125
    %v820 = vmul.f32 %v816, %v816
    %v821 = vmul.f32 %v817, %v817
    %v822 = vsub.f32 %v818, %v820
    %v823 = vsub.f32 %v819, %v821
    %v824 = vmax.f32 %v822, 0.0
    %v825 = vmax.f32 %v823, 0.0
    %v826 = vsub.f32 %v405, %v816
    %v827 = vsub.f32 %v407, %v817
    %v828 = vadd.f32 %v824, 1e-05
    %v829 = vadd.f32 %v825, 1e-05
    %v830 = vrsqrt.pop %v828
    %v831 = vmul.f32 %v830, %v828
    %v832 = vmul.f32 %v831, %v830
    %v833 = vmul.f32 0.5, %v832
    %v834 = vsub.f32 1.5, %v833
    %v835 = vmul.f32 %v830, %v834
    %vm836 = vweird.f32 %v828
    %vm837 = vweird.f32 %v830
    %vm838 = vmor %vm836, %vm837
    %v839 = vsel %vm838, %v830, %v835
    %v840 = vrsqrt.pop %v829
    %v841 = vmul.f32 %v840, %v829
    %v842 = vmul.f32 %v841, %v840
    %v843 = vmul.f32 0.5, %v842
    %v844 = vsub.f32 1.5, %v843
    %v845 = vmul.f32 %v840, %v844
    %vm846 = vweird.f32 %v829
    %vm847 = vweird.f32 %v840
    %vm848 = vmor %vm846, %vm847
    %v849 = vsel %vm848, %v840, %v845
    %v850 = vmul.f32 %v826, %v839
    %v851 = vmul.f32 %v827, %v849
    %v853 = vperm.slane %v804, 0
    %v855 = vmul.f32 %v850, %v853
    %v856 = vmul.f32 %v851, %v853
    %v858 = vperm.slane %v805, 0
    %v860 = vadd.f32 %v855, %v858
    %v861 = vadd.f32 %v856, %v858
    %v862 = vmul.f32 %v860, 0.5
    %v863 = vmul.f32 %v861, 0.5
    %v864 = vtanh.pop %v862
    %v865 = vtanh.pop %v863
    %v866 = vadd.f32 %v864, 1.0
    %v867 = vadd.f32 %v865, 1.0
    %v868 = vmul.f32 %v866, 0.5
    %v869 = vmul.f32 %v867, 0.5
    %v870 = vmul.f32 %v860, %v868
    %v871 = vmul.f32 %v861, %v869
    %v872 = vld [vmem:[%s7 + $0xb] sm:$0x1]
    %v873 = vld [vmem:[%s7 + $0xc] sm:$0x1]
    %874 = vadd.xlane.f32.xlu0 %v802
    %v875 = vpop.xlane.xlu0 %874
    %876 = vadd.xlane.f32.xlu0 %v803
    %v877 = vpop.xlane.xlu0 %876
    %v878 = vmul.f32 %v802, %v802
    %v879 = vmul.f32 %v803, %v803
    %880 = vadd.xlane.f32.xlu0 %v878
    %v881 = vpop.xlane.xlu0 %880
    %882 = vadd.xlane.f32.xlu0 %v879
    %v883 = vpop.xlane.xlu0 %882
    %v884 = vmul.f32 %v875, 0.0078125
    %v885 = vmul.f32 %v877, 0.0078125
    %v886 = vmul.f32 %v881, 0.0078125
    %v887 = vmul.f32 %v883, 0.0078125
    %v888 = vmul.f32 %v884, %v884
    %v889 = vmul.f32 %v885, %v885
    %v890 = vsub.f32 %v886, %v888
    %v891 = vsub.f32 %v887, %v889
    %v892 = vmax.f32 %v890, 0.0
    %v893 = vmax.f32 %v891, 0.0
    %v894 = vsub.f32 %v802, %v884
    %v895 = vsub.f32 %v803, %v885
    %v896 = vadd.f32 %v892, 1e-05
    %v897 = vadd.f32 %v893, 1e-05
    %v898 = vrsqrt.pop %v896
    %v899 = vmul.f32 %v898, %v896
    %v900 = vmul.f32 %v899, %v898
    %v901 = vmul.f32 0.5, %v900
    %v902 = vsub.f32 1.5, %v901
    %v903 = vmul.f32 %v898, %v902
    %vm904 = vweird.f32 %v896
    %vm905 = vweird.f32 %v898
    %vm906 = vmor %vm904, %vm905
    %v907 = vsel %vm906, %v898, %v903
    %v908 = vrsqrt.pop %v897
    %v909 = vmul.f32 %v908, %v897
    %v910 = vmul.f32 %v909, %v908
    %v911 = vmul.f32 0.5, %v910
    %v912 = vsub.f32 1.5, %v911
    %v913 = vmul.f32 %v908, %v912
    %vm914 = vweird.f32 %v897
    %vm915 = vweird.f32 %v908
    %vm916 = vmor %vm914, %vm915
    %v917 = vsel %vm916, %v908, %v913
    %v918 = vmul.f32 %v894, %v907
    %v919 = vmul.f32 %v895, %v917
    %v921 = vperm.slane %v872, 0
    %v923 = vmul.f32 %v918, %v921
    %v924 = vmul.f32 %v919, %v921
    %v926 = vperm.slane %v873, 0
    %v928 = vadd.f32 %v923, %v926
    %v929 = vadd.f32 %v924, %v926
    %v930 = vmul.f32 %v928, 0.5
    %v931 = vmul.f32 %v929, 0.5
    %v932 = vtanh.pop %v930
    %v933 = vtanh.pop %v931
    %v934 = vadd.f32 %v932, 1.0
    %v935 = vadd.f32 %v933, 1.0
    %v936 = vmul.f32 %v934, 0.5
    %v937 = vmul.f32 %v935, 0.5
    %v938 = vmul.f32 %v928, %v936
    %v939 = vmul.f32 %v929, %v937
    %v940 = vld [vmem:[%s7 + $0xd] sm:$0x1]
    %v941 = vld [vmem:[%s7 + $0xe] sm:$0x1]
    %942 = vadd.xlane.f32.xlu0 %v447
    %v943 = vpop.xlane.xlu0 %942
    %944 = vadd.xlane.f32.xlu0 %v449
    %v945 = vpop.xlane.xlu0 %944
    %v946 = vmul.f32 %v447, %v447
    %v947 = vmul.f32 %v449, %v449
    %948 = vadd.xlane.f32.xlu0 %v946
    %v949 = vpop.xlane.xlu0 %948
    %950 = vadd.xlane.f32.xlu0 %v947
    %v951 = vpop.xlane.xlu0 %950
    %v952 = vmul.f32 %v943, 0.0078125
    %v953 = vmul.f32 %v945, 0.0078125
    %v954 = vmul.f32 %v949, 0.0078125
    %v955 = vmul.f32 %v951, 0.0078125
    %v956 = vmul.f32 %v952, %v952
    %v957 = vmul.f32 %v953, %v953
    %v958 = vsub.f32 %v954, %v956
    %v959 = vsub.f32 %v955, %v957
    %v960 = vmax.f32 %v958, 0.0
    %v961 = vmax.f32 %v959, 0.0
    %v962 = vsub.f32 %v447, %v952
    %v963 = vsub.f32 %v449, %v953
    %v964 = vadd.f32 %v960, 1e-05
    %v965 = vadd.f32 %v961, 1e-05
    %v966 = vrsqrt.pop %v964
    %v967 = vmul.f32 %v966, %v964
    %v968 = vmul.f32 %v967, %v966
    %v969 = vmul.f32 0.5, %v968
    %v970 = vsub.f32 1.5, %v969
    %v971 = vmul.f32 %v966, %v970
    %vm972 = vweird.f32 %v964
    %vm973 = vweird.f32 %v966
    %vm974 = vmor %vm972, %vm973
    %v975 = vsel %vm974, %v966, %v971
    %v976 = vrsqrt.pop %v965
    %v977 = vmul.f32 %v976, %v965
    %v978 = vmul.f32 %v977, %v976
    %v979 = vmul.f32 0.5, %v978
    %v980 = vsub.f32 1.5, %v979
    %v981 = vmul.f32 %v976, %v980
    %vm982 = vweird.f32 %v965
    %vm983 = vweird.f32 %v976
    %vm984 = vmor %vm982, %vm983
    %v985 = vsel %vm984, %v976, %v981
    %v986 = vmul.f32 %v962, %v975
    %v987 = vmul.f32 %v963, %v985
    %v989 = vperm.slane %v940, 0
    %v991 = vmul.f32 %v986, %v989
    %v992 = vmul.f32 %v987, %v989
    %v994 = vperm.slane %v941, 0
    %v996 = vadd.f32 %v991, %v994
    %v997 = vadd.f32 %v992, %v994
    %v998 = vmul.f32 %v996, 0.5
    %v999 = vmul.f32 %v997, 0.5
    %v1000 = vtanh.pop %v998
    %v1001 = vtanh.pop %v999
    %v1002 = vadd.f32 %v1000, 1.0
    %v1003 = vadd.f32 %v1001, 1.0
    %v1004 = vmul.f32 %v1002, 0.5
    %v1005 = vmul.f32 %v1003, 0.5
    %v1006 = vmul.f32 %v996, %v1004
    %v1007 = vmul.f32 %v997, %v1005
    %v1008 = vpack.c.bf16 %v871, %v870
    %v1009 = vld [vmem:[#allocation8] sm:$0xf]
    %v1010 = vld [vmem:[#allocation8 + $0x4] sm:$0xf]
    %v1011 = vld [vmem:[#allocation8 + $0x8] sm:$0xf]
    %v1012 = vld [vmem:[#allocation8 + $0xc] sm:$0xf]
    %v1013 = vld [vmem:[#allocation8 + $0x10] sm:$0xf]
    %v1014 = vld [vmem:[#allocation8 + $0x14] sm:$0xf]
    %v1015 = vld [vmem:[#allocation8 + $0x18] sm:$0xf]
    %v1016 = vld [vmem:[#allocation8 + $0x1c] sm:$0xf]
    %v1017 = vld [vmem:[#allocation8 + $0x20] sm:$0xf]
    %v1018 = vld [vmem:[#allocation8 + $0x24] sm:$0xf]
    %v1019 = vld [vmem:[#allocation8 + $0x28] sm:$0xf]
    %v1020 = vld [vmem:[#allocation8 + $0x2c] sm:$0xf]
    %v1021 = vld [vmem:[#allocation8 + $0x30] sm:$0xf]
    %v1022 = vld [vmem:[#allocation8 + $0x34] sm:$0xf]
    %v1023 = vld [vmem:[#allocation8 + $0x38] sm:$0xf]
    %v1024 = vld [vmem:[#allocation8 + $0x3c] sm:$0xf]
    %v1025 = vpack.c.bf16 %v939, %v938
    %v1026 = vld [vmem:[#allocation10] sm:$0xf]
    %v1027 = vld [vmem:[#allocation10 + $0x4] sm:$0xf]
    %v1028 = vld [vmem:[#allocation10 + $0x8] sm:$0xf]
    %v1029 = vld [vmem:[#allocation10 + $0xc] sm:$0xf]
    %v1030 = vld [vmem:[#allocation10 + $0x10] sm:$0xf]
    %v1031 = vld [vmem:[#allocation10 + $0x14] sm:$0xf]
    %v1032 = vld [vmem:[#allocation10 + $0x18] sm:$0xf]
    %v1033 = vld [vmem:[#allocation10 + $0x1c] sm:$0xf]
    %v1034 = vld [vmem:[#allocation10 + $0x20] sm:$0xf]
    %v1035 = vld [vmem:[#allocation10 + $0x24] sm:$0xf]
    %v1036 = vld [vmem:[#allocation10 + $0x28] sm:$0xf]
    %v1037 = vld [vmem:[#allocation10 + $0x2c] sm:$0xf]
    %v1038 = vld [vmem:[#allocation10 + $0x30] sm:$0xf]
    %v1039 = vld [vmem:[#allocation10 + $0x34] sm:$0xf]
    %v1040 = vld [vmem:[#allocation10 + $0x38] sm:$0xf]
    %v1041 = vld [vmem:[#allocation10 + $0x3c] sm:$0xf]
    %v1058 = vunpack.c.l.b16 %v1026
    %v1059 = vunpack.c.l.b16 %v1027
    %v1060 = vunpack.c.l.b16 %v1028
    %v1061 = vunpack.c.l.b16 %v1029
    %v1062 = vunpack.c.l.b16 %v1030
    %v1063 = vunpack.c.l.b16 %v1031
    %v1064 = vunpack.c.l.b16 %v1032
    %v1065 = vunpack.c.l.b16 %v1033
    %v1066 = vunpack.c.l.b16 %v1034
    %v1067 = vunpack.c.l.b16 %v1035
    %v1068 = vunpack.c.l.b16 %v1036
    %v1069 = vunpack.c.l.b16 %v1037
    %v1070 = vunpack.c.l.b16 %v1038
    %v1071 = vunpack.c.l.b16 %v1039
    %v1072 = vunpack.c.l.b16 %v1040
    %v1073 = vunpack.c.l.b16 %v1041
    %v1074 = vpack.c.b16 %v1059, %v1058
    %v1075 = vpack.c.b16 %v1061, %v1060
    %v1076 = vpack.c.b16 %v1063, %v1062
    %v1077 = vpack.c.b16 %v1065, %v1064
    %v1078 = vpack.c.b16 %v1067, %v1066
    %v1079 = vpack.c.b16 %v1069, %v1068
    %v1080 = vpack.c.b16 %v1071, %v1070
    %v1081 = vpack.c.b16 %v1073, %v1072
    %1090 = vmatpush.bf16.msra.mxu0 %v1081
    %1091 = vmatpush.bf16.msra.mxu0 %v1080
    %1092 = vmatpush.bf16.msra.mxu0 %v1079
    %1093 = vmatpush.bf16.msra.mxu0 %v1078
    %1094 = vmatpush.bf16.msra.mxu0 %v1077
    %1095 = vmatpush.bf16.msra.mxu0 %v1076
    %1096 = vmatpush.bf16.msra.mxu0 %v1075
    %1097 = vmatpush.bf16.msra.mxu0 %v1074
    %1098 = vmatmul.bf16.gmra.mxu0 %v1025
    %v1099 = vpop.f32.mrf.mxu0
    %v1100 = vadd.f32 0.0, %v1099
    %v1101 = vpop.f32.mrf.mxu0
    %v1102 = vadd.f32 0.0, %v1101
    %1103 = vdwg.mxu0
    %v1120 = vunpack.c.l.b16 %v1009
    %v1121 = vunpack.c.l.b16 %v1010
    %v1122 = vunpack.c.l.b16 %v1011
    %v1123 = vunpack.c.l.b16 %v1012
    %v1124 = vunpack.c.l.b16 %v1013
    %v1125 = vunpack.c.l.b16 %v1014
    %v1126 = vunpack.c.l.b16 %v1015
    %v1127 = vunpack.c.l.b16 %v1016
    %v1128 = vunpack.c.l.b16 %v1017
    %v1129 = vunpack.c.l.b16 %v1018
    %v1130 = vunpack.c.l.b16 %v1019
    %v1131 = vunpack.c.l.b16 %v1020
    %v1132 = vunpack.c.l.b16 %v1021
    %v1133 = vunpack.c.l.b16 %v1022
    %v1134 = vunpack.c.l.b16 %v1023
    %v1135 = vunpack.c.l.b16 %v1024
    %v1136 = vpack.c.b16 %v1121, %v1120
    %v1137 = vpack.c.b16 %v1123, %v1122
    %v1138 = vpack.c.b16 %v1125, %v1124
    %v1139 = vpack.c.b16 %v1127, %v1126
    %v1140 = vpack.c.b16 %v1129, %v1128
    %v1141 = vpack.c.b16 %v1131, %v1130
    %v1142 = vpack.c.b16 %v1133, %v1132
    %v1143 = vpack.c.b16 %v1135, %v1134
    %1152 = vmatpush.bf16.msra.mxu0 %v1143
    %1153 = vmatpush.bf16.msra.mxu0 %v1142
    %1154 = vmatpush.bf16.msra.mxu0 %v1141
    %1155 = vmatpush.bf16.msra.mxu0 %v1140
    %1156 = vmatpush.bf16.msra.mxu0 %v1139
    %1157 = vmatpush.bf16.msra.mxu0 %v1138
    %1158 = vmatpush.bf16.msra.mxu0 %v1137
    %1159 = vmatpush.bf16.msra.mxu0 %v1136
    %1160 = vmatmul.bf16.gmra.mxu0 %v1008
    %v1161 = vpop.f32.mrf.mxu0
    %v1162 = vadd.f32 %v1100, %v1161
    %v1163 = vpop.f32.mrf.mxu0
    %v1164 = vadd.f32 %v1102, %v1163
    %1165 = vdwg.mxu0
    %v1166 = vpack.c.bf16 %v1007, %v1006
    %v1167 = vld [vmem:[#allocation11] sm:$0xf]
    %v1168 = vld [vmem:[#allocation11 + $0x4] sm:$0xf]
    %v1169 = vld [vmem:[#allocation11 + $0x8] sm:$0xf]
    %v1170 = vld [vmem:[#allocation11 + $0xc] sm:$0xf]
    %v1171 = vld [vmem:[#allocation11 + $0x10] sm:$0xf]
    %v1172 = vld [vmem:[#allocation11 + $0x14] sm:$0xf]
    %v1173 = vld [vmem:[#allocation11 + $0x18] sm:$0xf]
    %v1174 = vld [vmem:[#allocation11 + $0x1c] sm:$0xf]
    %v1175 = vld [vmem:[#allocation11 + $0x20] sm:$0xf]
    %v1176 = vld [vmem:[#allocation11 + $0x24] sm:$0xf]
    %v1177 = vld [vmem:[#allocation11 + $0x28] sm:$0xf]
    %v1178 = vld [vmem:[#allocation11 + $0x2c] sm:$0xf]
    %v1179 = vld [vmem:[#allocation11 + $0x30] sm:$0xf]
    %v1180 = vld [vmem:[#allocation11 + $0x34] sm:$0xf]
    %v1181 = vld [vmem:[#allocation11 + $0x38] sm:$0xf]
    %v1182 = vld [vmem:[#allocation11 + $0x3c] sm:$0xf]
    %v1199 = vunpack.c.l.b16 %v1167
    %v1200 = vunpack.c.l.b16 %v1168
    %v1201 = vunpack.c.l.b16 %v1169
    %v1202 = vunpack.c.l.b16 %v1170
    %v1203 = vunpack.c.l.b16 %v1171
    %v1204 = vunpack.c.l.b16 %v1172
    %v1205 = vunpack.c.l.b16 %v1173
    %v1206 = vunpack.c.l.b16 %v1174
    %v1207 = vunpack.c.l.b16 %v1175
    %v1208 = vunpack.c.l.b16 %v1176
    %v1209 = vunpack.c.l.b16 %v1177
    %v1210 = vunpack.c.l.b16 %v1178
    %v1211 = vunpack.c.l.b16 %v1179
    %v1212 = vunpack.c.l.b16 %v1180
    %v1213 = vunpack.c.l.b16 %v1181
    %v1214 = vunpack.c.l.b16 %v1182
    %v1215 = vpack.c.b16 %v1200, %v1199
    %v1216 = vpack.c.b16 %v1202, %v1201
    %v1217 = vpack.c.b16 %v1204, %v1203
    %v1218 = vpack.c.b16 %v1206, %v1205
    %v1219 = vpack.c.b16 %v1208, %v1207
    %v1220 = vpack.c.b16 %v1210, %v1209
    %v1221 = vpack.c.b16 %v1212, %v1211
    %v1222 = vpack.c.b16 %v1214, %v1213
    %1231 = vmatpush.bf16.msra.mxu0 %v1222
    %1232 = vmatpush.bf16.msra.mxu0 %v1221
    %1233 = vmatpush.bf16.msra.mxu0 %v1220
    %1234 = vmatpush.bf16.msra.mxu0 %v1219
    %1235 = vmatpush.bf16.msra.mxu0 %v1218
    %1236 = vmatpush.bf16.msra.mxu0 %v1217
    %1237 = vmatpush.bf16.msra.mxu0 %v1216
    %1238 = vmatpush.bf16.msra.mxu0 %v1215
    %1239 = vmatmul.bf16.gmra.mxu0 %v1166
    %v1240 = vpop.f32.mrf.mxu0
    %v1241 = vadd.f32 0.0, %v1240
    %v1242 = vpop.f32.mrf.mxu0
    %v1243 = vadd.f32 0.0, %v1242
    %1244 = vdwg.mxu0
    %v1245 = vadd.f32 %v1162, %v1241
    %v1246 = vadd.f32 %v1164, %v1243
    %v1247 = vld [vmem:[%s7 + $0x10] sm:$0x1]
    %v1249 = vperm.slane %v1247, 0
    %v1251 = vadd.f32 %v1245, %v1249
    %v1252 = vadd.f32 %v1246, %v1249
    %v1253 = vadd.f32 %v124, %v1251
    %v1254 = vadd.f32 %v125, %v1252
    %v1255 = vmul.f32 %v719, 0.1
    %v1256 = vmul.f32 %v721, 0.1
    %v1257 = vadd.f32 %v1253, %v1255
    %v1258 = vadd.f32 %v1254, %v1256
    %1259 = vst [vmem:[#allocation13] sm:$0xff] %v1257
    %1260 = vst [vmem:[#allocation13 + $0x8] sm:$0xff] %v1258
    // Predicated region
    $region58: #{_dmn_forward_impl.1} parent=1 // pred_check
      _
    $region59: #{_dmn_forward_impl.1} parent=1 // pred_check_branch
      %1262 = sbr.rel (0) target = $region61
    $region60: #{_dmn_forward_impl.1} parent=1 // pred_region
      %1264 = vsyncadd [#allocation4], 0
      %s1265 = sshll.u32 [#allocation13], 4
      %s1266 = int_to_ptr.vmem [resolvable:$true] %s1265
      %s1267 = sshll.u32 %s8, 4
      %s1268 = int_to_ptr.hbm [resolvable:$true] %s1267
      %1273 = dma.vmem_to_hbm [thread:$0]  %s1266, 256, %s1268, [#allocation4], 128, 128, 8
    $region61: #{_dmn_forward_impl.1} parent=1 // pred_fallthru
      _
    // Predicated region
    $region62: #{_dmn_forward_impl.1} parent=1 // pred_check
      _
    $region63: #{_dmn_forward_impl.1} parent=1 // pred_check_branch
      %1275 = sbr.rel (0) target = $region65
    $region64: #{_dmn_forward_impl.1} parent=1 // pred_region
      %1277 = dma.done [#allocation4], 256
    $region65: #{_dmn_forward_impl.1} parent=1 // pred_fallthru
      _
    %1278 = vsyncpa [#allocation3], 1
    %1279 = vsyncpa [#allocation6], 1
    %1280 = vsyncpa [#allocation9], 1
    %1281 = vsyncpa [#allocation12], 1
    %1282 = vsyncpa [#allocation4], 1

</llo_original>
